<compile_context>
chip_gen: v7x
topology: tpu7x:2x2x1
jax: 0.10.0
libtpu: 0.0.40
codegen_flags: <defaults>
</compile_context>

<pallas_src>
import jax
import jax.numpy as jnp
import numpy as np
from jax import lax
from jax.experimental import pallas as pl
from jax.experimental.pallas import tpu as pltpu

LANE = 128      # lane width (last dim alignment)
SUBLANE = 8     # f32 sublane count (second-to-last dim alignment)


def _round_up(v, m):
    return ((v + m - 1) // m) * m


def _device_kind():
    try:
        return jax.devices()[0].device_kind.lower()
    except Exception:
        return ""


def _vmem_capacity_bytes():
    try:
        info = pltpu.get_tpu_info()
        cap = getattr(info, "vmem_capacity_bytes", None)
        if cap:
            return int(cap)
    except Exception:
        pass
    return 64 << 20          # conservative fallback (v7x per-core VMEM)


# --------------------------------------------------------------------------
# Fused LSTM recurrence + FC head kernel
# --------------------------------------------------------------------------
def _make_kernel(L, Dr, Hp, Tc, T, num_chunks, TB, n_seq, w_dtype):
    rem = T - (num_chunks - 1) * Tc          # valid steps in the last chunk
    static_steps = (T % Tc == 0)

    def kernel(*refs):
        idx = 0
        x_ref = refs[idx]; idx += 1
        w_ih_hbm = refs[idx:idx + L]; idx += L
        w_hh_hbm = refs[idx:idx + L]; idx += L
        b_refs = refs[idx:idx + L]; idx += L
        fc1_w, fc1_b, fc2_w, fc2_b = refs[idx:idx + 4]; idx += 4
        out_ref = refs[idx]; idx += 1
        h_state = refs[idx]; idx += 1        # (L, TB, Hp) cross-chunk h
        c_state = refs[idx]; idx += 1        # (L, TB, Hp) cross-chunk c
        gates_buf = refs[idx]; idx += 1      # (Tc, TB, 4Hp) input-side gates
        seq_bufs = refs[idx:idx + n_seq]; idx += n_seq   # per-chunk h sequences
        w_ih_vmem = refs[idx:idx + L]; idx += L
        w_hh_vmem = refs[idx:idx + L]; idx += L
        dma_sem = refs[idx]

        t = pl.program_id(1)                 # time-chunk index ("arbitrary")

        @pl.when(t == 0)
        def _init():
            # Reset recurrent state for this batch tile and kick off the
            # one-time weight DMAs (waits are deferred per layer below).
            h_state[...] = jnp.zeros_like(h_state)
            c_state[...] = jnp.zeros_like(c_state)
            for l in range(L):
                pltpu.make_async_copy(w_ih_hbm[l], w_ih_vmem[l],
                                      dma_sem.at[l]).start()
                pltpu.make_async_copy(w_hh_hbm[l], w_hh_vmem[l],
                                      dma_sem.at[L + l]).start()

        def chunk_body(n_steps):
            unroll = min(8, n_steps)
            for l in range(L):
                # W_ih[l] is needed first -> wait for it just before use.
                @pl.when(t == 0)
                def _wait_ih(l=l):
                    pltpu.make_async_copy(w_ih_hbm[l], w_ih_vmem[l],
                                          dma_sem.at[l]).wait()

                if l == 0:
                    inp = x_ref[...]                     # (Tc, TB, Dr)
                    K = Dr
                else:
                    inp = seq_bufs[(l - 1) % n_seq][...]  # (Tc, TB, Hp)
                    K = Hp
                # Chunk-batched input-side projection: one MXU matmul with
                # M = Tc*TB; bias folded in once per chunk (no per-step bcast).
                proj = jnp.dot(inp.reshape(Tc * TB, K).astype(w_dtype),
                               w_ih_vmem[l][...],
                               preferred_element_type=jnp.float32)
                gates_buf[...] = (proj.reshape(Tc, TB, 4 * Hp)
                                  + b_refs[l][...])

                # W_hh[l] only has to arrive before the recurrence starts.
                @pl.when(t == 0)
                def _wait_hh(l=l):
                    pltpu.make_async_copy(w_hh_hbm[l], w_hh_vmem[l],
                                          dma_sem.at[L + l]).wait()

                def step(s, carry, l=l):
                    h, c = carry             # vreg-resident across the chunk
                    g = gates_buf[s] + jnp.dot(
                        h.astype(w_dtype), w_hh_vmem[l][...],
                        preferred_element_type=jnp.float32)
                    # Gate slices are 128-lane aligned (Hp % 128 == 0).
                    i_g = jax.nn.sigmoid(g[:, 0 * Hp:1 * Hp])
                    f_g = jax.nn.sigmoid(g[:, 1 * Hp:2 * Hp])
                    g_g = jnp.tanh(g[:, 2 * Hp:3 * Hp])
                    o_g = jax.nn.sigmoid(g[:, 3 * Hp:4 * Hp])
                    c = f_g * c + i_g * g_g              # f32 state update
                    h = o_g * jnp.tanh(c)
                    if l < L - 1:            # top layer's sequence is unused
                        seq_bufs[l % n_seq][s] = h
                    return (h, c)

                h, c = lax.fori_loop(0, n_steps, step,
                                     (h_state[l], c_state[l]), unroll=unroll)
                # Write cross-chunk state back once per chunk (not per step).
                h_state[l] = h
                c_state[l] = c

        if static_steps:
            chunk_body(Tc)
        else:
            # Two statically-sized branches instead of a dynamic trip count.
            @pl.when(t < num_chunks - 1)
            def _full_chunk():
                chunk_body(Tc)

            @pl.when(t == num_chunks - 1)
            def _last_chunk():
                chunk_body(rem)

        @pl.when(t == num_chunks - 1)
        def _epilogue():
            # Fused FC head on the last-step, top-layer hidden state.
            h = h_state[L - 1]                              # (TB, Hp) f32
            z = jnp.dot(h.astype(fc1_w.dtype), fc1_w[...],
                        preferred_element_type=jnp.float32) + fc1_b[...]
            z = jnp.where(z > 0, z, jnp.float32(0.01) * z)  # LeakyReLU(0.01)
            # fc2 has a single output column: VPU multiply + lane reduction.
            y = jnp.sum(z * fc2_w[...], axis=-1, keepdims=True) + fc2_b[...]
            out_ref[...] = y                 # single (TB,1) store, negligible

    return kernel


def _lstm_fc_forward(x, w_ihs, w_hhs, biases, fc, *, Dr, Hp, Hhp, time_chunk):
    """Runs the full fused forward; returns (B,) predictions."""
    B, T, D = x.shape
    L = len(w_ihs)
    w_dtype = w_ihs[0].dtype

    # ---- batch tiling: match MXU width, split for v7x's 2 TensorCores ----
    kind = _device_kind()
    is_v7 = ("v7" in kind) or ("7x" in kind)
    mxu_m = 256 if (("v6" in kind) or is_v7) else 128
    Bp = _round_up(B, SUBLANE)
    if is_v7 and Bp >= 16:
        TB = min(_round_up(Bp // 2, SUBLANE), mxu_m)   # >=2 tiles -> megacore
    else:
        TB = min(Bp, mxu_m)
    Bp = _round_up(Bp, TB)
    nb = Bp // TB

    # ---- time chunking (bounded by a VMEM budget for the chunk scratch) ----
    n_seq = min(L - 1, 2)                    # ping-pong h-sequence buffers
    chunk_budget = 16 << 20
    per_step_bytes = TB * (4 * Hp + n_seq * Hp) * 4
    Tc = int(max(1, min(time_chunk, T, chunk_budget // per_step_bytes)))
    num_chunks = -(-T // Tc)
    T_pad = num_chunks * Tc

    # Time-major input, padded only to Dr (not 128) in the feature dim.
    x_tm = jnp.zeros((T_pad, Bp, Dr), jnp.float32)
    x_tm = x_tm.at[:T, :B, :D].set(
        jnp.transpose(x, (1, 0, 2)).astype(jnp.float32))

    fc1_w, fc1_b, fc2_w, fc2_b = fc
    kernel = _make_kernel(L, Dr, Hp, Tc, T, num_chunks, TB, n_seq, w_dtype)

    in_specs = [pl.BlockSpec((Tc, TB, Dr), lambda b, t: (t, b, 0))]        # x
    in_specs += [pl.BlockSpec(memory_space=pl.ANY) for _ in range(2 * L)]  # W
    in_specs += [pl.BlockSpec((1, 4 * Hp), lambda b, t: (0, 0))
                 for _ in range(L)]                                        # b
    in_specs += [pl.BlockSpec((Hp, Hhp), lambda b, t: (0, 0)),             # fc1 w
                 pl.BlockSpec((1, Hhp), lambda b, t: (0, 0)),              # fc1 b
                 pl.BlockSpec((1, Hhp), lambda b, t: (0, 0)),              # fc2 w
                 pl.BlockSpec((1, 1), lambda b, t: (0, 0))]                # fc2 b

    scratch = [pltpu.VMEM((L, TB, Hp), jnp.float32),       # h state per layer
               pltpu.VMEM((L, TB, Hp), jnp.float32),       # c state per layer
               pltpu.VMEM((Tc, TB, 4 * Hp), jnp.float32)]  # chunk input gates
    scratch += [pltpu.VMEM((Tc, TB, Hp), jnp.float32) for _ in range(n_seq)]
    scratch += [pltpu.VMEM(w.shape, w.dtype) for w in w_ihs]   # resident W_ih
    scratch += [pltpu.VMEM(w.shape, w.dtype) for w in w_hhs]   # resident W_hh
    scratch += [pltpu.SemaphoreType.DMA((2 * L,))]
    # TODO(synk): for very large H*num_layers on v7x (64 MiB VMEM), stream
    # layer weights with a 2-deep double buffer instead of keeping all layers
    # resident.

    # ---- explicit VMEM budget, capped by the chip's real capacity ----
    w_itemsize = np.dtype(w_dtype).itemsize
    w_bytes = sum(int(np.prod(w.shape)) for w in list(w_ihs) + list(w_hhs)) \
        * w_itemsize
    scr_bytes = (2 * L * TB * Hp + Tc * TB * 4 * Hp + n_seq * Tc * TB * Hp) * 4
    pipe_bytes = 2 * (Tc * TB * Dr * 4 + L * 4 * Hp * 4
                      + Hp * Hhp * np.dtype(fc1_w.dtype).itemsize
                      + 2 * Hhp * 4 + TB * 4 + 4)
    need = w_bytes + scr_bytes + pipe_bytes
    cap = _vmem_capacity_bytes()             # 128 MiB v5e/v6e, 64 MiB v7x core
    vmem_limit = int(min(max(int(1.5 * need) + (4 << 20), 16 << 20),
                         cap - (8 << 20)))

    y = pl.pallas_call(
        kernel,
        out_shape=jax.ShapeDtypeStruct((Bp, 1), jnp.float32),
        grid_spec=pltpu.PrefetchScalarGridSpec(
            num_scalar_prefetch=0,
            grid=(nb, num_chunks),           # (batch tiles, time chunks)
            in_specs=in_specs,
            out_specs=pl.BlockSpec((TB, 1), lambda b, t: (b, 0)),
            scratch_shapes=scratch,
        ),
        compiler_params=pltpu.CompilerParams(
            # batch tiles are independent (megacore on v7x); time chunks are
            # a sequential recurrence.
            dimension_semantics=("parallel", "arbitrary"),
            vmem_limit_bytes=vmem_limit,
        ),
    )(x_tm, *w_ihs, *w_hhs, *biases, fc1_w, fc1_b, fc2_w, fc2_b)
    return y[:B, 0]


# --------------------------------------------------------------------------
# Parameter packing (split W_ih / W_hh, lane/sublane padding, dtype cast)
# --------------------------------------------------------------------------
def pack_params(lstm_params, fc_params, input_size, hidden_size,
                param_dtype=jnp.bfloat16):
    """PyTorch-layout params -> padded, kernel-ready arrays.

    LSTM / fc1 weights may be bf16 (default); biases, the fc2 row and all
    gate/cell math stay f32.  Gate blocks are padded H -> Hp so every gate
    slice is 128-lane aligned; padded hidden columns provably stay zero.
    """
    D, H = input_size, hidden_size
    Dr = _round_up(D, 16)                    # input feature pad (not 128)
    Hp = _round_up(H, LANE)

    w_ihs, w_hhs, biases = [], [], []
    for l, (w_ih, w_hh, b_ih, b_hh) in enumerate(lstm_params):
        in_l = D if l == 0 else H
        in_p = Dr if l == 0 else Hp
        wi = jnp.zeros((in_p, 4 * H), jnp.float32).at[:in_l, :].set(w_ih.T)
        wh = jnp.zeros((Hp, 4 * H), jnp.float32).at[:H, :].set(w_hh.T)
        # Pad each gate block H -> Hp (zero weights + zero bias keep padded
        # hidden columns exactly 0 through the recurrence).
        wi = jnp.pad(wi.reshape(in_p, 4, H),
                     ((0, 0), (0, 0), (0, Hp - H))).reshape(in_p, 4 * Hp)
        wh = jnp.pad(wh.reshape(Hp, 4, H),
                     ((0, 0), (0, 0), (0, Hp - H))).reshape(Hp, 4 * Hp)
        b = (b_ih + b_hh).reshape(4, H)
        b = jnp.pad(b, ((0, 0), (0, Hp - H))).reshape(1, 4 * Hp)
        w_ihs.append(wi.astype(param_dtype))
        w_hhs.append(wh.astype(param_dtype))
        biases.append(b.astype(jnp.float32))

    fc1_w, fc1_b, fc2_w, fc2_b = fc_params
    Hh = fc1_w.shape[0]
    Hhp = _round_up(Hh, LANE)
    w1 = jnp.zeros((Hp, Hhp), jnp.float32).at[:H, :Hh].set(fc1_w.T)
    w1 = w1.astype(param_dtype)
    b1 = jnp.zeros((1, Hhp), jnp.float32).at[0, :Hh].set(fc1_b)
    w2 = jnp.zeros((1, Hhp), jnp.float32).at[0, :Hh].set(fc2_w[0])
    b2 = fc2_b.reshape(1, 1).astype(jnp.float32)
    return w_ihs, w_hhs, biases, (w1, b1, w2, b2), (Dr, Hp, Hhp)


def sohlstm_forward(x, lstm_params, fc_params, *,
                    param_dtype=jnp.bfloat16, time_chunk=64):
    """x: (B, T, D) float32, batch_first like the PyTorch module."""
    B, T, D = x.shape
    H = lstm_params[0][1].shape[1]           # w_hh: (4H, H)
    w_ihs, w_hhs, biases, fc, (Dr, Hp, Hhp) = pack_params(
        lstm_params, fc_params, D, H, param_dtype)
    return _lstm_fc_forward(x, w_ihs, w_hhs, biases, fc,
                            Dr=Dr, Hp=Hp, Hhp=Hhp, time_chunk=time_chunk)


# --------------------------------------------------------------------------
# Init + pure-JAX reference (PyTorch parameter layout)
# --------------------------------------------------------------------------
def init_params(key, input_size, hidden_size, num_layers):
    D, H, L = input_size, hidden_size, num_layers
    k = 1.0 / np.sqrt(H)
    keys = jax.random.split(key, 4 * L + 4)
    it = iter(keys)
    lstm = []
    for l in range(L):
        in_l = D if l == 0 else H
        w_ih = jax.random.uniform(next(it), (4 * H, in_l), jnp.float32, -k, k)
        w_hh = jax.random.uniform(next(it), (4 * H, H), jnp.float32, -k, k)
        b_ih = jax.random.uniform(next(it), (4 * H,), jnp.float32, -k, k)
        b_hh = jax.random.uniform(next(it), (4 * H,), jnp.float32, -k, k)
        lstm.append((w_ih, w_hh, b_ih, b_hh))
    Hh = H // 2
    k2 = 1.0 / np.sqrt(Hh)
    fc1_w = jax.random.uniform(next(it), (Hh, H), jnp.float32, -k, k)
    fc1_b = jax.random.uniform(next(it), (Hh,), jnp.float32, -k, k)
    fc2_w = jax.random.uniform(next(it), (1, Hh), jnp.float32, -k2, k2)
    fc2_b = jax.random.uniform(next(it), (1,), jnp.float32, -k2, k2)
    return lstm, (fc1_w, fc1_b, fc2_w, fc2_b)


def reference_forward(x, lstm_params, fc_params):
    B, T, _ = x.shape
    seq = x
    for (w_ih, w_hh, b_ih, b_hh) in lstm_params:
        H = w_hh.shape[1]
        h = jnp.zeros((B, H), jnp.float32)
        c = jnp.zeros((B, H), jnp.float32)
        outs = []
        for t in range(T):
            gates = seq[:, t] @ w_ih.T + h @ w_hh.T + b_ih + b_hh
            i = jax.nn.sigmoid(gates[:, 0 * H:1 * H])
            f = jax.nn.sigmoid(gates[:, 1 * H:2 * H])
            g = jnp.tanh(gates[:, 2 * H:3 * H])
            o = jax.nn.sigmoid(gates[:, 3 * H:4 * H])
            c = f * c + i * g
            h = o * jnp.tanh(c)
            outs.append(h)
        seq = jnp.stack(outs, axis=1)
    hlast = seq[:, -1]
    fc1_w, fc1_b, fc2_w, fc2_b = fc_params
    z = hlast @ fc1_w.T + fc1_b
    z = jnp.where(z > 0, z, 0.01 * z)
    return (z @ fc2_w.T + fc2_b)[:, 0]


if __name__ == "__main__":
    # Small shapes consistent with the module: x is (batch, seq, input_size).
    B, T, D = 2, 8, 4
    H, L = 32, 2

    key = jax.random.PRNGKey(0)
    kx, kp = jax.random.split(key)
    x = jax.random.normal(kx, (B, T, D), jnp.float32)
    lstm_params, fc_params = init_params(kp, D, H, L)

    y_ref = jax.block_until_ready(reference_forward(x, lstm_params, fc_params))

    # f32 weights: tight correctness check.
    y32 = sohlstm_forward(x, lstm_params, fc_params,
                          param_dtype=jnp.float32, time_chunk=64)
    y32 = jax.block_until_ready(y32)
    assert y32.shape == (B,)
    np.testing.assert_allclose(np.asarray(y32), np.asarray(y_ref),
                               rtol=1e-4, atol=1e-4)

    # bf16 weights (default perf path on v6e/v7x): looser tolerance.
    y16 = sohlstm_forward(x, lstm_params, fc_params, time_chunk=64)
    y16 = jax.block_until_ready(y16)
    np.testing.assert_allclose(np.asarray(y16), np.asarray(y_ref),
                               rtol=5e-2, atol=5e-2)

    print("KERNEL_OK")
</pallas_src>

<mosaic_0001>
module attributes {stable_mosaic.version = 11 : i64} {
  func.func @kernel(%arg0: i32, %arg1: i32, %arg2: memref<8x8x16xf32, #tpu.memory_space<vmem>>, %arg3: memref<16x512xf32, #tpu.memory_space<any>>, %arg4: memref<128x512xf32, #tpu.memory_space<any>>, %arg5: memref<128x512xf32, #tpu.memory_space<any>>, %arg6: memref<128x512xf32, #tpu.memory_space<any>>, %arg7: memref<1x512xf32, #tpu.memory_space<vmem>>, %arg8: memref<1x512xf32, #tpu.memory_space<vmem>>, %arg9: memref<128x128xf32, #tpu.memory_space<vmem>>, %arg10: memref<1x128xf32, #tpu.memory_space<vmem>>, %arg11: memref<1x128xf32, #tpu.memory_space<vmem>>, %arg12: memref<1x1xf32, #tpu.memory_space<vmem>>, %arg13: memref<8x1xf32, #tpu.memory_space<vmem>>, %arg14: memref<2x8x128xf32, #tpu.memory_space<vmem>>, %arg15: memref<2x8x128xf32, #tpu.memory_space<vmem>>, %arg16: memref<8x8x512xf32, #tpu.memory_space<vmem>>, %arg17: memref<8x8x128xf32, #tpu.memory_space<vmem>>, %arg18: memref<16x512xf32, #tpu.memory_space<vmem>>, %arg19: memref<128x512xf32, #tpu.memory_space<vmem>>, %arg20: memref<128x512xf32, #tpu.memory_space<vmem>>, %arg21: memref<128x512xf32, #tpu.memory_space<vmem>>, %arg22: memref<4x!tpu.dma_semaphore, #tpu.memory_space<semaphore_mem>>) attributes {dimension_semantics = [#tpu.dimension_semantics<parallel>, #tpu.dimension_semantics<arbitrary>], iteration_bounds = array<i64: 1, 1>, scalar_prefetch = 0 : i64, scratch_operands = 9 : i64, tpu.core_type = #tpu.core_type<tc>, window_params = [{transform_indices = @transform_0, window_bounds = array<i64: 8, 8, 16>}, {}, {}, {}, {}, {pipeline_mode = #tpu.pipeline_mode<synchronous>, transform_indices = @transform_5, window_bounds = array<i64: 1, 512>}, {pipeline_mode = #tpu.pipeline_mode<synchronous>, transform_indices = @transform_6, window_bounds = array<i64: 1, 512>}, {pipeline_mode = #tpu.pipeline_mode<synchronous>, transform_indices = @transform_7, window_bounds = array<i64: 128, 128>}, {pipeline_mode = #tpu.pipeline_mode<synchronous>, transform_indices = @transform_8, window_bounds = array<i64: 1, 128>}, {pipeline_mode = #tpu.pipeline_mode<synchronous>, transform_indices = @transform_9, window_bounds = array<i64: 1, 128>}, {pipeline_mode = #tpu.pipeline_mode<synchronous>, transform_indices = @transform_10, window_bounds = array<i64: 1, 1>}, {transform_indices = @transform_11, window_bounds = array<i64: 8, 1>}]} {
    %c0_i32 = arith.constant 0 : i32
    %0 = arith.cmpi eq, %arg1, %c0_i32 : i32
    %1 = arith.extui %0 : i1 to i32
    %c0_i32_0 = arith.constant 0 : i32
    %2 = arith.cmpi ne, %1, %c0_i32_0 : i32
    scf.if %2 {
      %cst_208 = arith.constant 0.000000e+00 : f32
      %586 = vector.broadcast %cst_208 : f32 to vector<2x8x128xf32>
      %c0_209 = arith.constant 0 : index
      %c0_210 = arith.constant 0 : index
      %c0_211 = arith.constant 0 : index
      %587 = vector.load %arg14[%c0_209, %c0_210, %c0_211] : memref<2x8x128xf32, #tpu.memory_space<vmem>>, vector<2x8x128xf32>
      tpu.vector_store %arg14[%c0_209, %c0_210, %c0_211], %586 {strides = array<i32>} : memref<2x8x128xf32, #tpu.memory_space<vmem>>, vector<2x8x128xf32>,
      %cst_212 = arith.constant 0.000000e+00 : f32
      %588 = vector.broadcast %cst_212 : f32 to vector<2x8x128xf32>
      %c0_213 = arith.constant 0 : index
      %c0_214 = arith.constant 0 : index
      %c0_215 = arith.constant 0 : index
      %589 = vector.load %arg15[%c0_213, %c0_214, %c0_215] : memref<2x8x128xf32, #tpu.memory_space<vmem>>, vector<2x8x128xf32>
      tpu.vector_store %arg15[%c0_213, %c0_214, %c0_215], %588 {strides = array<i32>} : memref<2x8x128xf32, #tpu.memory_space<vmem>>, vector<2x8x128xf32>,
      %c0_i32_216 = arith.constant 0 : i32
      %590 = tpu.memref_slice %arg22[%c0_i32_216] : memref<4x!tpu.dma_semaphore, #tpu.memory_space<semaphore_mem>> -> memref<1x!tpu.dma_semaphore, #tpu.memory_space<semaphore_mem>>
      %591 = tpu.memref_squeeze %590 : memref<1x!tpu.dma_semaphore, #tpu.memory_space<semaphore_mem>> -> memref<!tpu.dma_semaphore, #tpu.memory_space<semaphore_mem>>
      tpu.enqueue_dma source(%arg3 : memref<16x512xf32, #tpu.memory_space<any>>) target(%arg18 : memref<16x512xf32, #tpu.memory_space<vmem>>) target_semaphore(%591 : memref<!tpu.dma_semaphore, #tpu.memory_space<semaphore_mem>>)
      %c2_i32_217 = arith.constant 2 : i32
      %592 = tpu.memref_slice %arg22[%c2_i32_217] : memref<4x!tpu.dma_semaphore, #tpu.memory_space<semaphore_mem>> -> memref<1x!tpu.dma_semaphore, #tpu.memory_space<semaphore_mem>>
      %593 = tpu.memref_squeeze %592 : memref<1x!tpu.dma_semaphore, #tpu.memory_space<semaphore_mem>> -> memref<!tpu.dma_semaphore, #tpu.memory_space<semaphore_mem>>
      tpu.enqueue_dma source(%arg5 : memref<128x512xf32, #tpu.memory_space<any>>) target(%arg20 : memref<128x512xf32, #tpu.memory_space<vmem>>) target_semaphore(%593 : memref<!tpu.dma_semaphore, #tpu.memory_space<semaphore_mem>>)
      %c1_i32_218 = arith.constant 1 : i32
      %594 = tpu.memref_slice %arg22[%c1_i32_218] : memref<4x!tpu.dma_semaphore, #tpu.memory_space<semaphore_mem>> -> memref<1x!tpu.dma_semaphore, #tpu.memory_space<semaphore_mem>>
      %595 = tpu.memref_squeeze %594 : memref<1x!tpu.dma_semaphore, #tpu.memory_space<semaphore_mem>> -> memref<!tpu.dma_semaphore, #tpu.memory_space<semaphore_mem>>
      tpu.enqueue_dma source(%arg4 : memref<128x512xf32, #tpu.memory_space<any>>) target(%arg19 : memref<128x512xf32, #tpu.memory_space<vmem>>) target_semaphore(%595 : memref<!tpu.dma_semaphore, #tpu.memory_space<semaphore_mem>>)
      %c3_i32_219 = arith.constant 3 : i32
      %596 = tpu.memref_slice %arg22[%c3_i32_219] : memref<4x!tpu.dma_semaphore, #tpu.memory_space<semaphore_mem>> -> memref<1x!tpu.dma_semaphore, #tpu.memory_space<semaphore_mem>>
      %597 = tpu.memref_squeeze %596 : memref<1x!tpu.dma_semaphore, #tpu.memory_space<semaphore_mem>> -> memref<!tpu.dma_semaphore, #tpu.memory_space<semaphore_mem>>
      tpu.enqueue_dma source(%arg6 : memref<128x512xf32, #tpu.memory_space<any>>) target(%arg21 : memref<128x512xf32, #tpu.memory_space<vmem>>) target_semaphore(%597 : memref<!tpu.dma_semaphore, #tpu.memory_space<semaphore_mem>>)
    } else {
    }
    %c0_i32_1 = arith.constant 0 : i32
    %3 = arith.cmpi eq, %arg1, %c0_i32_1 : i32
    %4 = arith.extui %3 : i1 to i32
    %c0_i32_2 = arith.constant 0 : i32
    %5 = arith.cmpi ne, %4, %c0_i32_2 : i32
    scf.if %5 {
      %c0_i32_208 = arith.constant 0 : i32
      %586 = tpu.memref_slice %arg22[%c0_i32_208] : memref<4x!tpu.dma_semaphore, #tpu.memory_space<semaphore_mem>> -> memref<1x!tpu.dma_semaphore, #tpu.memory_space<semaphore_mem>>
      %587 = tpu.memref_squeeze %586 : memref<1x!tpu.dma_semaphore, #tpu.memory_space<semaphore_mem>> -> memref<!tpu.dma_semaphore, #tpu.memory_space<semaphore_mem>>
      tpu.wait_dma2 semaphore(%587 : memref<!tpu.dma_semaphore, #tpu.memory_space<semaphore_mem>>) src(%arg3 : memref<16x512xf32, #tpu.memory_space<any>>) dst(%arg18 : memref<16x512xf32, #tpu.memory_space<vmem>>)
    } else {
    }
    %c0 = arith.constant 0 : index
    %c0_3 = arith.constant 0 : index
    %c0_4 = arith.constant 0 : index
    %6 = vector.load %arg2[%c0, %c0_3, %c0_4] : memref<8x8x16xf32, #tpu.memory_space<vmem>>, vector<8x8x16xf32>
    %7 = vector.shape_cast %6 : vector<8x8x16xf32> to vector<64x16xf32>
    %c0_5 = arith.constant 0 : index
    %c0_6 = arith.constant 0 : index
    %8 = vector.load %arg18[%c0_5, %c0_6] : memref<16x512xf32, #tpu.memory_space<vmem>>, vector<16x512xf32>
    %cst = arith.constant dense<0.000000e+00> : vector<64x512xf32>
    %9 = tpu.matmul %7, %8, %cst {dimension_numbers = #tpu.dot_dimension_numbers<[1], [0], [0], [1], [0, 0, 1, 1], [], []>} : vector<64x16xf32>, vector<16x512xf32>, vector<64x512xf32> -> vector<64x512xf32>
    %10 = vector.shape_cast %9 : vector<64x512xf32> to vector<8x8x512xf32>
    %c0_7 = arith.constant 0 : index
    %c0_8 = arith.constant 0 : index
    %11 = vector.load %arg7[%c0_7, %c0_8] : memref<1x512xf32, #tpu.memory_space<vmem>>, vector<1x512xf32>
    %12 = vector.shape_cast %11 : vector<1x512xf32> to vector<1x1x512xf32>
    %13 = vector.broadcast %12 : vector<1x1x512xf32> to vector<8x8x512xf32>
    %14 = arith.addf %10, %13 : vector<8x8x512xf32>
    %c0_9 = arith.constant 0 : index
    %c0_10 = arith.constant 0 : index
    %c0_11 = arith.constant 0 : index
    %15 = vector.load %arg16[%c0_9, %c0_10, %c0_11] : memref<8x8x512xf32, #tpu.memory_space<vmem>>, vector<8x8x512xf32>
    tpu.vector_store %arg16[%c0_9, %c0_10, %c0_11], %14 {strides = array<i32>} : memref<8x8x512xf32, #tpu.memory_space<vmem>>, vector<8x8x512xf32>,
    %c0_i32_12 = arith.constant 0 : i32
    %16 = arith.cmpi eq, %arg1, %c0_i32_12 : i32
    %17 = arith.extui %16 : i1 to i32
    %c0_i32_13 = arith.constant 0 : i32
    %18 = arith.cmpi ne, %17, %c0_i32_13 : i32
    scf.if %18 {
      %c2_i32_208 = arith.constant 2 : i32
      %586 = tpu.memref_slice %arg22[%c2_i32_208] : memref<4x!tpu.dma_semaphore, #tpu.memory_space<semaphore_mem>> -> memref<1x!tpu.dma_semaphore, #tpu.memory_space<semaphore_mem>>
      %587 = tpu.memref_squeeze %586 : memref<1x!tpu.dma_semaphore, #tpu.memory_space<semaphore_mem>> -> memref<!tpu.dma_semaphore, #tpu.memory_space<semaphore_mem>>
      tpu.wait_dma2 semaphore(%587 : memref<!tpu.dma_semaphore, #tpu.memory_space<semaphore_mem>>) src(%arg5 : memref<128x512xf32, #tpu.memory_space<any>>) dst(%arg20 : memref<128x512xf32, #tpu.memory_space<vmem>>)
    } else {
    }
    %c0_14 = arith.constant 0 : index
    %c0_15 = arith.constant 0 : index
    %c0_16 = arith.constant 0 : index
    %19 = vector.load %arg14[%c0_14, %c0_15, %c0_16] : memref<2x8x128xf32, #tpu.memory_space<vmem>>, vector<1x8x128xf32>
    %20 = vector.shape_cast %19 : vector<1x8x128xf32> to vector<8x128xf32>
    %c0_17 = arith.constant 0 : index
    %c0_18 = arith.constant 0 : index
    %c0_19 = arith.constant 0 : index
    %21 = vector.load %arg15[%c0_17, %c0_18, %c0_19] : memref<2x8x128xf32, #tpu.memory_space<vmem>>, vector<1x8x128xf32>
    %22 = vector.shape_cast %21 : vector<1x8x128xf32> to vector<8x128xf32>
    %c0_i32_20 = arith.constant 0 : i32
    %23 = arith.index_cast %c0_i32_20 : i32 to index
    %c0_21 = arith.constant 0 : index
    %c0_22 = arith.constant 0 : index
    %24 = vector.load %arg16[%23, %c0_21, %c0_22] : memref<8x8x512xf32, #tpu.memory_space<vmem>>, vector<1x8x512xf32>
    %25 = vector.shape_cast %24 : vector<1x8x512xf32> to vector<8x512xf32>
    %c0_23 = arith.constant 0 : index
    %c0_24 = arith.constant 0 : index
    %26 = vector.load %arg20[%c0_23, %c0_24] : memref<128x512xf32, #tpu.memory_space<vmem>>, vector<128x512xf32>
    %cst_25 = arith.constant dense<0.000000e+00> : vector<8x512xf32>
    %27 = tpu.matmul %20, %26, %cst_25 {dimension_numbers = #tpu.dot_dimension_numbers<[1], [0], [0], [1], [0, 0, 1, 1], [], []>} : vector<8x128xf32>, vector<128x512xf32>, vector<8x512xf32> -> vector<8x512xf32>
    %28 = arith.addf %25, %27 : vector<8x512xf32>
    %29 = vector.extract_strided_slice %28 {offsets = [0, 0], sizes = [8, 128], strides = [1, 1]} : vector<8x512xf32> to vector<8x128xf32>
    %30 = arith.negf %29 : vector<8x128xf32>
    %31 = math.exp %30 : vector<8x128xf32>
    %cst_26 = arith.constant 1.000000e+00 : f32
    %32 = vector.broadcast %cst_26 : f32 to vector<8x128xf32>
    %33 = arith.addf %32, %31 : vector<8x128xf32>
    %34 = arith.divf %32, %33 : vector<8x128xf32>
    %35 = vector.extract_strided_slice %28 {offsets = [0, 128], sizes = [8, 128], strides = [1, 1]} : vector<8x512xf32> to vector<8x128xf32>
    %36 = arith.negf %35 : vector<8x128xf32>
    %37 = math.exp %36 : vector<8x128xf32>
    %cst_27 = arith.constant 1.000000e+00 : f32
    %38 = vector.broadcast %cst_27 : f32 to vector<8x128xf32>
    %39 = arith.addf %38, %37 : vector<8x128xf32>
    %40 = arith.divf %38, %39 : vector<8x128xf32>
    %41 = vector.extract_strided_slice %28 {offsets = [0, 256], sizes = [8, 128], strides = [1, 1]} : vector<8x512xf32> to vector<8x128xf32>
    %42 = math.tanh %41 : vector<8x128xf32>
    %43 = vector.extract_strided_slice %28 {offsets = [0, 384], sizes = [8, 128], strides = [1, 1]} : vector<8x512xf32> to vector<8x128xf32>
    %44 = arith.negf %43 : vector<8x128xf32>
    %45 = math.exp %44 : vector<8x128xf32>
    %cst_28 = arith.constant 1.000000e+00 : f32
    %46 = vector.broadcast %cst_28 : f32 to vector<8x128xf32>
    %47 = arith.addf %46, %45 : vector<8x128xf32>
    %48 = arith.divf %46, %47 : vector<8x128xf32>
    %49 = arith.mulf %40, %22 : vector<8x128xf32>
    %50 = arith.mulf %34, %42 : vector<8x128xf32>
    %51 = arith.addf %49, %50 : vector<8x128xf32>
    %52 = math.tanh %51 : vector<8x128xf32>
    %53 = arith.mulf %48, %52 : vector<8x128xf32>
    %54 = arith.index_cast %c0_i32_20 : i32 to index
    %c0_29 = arith.constant 0 : index
    %c0_30 = arith.constant 0 : index
    %55 = vector.load %arg17[%54, %c0_29, %c0_30] : memref<8x8x128xf32, #tpu.memory_space<vmem>>, vector<1x8x128xf32>
    %56 = vector.shape_cast %55 : vector<1x8x128xf32> to vector<8x128xf32>
    %57 = vector.shape_cast %53 : vector<8x128xf32> to vector<1x8x128xf32>
    tpu.vector_store %arg17[%54, %c0_29, %c0_30], %57 {strides = array<i32>} : memref<8x8x128xf32, #tpu.memory_space<vmem>>, vector<1x8x128xf32>,
    %c1_i32 = arith.constant 1 : i32
    %58 = arith.index_cast %c1_i32 : i32 to index
    %c0_31 = arith.constant 0 : index
    %c0_32 = arith.constant 0 : index
    %59 = vector.load %arg16[%58, %c0_31, %c0_32] : memref<8x8x512xf32, #tpu.memory_space<vmem>>, vector<1x8x512xf32>
    %60 = vector.shape_cast %59 : vector<1x8x512xf32> to vector<8x512xf32>
    %c0_33 = arith.constant 0 : index
    %c0_34 = arith.constant 0 : index
    %61 = vector.load %arg20[%c0_33, %c0_34] : memref<128x512xf32, #tpu.memory_space<vmem>>, vector<128x512xf32>
    %cst_35 = arith.constant dense<0.000000e+00> : vector<8x512xf32>
    %62 = tpu.matmul %53, %61, %cst_35 {dimension_numbers = #tpu.dot_dimension_numbers<[1], [0], [0], [1], [0, 0, 1, 1], [], []>} : vector<8x128xf32>, vector<128x512xf32>, vector<8x512xf32> -> vector<8x512xf32>
    %63 = arith.addf %60, %62 : vector<8x512xf32>
    %64 = vector.extract_strided_slice %63 {offsets = [0, 0], sizes = [8, 128], strides = [1, 1]} : vector<8x512xf32> to vector<8x128xf32>
    %65 = arith.negf %64 : vector<8x128xf32>
    %66 = math.exp %65 : vector<8x128xf32>
    %cst_36 = arith.constant 1.000000e+00 : f32
    %67 = vector.broadcast %cst_36 : f32 to vector<8x128xf32>
    %68 = arith.addf %67, %66 : vector<8x128xf32>
    %69 = arith.divf %67, %68 : vector<8x128xf32>
    %70 = vector.extract_strided_slice %63 {offsets = [0, 128], sizes = [8, 128], strides = [1, 1]} : vector<8x512xf32> to vector<8x128xf32>
    %71 = arith.negf %70 : vector<8x128xf32>
    %72 = math.exp %71 : vector<8x128xf32>
    %cst_37 = arith.constant 1.000000e+00 : f32
    %73 = vector.broadcast %cst_37 : f32 to vector<8x128xf32>
    %74 = arith.addf %73, %72 : vector<8x128xf32>
    %75 = arith.divf %73, %74 : vector<8x128xf32>
    %76 = vector.extract_strided_slice %63 {offsets = [0, 256], sizes = [8, 128], strides = [1, 1]} : vector<8x512xf32> to vector<8x128xf32>
    %77 = math.tanh %76 : vector<8x128xf32>
    %78 = vector.extract_strided_slice %63 {offsets = [0, 384], sizes = [8, 128], strides = [1, 1]} : vector<8x512xf32> to vector<8x128xf32>
    %79 = arith.negf %78 : vector<8x128xf32>
    %80 = math.exp %79 : vector<8x128xf32>
    %cst_38 = arith.constant 1.000000e+00 : f32
    %81 = vector.broadcast %cst_38 : f32 to vector<8x128xf32>
    %82 = arith.addf %81, %80 : vector<8x128xf32>
    %83 = arith.divf %81, %82 : vector<8x128xf32>
    %84 = arith.mulf %75, %51 : vector<8x128xf32>
    %85 = arith.mulf %69, %77 : vector<8x128xf32>
    %86 = arith.addf %84, %85 : vector<8x128xf32>
    %87 = math.tanh %86 : vector<8x128xf32>
    %88 = arith.mulf %83, %87 : vector<8x128xf32>
    %89 = arith.index_cast %c1_i32 : i32 to index
    %c0_39 = arith.constant 0 : index
    %c0_40 = arith.constant 0 : index
    %90 = vector.load %arg17[%89, %c0_39, %c0_40] : memref<8x8x128xf32, #tpu.memory_space<vmem>>, vector<1x8x128xf32>
    %91 = vector.shape_cast %90 : vector<1x8x128xf32> to vector<8x128xf32>
    %92 = vector.shape_cast %88 : vector<8x128xf32> to vector<1x8x128xf32>
    tpu.vector_store %arg17[%89, %c0_39, %c0_40], %92 {strides = array<i32>} : memref<8x8x128xf32, #tpu.memory_space<vmem>>, vector<1x8x128xf32>,
    %c2_i32 = arith.constant 2 : i32
    %93 = arith.index_cast %c2_i32 : i32 to index
    %c0_41 = arith.constant 0 : index
    %c0_42 = arith.constant 0 : index
    %94 = vector.load %arg16[%93, %c0_41, %c0_42] : memref<8x8x512xf32, #tpu.memory_space<vmem>>, vector<1x8x512xf32>
    %95 = vector.shape_cast %94 : vector<1x8x512xf32> to vector<8x512xf32>
    %c0_43 = arith.constant 0 : index
    %c0_44 = arith.constant 0 : index
    %96 = vector.load %arg20[%c0_43, %c0_44] : memref<128x512xf32, #tpu.memory_space<vmem>>, vector<128x512xf32>
    %cst_45 = arith.constant dense<0.000000e+00> : vector<8x512xf32>
    %97 = tpu.matmul %88, %96, %cst_45 {dimension_numbers = #tpu.dot_dimension_numbers<[1], [0], [0], [1], [0, 0, 1, 1], [], []>} : vector<8x128xf32>, vector<128x512xf32>, vector<8x512xf32> -> vector<8x512xf32>
    %98 = arith.addf %95, %97 : vector<8x512xf32>
    %99 = vector.extract_strided_slice %98 {offsets = [0, 0], sizes = [8, 128], strides = [1, 1]} : vector<8x512xf32> to vector<8x128xf32>
    %100 = arith.negf %99 : vector<8x128xf32>
    %101 = math.exp %100 : vector<8x128xf32>
    %cst_46 = arith.constant 1.000000e+00 : f32
    %102 = vector.broadcast %cst_46 : f32 to vector<8x128xf32>
    %103 = arith.addf %102, %101 : vector<8x128xf32>
    %104 = arith.divf %102, %103 : vector<8x128xf32>
    %105 = vector.extract_strided_slice %98 {offsets = [0, 128], sizes = [8, 128], strides = [1, 1]} : vector<8x512xf32> to vector<8x128xf32>
    %106 = arith.negf %105 : vector<8x128xf32>
    %107 = math.exp %106 : vector<8x128xf32>
    %cst_47 = arith.constant 1.000000e+00 : f32
    %108 = vector.broadcast %cst_47 : f32 to vector<8x128xf32>
    %109 = arith.addf %108, %107 : vector<8x128xf32>
    %110 = arith.divf %108, %109 : vector<8x128xf32>
    %111 = vector.extract_strided_slice %98 {offsets = [0, 256], sizes = [8, 128], strides = [1, 1]} : vector<8x512xf32> to vector<8x128xf32>
    %112 = math.tanh %111 : vector<8x128xf32>
    %113 = vector.extract_strided_slice %98 {offsets = [0, 384], sizes = [8, 128], strides = [1, 1]} : vector<8x512xf32> to vector<8x128xf32>
    %114 = arith.negf %113 : vector<8x128xf32>
    %115 = math.exp %114 : vector<8x128xf32>
    %cst_48 = arith.constant 1.000000e+00 : f32
    %116 = vector.broadcast %cst_48 : f32 to vector<8x128xf32>
    %117 = arith.addf %116, %115 : vector<8x128xf32>
    %118 = arith.divf %116, %117 : vector<8x128xf32>
    %119 = arith.mulf %110, %86 : vector<8x128xf32>
    %120 = arith.mulf %104, %112 : vector<8x128xf32>
    %121 = arith.addf %119, %120 : vector<8x128xf32>
    %122 = math.tanh %121 : vector<8x128xf32>
    %123 = arith.mulf %118, %122 : vector<8x128xf32>
    %124 = arith.index_cast %c2_i32 : i32 to index
    %c0_49 = arith.constant 0 : index
    %c0_50 = arith.constant 0 : index
    %125 = vector.load %arg17[%124, %c0_49, %c0_50] : memref<8x8x128xf32, #tpu.memory_space<vmem>>, vector<1x8x128xf32>
    %126 = vector.shape_cast %125 : vector<1x8x128xf32> to vector<8x128xf32>
    %127 = vector.shape_cast %123 : vector<8x128xf32> to vector<1x8x128xf32>
    tpu.vector_store %arg17[%124, %c0_49, %c0_50], %127 {strides = array<i32>} : memref<8x8x128xf32, #tpu.memory_space<vmem>>, vector<1x8x128xf32>,
    %c3_i32 = arith.constant 3 : i32
    %128 = arith.index_cast %c3_i32 : i32 to index
    %c0_51 = arith.constant 0 : index
    %c0_52 = arith.constant 0 : index
    %129 = vector.load %arg16[%128, %c0_51, %c0_52] : memref<8x8x512xf32, #tpu.memory_space<vmem>>, vector<1x8x512xf32>
    %130 = vector.shape_cast %129 : vector<1x8x512xf32> to vector<8x512xf32>
    %c0_53 = arith.constant 0 : index
    %c0_54 = arith.constant 0 : index
    %131 = vector.load %arg20[%c0_53, %c0_54] : memref<128x512xf32, #tpu.memory_space<vmem>>, vector<128x512xf32>
    %cst_55 = arith.constant dense<0.000000e+00> : vector<8x512xf32>
    %132 = tpu.matmul %123, %131, %cst_55 {dimension_numbers = #tpu.dot_dimension_numbers<[1], [0], [0], [1], [0, 0, 1, 1], [], []>} : vector<8x128xf32>, vector<128x512xf32>, vector<8x512xf32> -> vector<8x512xf32>
    %133 = arith.addf %130, %132 : vector<8x512xf32>
    %134 = vector.extract_strided_slice %133 {offsets = [0, 0], sizes = [8, 128], strides = [1, 1]} : vector<8x512xf32> to vector<8x128xf32>
    %135 = arith.negf %134 : vector<8x128xf32>
    %136 = math.exp %135 : vector<8x128xf32>
    %cst_56 = arith.constant 1.000000e+00 : f32
    %137 = vector.broadcast %cst_56 : f32 to vector<8x128xf32>
    %138 = arith.addf %137, %136 : vector<8x128xf32>
    %139 = arith.divf %137, %138 : vector<8x128xf32>
    %140 = vector.extract_strided_slice %133 {offsets = [0, 128], sizes = [8, 128], strides = [1, 1]} : vector<8x512xf32> to vector<8x128xf32>
    %141 = arith.negf %140 : vector<8x128xf32>
    %142 = math.exp %141 : vector<8x128xf32>
    %cst_57 = arith.constant 1.000000e+00 : f32
    %143 = vector.broadcast %cst_57 : f32 to vector<8x128xf32>
    %144 = arith.addf %143, %142 : vector<8x128xf32>
    %145 = arith.divf %143, %144 : vector<8x128xf32>
    %146 = vector.extract_strided_slice %133 {offsets = [0, 256], sizes = [8, 128], strides = [1, 1]} : vector<8x512xf32> to vector<8x128xf32>
    %147 = math.tanh %146 : vector<8x128xf32>
    %148 = vector.extract_strided_slice %133 {offsets = [0, 384], sizes = [8, 128], strides = [1, 1]} : vector<8x512xf32> to vector<8x128xf32>
    %149 = arith.negf %148 : vector<8x128xf32>
    %150 = math.exp %149 : vector<8x128xf32>
    %cst_58 = arith.constant 1.000000e+00 : f32
    %151 = vector.broadcast %cst_58 : f32 to vector<8x128xf32>
    %152 = arith.addf %151, %150 : vector<8x128xf32>
    %153 = arith.divf %151, %152 : vector<8x128xf32>
    %154 = arith.mulf %145, %121 : vector<8x128xf32>
    %155 = arith.mulf %139, %147 : vector<8x128xf32>
    %156 = arith.addf %154, %155 : vector<8x128xf32>
    %157 = math.tanh %156 : vector<8x128xf32>
    %158 = arith.mulf %153, %157 : vector<8x128xf32>
    %159 = arith.index_cast %c3_i32 : i32 to index
    %c0_59 = arith.constant 0 : index
    %c0_60 = arith.constant 0 : index
    %160 = vector.load %arg17[%159, %c0_59, %c0_60] : memref<8x8x128xf32, #tpu.memory_space<vmem>>, vector<1x8x128xf32>
    %161 = vector.shape_cast %160 : vector<1x8x128xf32> to vector<8x128xf32>
    %162 = vector.shape_cast %158 : vector<8x128xf32> to vector<1x8x128xf32>
    tpu.vector_store %arg17[%159, %c0_59, %c0_60], %162 {strides = array<i32>} : memref<8x8x128xf32, #tpu.memory_space<vmem>>, vector<1x8x128xf32>,
    %c4_i32 = arith.constant 4 : i32
    %163 = arith.index_cast %c4_i32 : i32 to index
    %c0_61 = arith.constant 0 : index
    %c0_62 = arith.constant 0 : index
    %164 = vector.load %arg16[%163, %c0_61, %c0_62] : memref<8x8x512xf32, #tpu.memory_space<vmem>>, vector<1x8x512xf32>
    %165 = vector.shape_cast %164 : vector<1x8x512xf32> to vector<8x512xf32>
    %c0_63 = arith.constant 0 : index
    %c0_64 = arith.constant 0 : index
    %166 = vector.load %arg20[%c0_63, %c0_64] : memref<128x512xf32, #tpu.memory_space<vmem>>, vector<128x512xf32>
    %cst_65 = arith.constant dense<0.000000e+00> : vector<8x512xf32>
    %167 = tpu.matmul %158, %166, %cst_65 {dimension_numbers = #tpu.dot_dimension_numbers<[1], [0], [0], [1], [0, 0, 1, 1], [], []>} : vector<8x128xf32>, vector<128x512xf32>, vector<8x512xf32> -> vector<8x512xf32>
    %168 = arith.addf %165, %167 : vector<8x512xf32>
    %169 = vector.extract_strided_slice %168 {offsets = [0, 0], sizes = [8, 128], strides = [1, 1]} : vector<8x512xf32> to vector<8x128xf32>
    %170 = arith.negf %169 : vector<8x128xf32>
    %171 = math.exp %170 : vector<8x128xf32>
    %cst_66 = arith.constant 1.000000e+00 : f32
    %172 = vector.broadcast %cst_66 : f32 to vector<8x128xf32>
    %173 = arith.addf %172, %171 : vector<8x128xf32>
    %174 = arith.divf %172, %173 : vector<8x128xf32>
    %175 = vector.extract_strided_slice %168 {offsets = [0, 128], sizes = [8, 128], strides = [1, 1]} : vector<8x512xf32> to vector<8x128xf32>
    %176 = arith.negf %175 : vector<8x128xf32>
    %177 = math.exp %176 : vector<8x128xf32>
    %cst_67 = arith.constant 1.000000e+00 : f32
    %178 = vector.broadcast %cst_67 : f32 to vector<8x128xf32>
    %179 = arith.addf %178, %177 : vector<8x128xf32>
    %180 = arith.divf %178, %179 : vector<8x128xf32>
    %181 = vector.extract_strided_slice %168 {offsets = [0, 256], sizes = [8, 128], strides = [1, 1]} : vector<8x512xf32> to vector<8x128xf32>
    %182 = math.tanh %181 : vector<8x128xf32>
    %183 = vector.extract_strided_slice %168 {offsets = [0, 384], sizes = [8, 128], strides = [1, 1]} : vector<8x512xf32> to vector<8x128xf32>
    %184 = arith.negf %183 : vector<8x128xf32>
    %185 = math.exp %184 : vector<8x128xf32>
    %cst_68 = arith.constant 1.000000e+00 : f32
    %186 = vector.broadcast %cst_68 : f32 to vector<8x128xf32>
    %187 = arith.addf %186, %185 : vector<8x128xf32>
    %188 = arith.divf %186, %187 : vector<8x128xf32>
    %189 = arith.mulf %180, %156 : vector<8x128xf32>
    %190 = arith.mulf %174, %182 : vector<8x128xf32>
    %191 = arith.addf %189, %190 : vector<8x128xf32>
    %192 = math.tanh %191 : vector<8x128xf32>
    %193 = arith.mulf %188, %192 : vector<8x128xf32>
    %194 = arith.index_cast %c4_i32 : i32 to index
    %c0_69 = arith.constant 0 : index
    %c0_70 = arith.constant 0 : index
    %195 = vector.load %arg17[%194, %c0_69, %c0_70] : memref<8x8x128xf32, #tpu.memory_space<vmem>>, vector<1x8x128xf32>
    %196 = vector.shape_cast %195 : vector<1x8x128xf32> to vector<8x128xf32>
    %197 = vector.shape_cast %193 : vector<8x128xf32> to vector<1x8x128xf32>
    tpu.vector_store %arg17[%194, %c0_69, %c0_70], %197 {strides = array<i32>} : memref<8x8x128xf32, #tpu.memory_space<vmem>>, vector<1x8x128xf32>,
    %c5_i32 = arith.constant 5 : i32
    %198 = arith.index_cast %c5_i32 : i32 to index
    %c0_71 = arith.constant 0 : index
    %c0_72 = arith.constant 0 : index
    %199 = vector.load %arg16[%198, %c0_71, %c0_72] : memref<8x8x512xf32, #tpu.memory_space<vmem>>, vector<1x8x512xf32>
    %200 = vector.shape_cast %199 : vector<1x8x512xf32> to vector<8x512xf32>
    %c0_73 = arith.constant 0 : index
    %c0_74 = arith.constant 0 : index
    %201 = vector.load %arg20[%c0_73, %c0_74] : memref<128x512xf32, #tpu.memory_space<vmem>>, vector<128x512xf32>
    %cst_75 = arith.constant dense<0.000000e+00> : vector<8x512xf32>
    %202 = tpu.matmul %193, %201, %cst_75 {dimension_numbers = #tpu.dot_dimension_numbers<[1], [0], [0], [1], [0, 0, 1, 1], [], []>} : vector<8x128xf32>, vector<128x512xf32>, vector<8x512xf32> -> vector<8x512xf32>
    %203 = arith.addf %200, %202 : vector<8x512xf32>
    %204 = vector.extract_strided_slice %203 {offsets = [0, 0], sizes = [8, 128], strides = [1, 1]} : vector<8x512xf32> to vector<8x128xf32>
    %205 = arith.negf %204 : vector<8x128xf32>
    %206 = math.exp %205 : vector<8x128xf32>
    %cst_76 = arith.constant 1.000000e+00 : f32
    %207 = vector.broadcast %cst_76 : f32 to vector<8x128xf32>
    %208 = arith.addf %207, %206 : vector<8x128xf32>
    %209 = arith.divf %207, %208 : vector<8x128xf32>
    %210 = vector.extract_strided_slice %203 {offsets = [0, 128], sizes = [8, 128], strides = [1, 1]} : vector<8x512xf32> to vector<8x128xf32>
    %211 = arith.negf %210 : vector<8x128xf32>
    %212 = math.exp %211 : vector<8x128xf32>
    %cst_77 = arith.constant 1.000000e+00 : f32
    %213 = vector.broadcast %cst_77 : f32 to vector<8x128xf32>
    %214 = arith.addf %213, %212 : vector<8x128xf32>
    %215 = arith.divf %213, %214 : vector<8x128xf32>
    %216 = vector.extract_strided_slice %203 {offsets = [0, 256], sizes = [8, 128], strides = [1, 1]} : vector<8x512xf32> to vector<8x128xf32>
    %217 = math.tanh %216 : vector<8x128xf32>
    %218 = vector.extract_strided_slice %203 {offsets = [0, 384], sizes = [8, 128], strides = [1, 1]} : vector<8x512xf32> to vector<8x128xf32>
    %219 = arith.negf %218 : vector<8x128xf32>
    %220 = math.exp %219 : vector<8x128xf32>
    %cst_78 = arith.constant 1.000000e+00 : f32
    %221 = vector.broadcast %cst_78 : f32 to vector<8x128xf32>
    %222 = arith.addf %221, %220 : vector<8x128xf32>
    %223 = arith.divf %221, %222 : vector<8x128xf32>
    %224 = arith.mulf %215, %191 : vector<8x128xf32>
    %225 = arith.mulf %209, %217 : vector<8x128xf32>
    %226 = arith.addf %224, %225 : vector<8x128xf32>
    %227 = math.tanh %226 : vector<8x128xf32>
    %228 = arith.mulf %223, %227 : vector<8x128xf32>
    %229 = arith.index_cast %c5_i32 : i32 to index
    %c0_79 = arith.constant 0 : index
    %c0_80 = arith.constant 0 : index
    %230 = vector.load %arg17[%229, %c0_79, %c0_80] : memref<8x8x128xf32, #tpu.memory_space<vmem>>, vector<1x8x128xf32>
    %231 = vector.shape_cast %230 : vector<1x8x128xf32> to vector<8x128xf32>
    %232 = vector.shape_cast %228 : vector<8x128xf32> to vector<1x8x128xf32>
    tpu.vector_store %arg17[%229, %c0_79, %c0_80], %232 {strides = array<i32>} : memref<8x8x128xf32, #tpu.memory_space<vmem>>, vector<1x8x128xf32>,
    %c6_i32 = arith.constant 6 : i32
    %233 = arith.index_cast %c6_i32 : i32 to index
    %c0_81 = arith.constant 0 : index
    %c0_82 = arith.constant 0 : index
    %234 = vector.load %arg16[%233, %c0_81, %c0_82] : memref<8x8x512xf32, #tpu.memory_space<vmem>>, vector<1x8x512xf32>
    %235 = vector.shape_cast %234 : vector<1x8x512xf32> to vector<8x512xf32>
    %c0_83 = arith.constant 0 : index
    %c0_84 = arith.constant 0 : index
    %236 = vector.load %arg20[%c0_83, %c0_84] : memref<128x512xf32, #tpu.memory_space<vmem>>, vector<128x512xf32>
    %cst_85 = arith.constant dense<0.000000e+00> : vector<8x512xf32>
    %237 = tpu.matmul %228, %236, %cst_85 {dimension_numbers = #tpu.dot_dimension_numbers<[1], [0], [0], [1], [0, 0, 1, 1], [], []>} : vector<8x128xf32>, vector<128x512xf32>, vector<8x512xf32> -> vector<8x512xf32>
    %238 = arith.addf %235, %237 : vector<8x512xf32>
    %239 = vector.extract_strided_slice %238 {offsets = [0, 0], sizes = [8, 128], strides = [1, 1]} : vector<8x512xf32> to vector<8x128xf32>
    %240 = arith.negf %239 : vector<8x128xf32>
    %241 = math.exp %240 : vector<8x128xf32>
    %cst_86 = arith.constant 1.000000e+00 : f32
    %242 = vector.broadcast %cst_86 : f32 to vector<8x128xf32>
    %243 = arith.addf %242, %241 : vector<8x128xf32>
    %244 = arith.divf %242, %243 : vector<8x128xf32>
    %245 = vector.extract_strided_slice %238 {offsets = [0, 128], sizes = [8, 128], strides = [1, 1]} : vector<8x512xf32> to vector<8x128xf32>
    %246 = arith.negf %245 : vector<8x128xf32>
    %247 = math.exp %246 : vector<8x128xf32>
    %cst_87 = arith.constant 1.000000e+00 : f32
    %248 = vector.broadcast %cst_87 : f32 to vector<8x128xf32>
    %249 = arith.addf %248, %247 : vector<8x128xf32>
    %250 = arith.divf %248, %249 : vector<8x128xf32>
    %251 = vector.extract_strided_slice %238 {offsets = [0, 256], sizes = [8, 128], strides = [1, 1]} : vector<8x512xf32> to vector<8x128xf32>
    %252 = math.tanh %251 : vector<8x128xf32>
    %253 = vector.extract_strided_slice %238 {offsets = [0, 384], sizes = [8, 128], strides = [1, 1]} : vector<8x512xf32> to vector<8x128xf32>
    %254 = arith.negf %253 : vector<8x128xf32>
    %255 = math.exp %254 : vector<8x128xf32>
    %cst_88 = arith.constant 1.000000e+00 : f32
    %256 = vector.broadcast %cst_88 : f32 to vector<8x128xf32>
    %257 = arith.addf %256, %255 : vector<8x128xf32>
    %258 = arith.divf %256, %257 : vector<8x128xf32>
    %259 = arith.mulf %250, %226 : vector<8x128xf32>
    %260 = arith.mulf %244, %252 : vector<8x128xf32>
    %261 = arith.addf %259, %260 : vector<8x128xf32>
    %262 = math.tanh %261 : vector<8x128xf32>
    %263 = arith.mulf %258, %262 : vector<8x128xf32>
    %264 = arith.index_cast %c6_i32 : i32 to index
    %c0_89 = arith.constant 0 : index
    %c0_90 = arith.constant 0 : index
    %265 = vector.load %arg17[%264, %c0_89, %c0_90] : memref<8x8x128xf32, #tpu.memory_space<vmem>>, vector<1x8x128xf32>
    %266 = vector.shape_cast %265 : vector<1x8x128xf32> to vector<8x128xf32>
    %267 = vector.shape_cast %263 : vector<8x128xf32> to vector<1x8x128xf32>
    tpu.vector_store %arg17[%264, %c0_89, %c0_90], %267 {strides = array<i32>} : memref<8x8x128xf32, #tpu.memory_space<vmem>>, vector<1x8x128xf32>,
    %c7_i32 = arith.constant 7 : i32
    %268 = arith.index_cast %c7_i32 : i32 to index
    %c0_91 = arith.constant 0 : index
    %c0_92 = arith.constant 0 : index
    %269 = vector.load %arg16[%268, %c0_91, %c0_92] : memref<8x8x512xf32, #tpu.memory_space<vmem>>, vector<1x8x512xf32>
    %270 = vector.shape_cast %269 : vector<1x8x512xf32> to vector<8x512xf32>
    %c0_93 = arith.constant 0 : index
    %c0_94 = arith.constant 0 : index
    %271 = vector.load %arg20[%c0_93, %c0_94] : memref<128x512xf32, #tpu.memory_space<vmem>>, vector<128x512xf32>
    %cst_95 = arith.constant dense<0.000000e+00> : vector<8x512xf32>
    %272 = tpu.matmul %263, %271, %cst_95 {dimension_numbers = #tpu.dot_dimension_numbers<[1], [0], [0], [1], [0, 0, 1, 1], [], []>} : vector<8x128xf32>, vector<128x512xf32>, vector<8x512xf32> -> vector<8x512xf32>
    %273 = arith.addf %270, %272 : vector<8x512xf32>
    %274 = vector.extract_strided_slice %273 {offsets = [0, 0], sizes = [8, 128], strides = [1, 1]} : vector<8x512xf32> to vector<8x128xf32>
    %275 = arith.negf %274 : vector<8x128xf32>
    %276 = math.exp %275 : vector<8x128xf32>
    %cst_96 = arith.constant 1.000000e+00 : f32
    %277 = vector.broadcast %cst_96 : f32 to vector<8x128xf32>
    %278 = arith.addf %277, %276 : vector<8x128xf32>
    %279 = arith.divf %277, %278 : vector<8x128xf32>
    %280 = vector.extract_strided_slice %273 {offsets = [0, 128], sizes = [8, 128], strides = [1, 1]} : vector<8x512xf32> to vector<8x128xf32>
    %281 = arith.negf %280 : vector<8x128xf32>
    %282 = math.exp %281 : vector<8x128xf32>
    %cst_97 = arith.constant 1.000000e+00 : f32
    %283 = vector.broadcast %cst_97 : f32 to vector<8x128xf32>
    %284 = arith.addf %283, %282 : vector<8x128xf32>
    %285 = arith.divf %283, %284 : vector<8x128xf32>
    %286 = vector.extract_strided_slice %273 {offsets = [0, 256], sizes = [8, 128], strides = [1, 1]} : vector<8x512xf32> to vector<8x128xf32>
    %287 = math.tanh %286 : vector<8x128xf32>
    %288 = vector.extract_strided_slice %273 {offsets = [0, 384], sizes = [8, 128], strides = [1, 1]} : vector<8x512xf32> to vector<8x128xf32>
    %289 = arith.negf %288 : vector<8x128xf32>
    %290 = math.exp %289 : vector<8x128xf32>
    %cst_98 = arith.constant 1.000000e+00 : f32
    %291 = vector.broadcast %cst_98 : f32 to vector<8x128xf32>
    %292 = arith.addf %291, %290 : vector<8x128xf32>
    %293 = arith.divf %291, %292 : vector<8x128xf32>
    %294 = arith.mulf %285, %261 : vector<8x128xf32>
    %295 = arith.mulf %279, %287 : vector<8x128xf32>
    %296 = arith.addf %294, %295 : vector<8x128xf32>
    %297 = math.tanh %296 : vector<8x128xf32>
    %298 = arith.mulf %293, %297 : vector<8x128xf32>
    %299 = arith.index_cast %c7_i32 : i32 to index
    %c0_99 = arith.constant 0 : index
    %c0_100 = arith.constant 0 : index
    %300 = vector.load %arg17[%299, %c0_99, %c0_100] : memref<8x8x128xf32, #tpu.memory_space<vmem>>, vector<1x8x128xf32>
    %301 = vector.shape_cast %300 : vector<1x8x128xf32> to vector<8x128xf32>
    %302 = vector.shape_cast %298 : vector<8x128xf32> to vector<1x8x128xf32>
    tpu.vector_store %arg17[%299, %c0_99, %c0_100], %302 {strides = array<i32>} : memref<8x8x128xf32, #tpu.memory_space<vmem>>, vector<1x8x128xf32>,
    %c8_i32 = arith.constant 8 : i32
    %c0_101 = arith.constant 0 : index
    %c0_102 = arith.constant 0 : index
    %c0_103 = arith.constant 0 : index
    %303 = vector.load %arg14[%c0_101, %c0_102, %c0_103] : memref<2x8x128xf32, #tpu.memory_space<vmem>>, vector<1x8x128xf32>
    %304 = vector.shape_cast %303 : vector<1x8x128xf32> to vector<8x128xf32>
    %305 = vector.shape_cast %298 : vector<8x128xf32> to vector<1x8x128xf32>
    tpu.vector_store %arg14[%c0_101, %c0_102, %c0_103], %305 {strides = array<i32>} : memref<2x8x128xf32, #tpu.memory_space<vmem>>, vector<1x8x128xf32>,
    %c0_104 = arith.constant 0 : index
    %c0_105 = arith.constant 0 : index
    %c0_106 = arith.constant 0 : index
    %306 = vector.load %arg15[%c0_104, %c0_105, %c0_106] : memref<2x8x128xf32, #tpu.memory_space<vmem>>, vector<1x8x128xf32>
    %307 = vector.shape_cast %306 : vector<1x8x128xf32> to vector<8x128xf32>
    %308 = vector.shape_cast %296 : vector<8x128xf32> to vector<1x8x128xf32>
    tpu.vector_store %arg15[%c0_104, %c0_105, %c0_106], %308 {strides = array<i32>} : memref<2x8x128xf32, #tpu.memory_space<vmem>>, vector<1x8x128xf32>,
    %c0_i32_107 = arith.constant 0 : i32
    %309 = arith.cmpi eq, %arg1, %c0_i32_107 : i32
    %310 = arith.extui %309 : i1 to i32
    %c0_i32_108 = arith.constant 0 : i32
    %311 = arith.cmpi ne, %310, %c0_i32_108 : i32
    scf.if %311 {
      %c1_i32_208 = arith.constant 1 : i32
      %586 = tpu.memref_slice %arg22[%c1_i32_208] : memref<4x!tpu.dma_semaphore, #tpu.memory_space<semaphore_mem>> -> memref<1x!tpu.dma_semaphore, #tpu.memory_space<semaphore_mem>>
      %587 = tpu.memref_squeeze %586 : memref<1x!tpu.dma_semaphore, #tpu.memory_space<semaphore_mem>> -> memref<!tpu.dma_semaphore, #tpu.memory_space<semaphore_mem>>
      tpu.wait_dma2 semaphore(%587 : memref<!tpu.dma_semaphore, #tpu.memory_space<semaphore_mem>>) src(%arg4 : memref<128x512xf32, #tpu.memory_space<any>>) dst(%arg19 : memref<128x512xf32, #tpu.memory_space<vmem>>)
    } else {
    }
    %c0_109 = arith.constant 0 : index
    %c0_110 = arith.constant 0 : index
    %c0_111 = arith.constant 0 : index
    %312 = vector.load %arg17[%c0_109, %c0_110, %c0_111] : memref<8x8x128xf32, #tpu.memory_space<vmem>>, vector<8x8x128xf32>
    %313 = vector.shape_cast %312 : vector<8x8x128xf32> to vector<64x128xf32>
    %c0_112 = arith.constant 0 : index
    %c0_113 = arith.constant 0 : index
    %314 = vector.load %arg19[%c0_112, %c0_113] : memref<128x512xf32, #tpu.memory_space<vmem>>, vector<128x512xf32>
    %cst_114 = arith.constant dense<0.000000e+00> : vector<64x512xf32>
    %315 = tpu.matmul %313, %314, %cst_114 {dimension_numbers = #tpu.dot_dimension_numbers<[1], [0], [0], [1], [0, 0, 1, 1], [], []>} : vector<64x128xf32>, vector<128x512xf32>, vector<64x512xf32> -> vector<64x512xf32>
    %316 = vector.shape_cast %315 : vector<64x512xf32> to vector<8x8x512xf32>
    %c0_115 = arith.constant 0 : index
    %c0_116 = arith.constant 0 : index
    %317 = vector.load %arg8[%c0_115, %c0_116] : memref<1x512xf32, #tpu.memory_space<vmem>>, vector<1x512xf32>
    %318 = vector.shape_cast %317 : vector<1x512xf32> to vector<1x1x512xf32>
    %319 = vector.broadcast %318 : vector<1x1x512xf32> to vector<8x8x512xf32>
    %320 = arith.addf %316, %319 : vector<8x8x512xf32>
    %c0_117 = arith.constant 0 : index
    %c0_118 = arith.constant 0 : index
    %c0_119 = arith.constant 0 : index
    %321 = vector.load %arg16[%c0_117, %c0_118, %c0_119] : memref<8x8x512xf32, #tpu.memory_space<vmem>>, vector<8x8x512xf32>
    tpu.vector_store %arg16[%c0_117, %c0_118, %c0_119], %320 {strides = array<i32>} : memref<8x8x512xf32, #tpu.memory_space<vmem>>, vector<8x8x512xf32>,
    %c0_i32_120 = arith.constant 0 : i32
    %322 = arith.cmpi eq, %arg1, %c0_i32_120 : i32
    %323 = arith.extui %322 : i1 to i32
    %c0_i32_121 = arith.constant 0 : i32
    %324 = arith.cmpi ne, %323, %c0_i32_121 : i32
    scf.if %324 {
      %c3_i32_208 = arith.constant 3 : i32
      %586 = tpu.memref_slice %arg22[%c3_i32_208] : memref<4x!tpu.dma_semaphore, #tpu.memory_space<semaphore_mem>> -> memref<1x!tpu.dma_semaphore, #tpu.memory_space<semaphore_mem>>
      %587 = tpu.memref_squeeze %586 : memref<1x!tpu.dma_semaphore, #tpu.memory_space<semaphore_mem>> -> memref<!tpu.dma_semaphore, #tpu.memory_space<semaphore_mem>>
      tpu.wait_dma2 semaphore(%587 : memref<!tpu.dma_semaphore, #tpu.memory_space<semaphore_mem>>) src(%arg6 : memref<128x512xf32, #tpu.memory_space<any>>) dst(%arg21 : memref<128x512xf32, #tpu.memory_space<vmem>>)
    } else {
    }
    %c1 = arith.constant 1 : index
    %c0_122 = arith.constant 0 : index
    %c0_123 = arith.constant 0 : index
    %325 = vector.load %arg14[%c1, %c0_122, %c0_123] : memref<2x8x128xf32, #tpu.memory_space<vmem>>, vector<1x8x128xf32>
    %326 = vector.shape_cast %325 : vector<1x8x128xf32> to vector<8x128xf32>
    %c1_124 = arith.constant 1 : index
    %c0_125 = arith.constant 0 : index
    %c0_126 = arith.constant 0 : index
    %327 = vector.load %arg15[%c1_124, %c0_125, %c0_126] : memref<2x8x128xf32, #tpu.memory_space<vmem>>, vector<1x8x128xf32>
    %328 = vector.shape_cast %327 : vector<1x8x128xf32> to vector<8x128xf32>
    %c0_i32_127 = arith.constant 0 : i32
    %329 = arith.index_cast %c0_i32_127 : i32 to index
    %c0_128 = arith.constant 0 : index
    %c0_129 = arith.constant 0 : index
    %330 = vector.load %arg16[%329, %c0_128, %c0_129] : memref<8x8x512xf32, #tpu.memory_space<vmem>>, vector<1x8x512xf32>
    %331 = vector.shape_cast %330 : vector<1x8x512xf32> to vector<8x512xf32>
    %c0_130 = arith.constant 0 : index
    %c0_131 = arith.constant 0 : index
    %332 = vector.load %arg21[%c0_130, %c0_131] : memref<128x512xf32, #tpu.memory_space<vmem>>, vector<128x512xf32>
    %cst_132 = arith.constant dense<0.000000e+00> : vector<8x512xf32>
    %333 = tpu.matmul %326, %332, %cst_132 {dimension_numbers = #tpu.dot_dimension_numbers<[1], [0], [0], [1], [0, 0, 1, 1], [], []>} : vector<8x128xf32>, vector<128x512xf32>, vector<8x512xf32> -> vector<8x512xf32>
    %334 = arith.addf %331, %333 : vector<8x512xf32>
    %335 = vector.extract_strided_slice %334 {offsets = [0, 0], sizes = [8, 128], strides = [1, 1]} : vector<8x512xf32> to vector<8x128xf32>
    %336 = arith.negf %335 : vector<8x128xf32>
    %337 = math.exp %336 : vector<8x128xf32>
    %cst_133 = arith.constant 1.000000e+00 : f32
    %338 = vector.broadcast %cst_133 : f32 to vector<8x128xf32>
    %339 = arith.addf %338, %337 : vector<8x128xf32>
    %340 = arith.divf %338, %339 : vector<8x128xf32>
    %341 = vector.extract_strided_slice %334 {offsets = [0, 128], sizes = [8, 128], strides = [1, 1]} : vector<8x512xf32> to vector<8x128xf32>
    %342 = arith.negf %341 : vector<8x128xf32>
    %343 = math.exp %342 : vector<8x128xf32>
    %cst_134 = arith.constant 1.000000e+00 : f32
    %344 = vector.broadcast %cst_134 : f32 to vector<8x128xf32>
    %345 = arith.addf %344, %343 : vector<8x128xf32>
    %346 = arith.divf %344, %345 : vector<8x128xf32>
    %347 = vector.extract_strided_slice %334 {offsets = [0, 256], sizes = [8, 128], strides = [1, 1]} : vector<8x512xf32> to vector<8x128xf32>
    %348 = math.tanh %347 : vector<8x128xf32>
    %349 = vector.extract_strided_slice %334 {offsets = [0, 384], sizes = [8, 128], strides = [1, 1]} : vector<8x512xf32> to vector<8x128xf32>
    %350 = arith.negf %349 : vector<8x128xf32>
    %351 = math.exp %350 : vector<8x128xf32>
    %cst_135 = arith.constant 1.000000e+00 : f32
    %352 = vector.broadcast %cst_135 : f32 to vector<8x128xf32>
    %353 = arith.addf %352, %351 : vector<8x128xf32>
    %354 = arith.divf %352, %353 : vector<8x128xf32>
    %355 = arith.mulf %346, %328 : vector<8x128xf32>
    %356 = arith.mulf %340, %348 : vector<8x128xf32>
    %357 = arith.addf %355, %356 : vector<8x128xf32>
    %358 = math.tanh %357 : vector<8x128xf32>
    %359 = arith.mulf %354, %358 : vector<8x128xf32>
    %c1_i32_136 = arith.constant 1 : i32
    %360 = arith.index_cast %c1_i32_136 : i32 to index
    %c0_137 = arith.constant 0 : index
    %c0_138 = arith.constant 0 : index
    %361 = vector.load %arg16[%360, %c0_137, %c0_138] : memref<8x8x512xf32, #tpu.memory_space<vmem>>, vector<1x8x512xf32>
    %362 = vector.shape_cast %361 : vector<1x8x512xf32> to vector<8x512xf32>
    %c0_139 = arith.constant 0 : index
    %c0_140 = arith.constant 0 : index
    %363 = vector.load %arg21[%c0_139, %c0_140] : memref<128x512xf32, #tpu.memory_space<vmem>>, vector<128x512xf32>
    %cst_141 = arith.constant dense<0.000000e+00> : vector<8x512xf32>
    %364 = tpu.matmul %359, %363, %cst_141 {dimension_numbers = #tpu.dot_dimension_numbers<[1], [0], [0], [1], [0, 0, 1, 1], [], []>} : vector<8x128xf32>, vector<128x512xf32>, vector<8x512xf32> -> vector<8x512xf32>
    %365 = arith.addf %362, %364 : vector<8x512xf32>
    %366 = vector.extract_strided_slice %365 {offsets = [0, 0], sizes = [8, 128], strides = [1, 1]} : vector<8x512xf32> to vector<8x128xf32>
    %367 = arith.negf %366 : vector<8x128xf32>
    %368 = math.exp %367 : vector<8x128xf32>
    %cst_142 = arith.constant 1.000000e+00 : f32
    %369 = vector.broadcast %cst_142 : f32 to vector<8x128xf32>
    %370 = arith.addf %369, %368 : vector<8x128xf32>
    %371 = arith.divf %369, %370 : vector<8x128xf32>
    %372 = vector.extract_strided_slice %365 {offsets = [0, 128], sizes = [8, 128], strides = [1, 1]} : vector<8x512xf32> to vector<8x128xf32>
    %373 = arith.negf %372 : vector<8x128xf32>
    %374 = math.exp %373 : vector<8x128xf32>
    %cst_143 = arith.constant 1.000000e+00 : f32
    %375 = vector.broadcast %cst_143 : f32 to vector<8x128xf32>
    %376 = arith.addf %375, %374 : vector<8x128xf32>
    %377 = arith.divf %375, %376 : vector<8x128xf32>
    %378 = vector.extract_strided_slice %365 {offsets = [0, 256], sizes = [8, 128], strides = [1, 1]} : vector<8x512xf32> to vector<8x128xf32>
    %379 = math.tanh %378 : vector<8x128xf32>
    %380 = vector.extract_strided_slice %365 {offsets = [0, 384], sizes = [8, 128], strides = [1, 1]} : vector<8x512xf32> to vector<8x128xf32>
    %381 = arith.negf %380 : vector<8x128xf32>
    %382 = math.exp %381 : vector<8x128xf32>
    %cst_144 = arith.constant 1.000000e+00 : f32
    %383 = vector.broadcast %cst_144 : f32 to vector<8x128xf32>
    %384 = arith.addf %383, %382 : vector<8x128xf32>
    %385 = arith.divf %383, %384 : vector<8x128xf32>
    %386 = arith.mulf %377, %357 : vector<8x128xf32>
    %387 = arith.mulf %371, %379 : vector<8x128xf32>
    %388 = arith.addf %386, %387 : vector<8x128xf32>
    %389 = math.tanh %388 : vector<8x128xf32>
    %390 = arith.mulf %385, %389 : vector<8x128xf32>
    %c2_i32_145 = arith.constant 2 : i32
    %391 = arith.index_cast %c2_i32_145 : i32 to index
    %c0_146 = arith.constant 0 : index
    %c0_147 = arith.constant 0 : index
    %392 = vector.load %arg16[%391, %c0_146, %c0_147] : memref<8x8x512xf32, #tpu.memory_space<vmem>>, vector<1x8x512xf32>
    %393 = vector.shape_cast %392 : vector<1x8x512xf32> to vector<8x512xf32>
    %c0_148 = arith.constant 0 : index
    %c0_149 = arith.constant 0 : index
    %394 = vector.load %arg21[%c0_148, %c0_149] : memref<128x512xf32, #tpu.memory_space<vmem>>, vector<128x512xf32>
    %cst_150 = arith.constant dense<0.000000e+00> : vector<8x512xf32>
    %395 = tpu.matmul %390, %394, %cst_150 {dimension_numbers = #tpu.dot_dimension_numbers<[1], [0], [0], [1], [0, 0, 1, 1], [], []>} : vector<8x128xf32>, vector<128x512xf32>, vector<8x512xf32> -> vector<8x512xf32>
    %396 = arith.addf %393, %395 : vector<8x512xf32>
    %397 = vector.extract_strided_slice %396 {offsets = [0, 0], sizes = [8, 128], strides = [1, 1]} : vector<8x512xf32> to vector<8x128xf32>
    %398 = arith.negf %397 : vector<8x128xf32>
    %399 = math.exp %398 : vector<8x128xf32>
    %cst_151 = arith.constant 1.000000e+00 : f32
    %400 = vector.broadcast %cst_151 : f32 to vector<8x128xf32>
    %401 = arith.addf %400, %399 : vector<8x128xf32>
    %402 = arith.divf %400, %401 : vector<8x128xf32>
    %403 = vector.extract_strided_slice %396 {offsets = [0, 128], sizes = [8, 128], strides = [1, 1]} : vector<8x512xf32> to vector<8x128xf32>
    %404 = arith.negf %403 : vector<8x128xf32>
    %405 = math.exp %404 : vector<8x128xf32>
    %cst_152 = arith.constant 1.000000e+00 : f32
    %406 = vector.broadcast %cst_152 : f32 to vector<8x128xf32>
    %407 = arith.addf %406, %405 : vector<8x128xf32>
    %408 = arith.divf %406, %407 : vector<8x128xf32>
    %409 = vector.extract_strided_slice %396 {offsets = [0, 256], sizes = [8, 128], strides = [1, 1]} : vector<8x512xf32> to vector<8x128xf32>
    %410 = math.tanh %409 : vector<8x128xf32>
    %411 = vector.extract_strided_slice %396 {offsets = [0, 384], sizes = [8, 128], strides = [1, 1]} : vector<8x512xf32> to vector<8x128xf32>
    %412 = arith.negf %411 : vector<8x128xf32>
    %413 = math.exp %412 : vector<8x128xf32>
    %cst_153 = arith.constant 1.000000e+00 : f32
    %414 = vector.broadcast %cst_153 : f32 to vector<8x128xf32>
    %415 = arith.addf %414, %413 : vector<8x128xf32>
    %416 = arith.divf %414, %415 : vector<8x128xf32>
    %417 = arith.mulf %408, %388 : vector<8x128xf32>
    %418 = arith.mulf %402, %410 : vector<8x128xf32>
    %419 = arith.addf %417, %418 : vector<8x128xf32>
    %420 = math.tanh %419 : vector<8x128xf32>
    %421 = arith.mulf %416, %420 : vector<8x128xf32>
    %c3_i32_154 = arith.constant 3 : i32
    %422 = arith.index_cast %c3_i32_154 : i32 to index
    %c0_155 = arith.constant 0 : index
    %c0_156 = arith.constant 0 : index
    %423 = vector.load %arg16[%422, %c0_155, %c0_156] : memref<8x8x512xf32, #tpu.memory_space<vmem>>, vector<1x8x512xf32>
    %424 = vector.shape_cast %423 : vector<1x8x512xf32> to vector<8x512xf32>
    %c0_157 = arith.constant 0 : index
    %c0_158 = arith.constant 0 : index
    %425 = vector.load %arg21[%c0_157, %c0_158] : memref<128x512xf32, #tpu.memory_space<vmem>>, vector<128x512xf32>
    %cst_159 = arith.constant dense<0.000000e+00> : vector<8x512xf32>
    %426 = tpu.matmul %421, %425, %cst_159 {dimension_numbers = #tpu.dot_dimension_numbers<[1], [0], [0], [1], [0, 0, 1, 1], [], []>} : vector<8x128xf32>, vector<128x512xf32>, vector<8x512xf32> -> vector<8x512xf32>
    %427 = arith.addf %424, %426 : vector<8x512xf32>
    %428 = vector.extract_strided_slice %427 {offsets = [0, 0], sizes = [8, 128], strides = [1, 1]} : vector<8x512xf32> to vector<8x128xf32>
    %429 = arith.negf %428 : vector<8x128xf32>
    %430 = math.exp %429 : vector<8x128xf32>
    %cst_160 = arith.constant 1.000000e+00 : f32
    %431 = vector.broadcast %cst_160 : f32 to vector<8x128xf32>
    %432 = arith.addf %431, %430 : vector<8x128xf32>
    %433 = arith.divf %431, %432 : vector<8x128xf32>
    %434 = vector.extract_strided_slice %427 {offsets = [0, 128], sizes = [8, 128], strides = [1, 1]} : vector<8x512xf32> to vector<8x128xf32>
    %435 = arith.negf %434 : vector<8x128xf32>
    %436 = math.exp %435 : vector<8x128xf32>
    %cst_161 = arith.constant 1.000000e+00 : f32
    %437 = vector.broadcast %cst_161 : f32 to vector<8x128xf32>
    %438 = arith.addf %437, %436 : vector<8x128xf32>
    %439 = arith.divf %437, %438 : vector<8x128xf32>
    %440 = vector.extract_strided_slice %427 {offsets = [0, 256], sizes = [8, 128], strides = [1, 1]} : vector<8x512xf32> to vector<8x128xf32>
    %441 = math.tanh %440 : vector<8x128xf32>
    %442 = vector.extract_strided_slice %427 {offsets = [0, 384], sizes = [8, 128], strides = [1, 1]} : vector<8x512xf32> to vector<8x128xf32>
    %443 = arith.negf %442 : vector<8x128xf32>
    %444 = math.exp %443 : vector<8x128xf32>
    %cst_162 = arith.constant 1.000000e+00 : f32
    %445 = vector.broadcast %cst_162 : f32 to vector<8x128xf32>
    %446 = arith.addf %445, %444 : vector<8x128xf32>
    %447 = arith.divf %445, %446 : vector<8x128xf32>
    %448 = arith.mulf %439, %419 : vector<8x128xf32>
    %449 = arith.mulf %433, %441 : vector<8x128xf32>
    %450 = arith.addf %448, %449 : vector<8x128xf32>
    %451 = math.tanh %450 : vector<8x128xf32>
    %452 = arith.mulf %447, %451 : vector<8x128xf32>
    %c4_i32_163 = arith.constant 4 : i32
    %453 = arith.index_cast %c4_i32_163 : i32 to index
    %c0_164 = arith.constant 0 : index
    %c0_165 = arith.constant 0 : index
    %454 = vector.load %arg16[%453, %c0_164, %c0_165] : memref<8x8x512xf32, #tpu.memory_space<vmem>>, vector<1x8x512xf32>
    %455 = vector.shape_cast %454 : vector<1x8x512xf32> to vector<8x512xf32>
    %c0_166 = arith.constant 0 : index
    %c0_167 = arith.constant 0 : index
    %456 = vector.load %arg21[%c0_166, %c0_167] : memref<128x512xf32, #tpu.memory_space<vmem>>, vector<128x512xf32>
    %cst_168 = arith.constant dense<0.000000e+00> : vector<8x512xf32>
    %457 = tpu.matmul %452, %456, %cst_168 {dimension_numbers = #tpu.dot_dimension_numbers<[1], [0], [0], [1], [0, 0, 1, 1], [], []>} : vector<8x128xf32>, vector<128x512xf32>, vector<8x512xf32> -> vector<8x512xf32>
    %458 = arith.addf %455, %457 : vector<8x512xf32>
    %459 = vector.extract_strided_slice %458 {offsets = [0, 0], sizes = [8, 128], strides = [1, 1]} : vector<8x512xf32> to vector<8x128xf32>
    %460 = arith.negf %459 : vector<8x128xf32>
    %461 = math.exp %460 : vector<8x128xf32>
    %cst_169 = arith.constant 1.000000e+00 : f32
    %462 = vector.broadcast %cst_169 : f32 to vector<8x128xf32>
    %463 = arith.addf %462, %461 : vector<8x128xf32>
    %464 = arith.divf %462, %463 : vector<8x128xf32>
    %465 = vector.extract_strided_slice %458 {offsets = [0, 128], sizes = [8, 128], strides = [1, 1]} : vector<8x512xf32> to vector<8x128xf32>
    %466 = arith.negf %465 : vector<8x128xf32>
    %467 = math.exp %466 : vector<8x128xf32>
    %cst_170 = arith.constant 1.000000e+00 : f32
    %468 = vector.broadcast %cst_170 : f32 to vector<8x128xf32>
    %469 = arith.addf %468, %467 : vector<8x128xf32>
    %470 = arith.divf %468, %469 : vector<8x128xf32>
    %471 = vector.extract_strided_slice %458 {offsets = [0, 256], sizes = [8, 128], strides = [1, 1]} : vector<8x512xf32> to vector<8x128xf32>
    %472 = math.tanh %471 : vector<8x128xf32>
    %473 = vector.extract_strided_slice %458 {offsets = [0, 384], sizes = [8, 128], strides = [1, 1]} : vector<8x512xf32> to vector<8x128xf32>
    %474 = arith.negf %473 : vector<8x128xf32>
    %475 = math.exp %474 : vector<8x128xf32>
    %cst_171 = arith.constant 1.000000e+00 : f32
    %476 = vector.broadcast %cst_171 : f32 to vector<8x128xf32>
    %477 = arith.addf %476, %475 : vector<8x128xf32>
    %478 = arith.divf %476, %477 : vector<8x128xf32>
    %479 = arith.mulf %470, %450 : vector<8x128xf32>
    %480 = arith.mulf %464, %472 : vector<8x128xf32>
    %481 = arith.addf %479, %480 : vector<8x128xf32>
    %482 = math.tanh %481 : vector<8x128xf32>
    %483 = arith.mulf %478, %482 : vector<8x128xf32>
    %c5_i32_172 = arith.constant 5 : i32
    %484 = arith.index_cast %c5_i32_172 : i32 to index
    %c0_173 = arith.constant 0 : index
    %c0_174 = arith.constant 0 : index
    %485 = vector.load %arg16[%484, %c0_173, %c0_174] : memref<8x8x512xf32, #tpu.memory_space<vmem>>, vector<1x8x512xf32>
    %486 = vector.shape_cast %485 : vector<1x8x512xf32> to vector<8x512xf32>
    %c0_175 = arith.constant 0 : index
    %c0_176 = arith.constant 0 : index
    %487 = vector.load %arg21[%c0_175, %c0_176] : memref<128x512xf32, #tpu.memory_space<vmem>>, vector<128x512xf32>
    %cst_177 = arith.constant dense<0.000000e+00> : vector<8x512xf32>
    %488 = tpu.matmul %483, %487, %cst_177 {dimension_numbers = #tpu.dot_dimension_numbers<[1], [0], [0], [1], [0, 0, 1, 1], [], []>} : vector<8x128xf32>, vector<128x512xf32>, vector<8x512xf32> -> vector<8x512xf32>
    %489 = arith.addf %486, %488 : vector<8x512xf32>
    %490 = vector.extract_strided_slice %489 {offsets = [0, 0], sizes = [8, 128], strides = [1, 1]} : vector<8x512xf32> to vector<8x128xf32>
    %491 = arith.negf %490 : vector<8x128xf32>
    %492 = math.exp %491 : vector<8x128xf32>
    %cst_178 = arith.constant 1.000000e+00 : f32
    %493 = vector.broadcast %cst_178 : f32 to vector<8x128xf32>
    %494 = arith.addf %493, %492 : vector<8x128xf32>
    %495 = arith.divf %493, %494 : vector<8x128xf32>
    %496 = vector.extract_strided_slice %489 {offsets = [0, 128], sizes = [8, 128], strides = [1, 1]} : vector<8x512xf32> to vector<8x128xf32>
    %497 = arith.negf %496 : vector<8x128xf32>
    %498 = math.exp %497 : vector<8x128xf32>
    %cst_179 = arith.constant 1.000000e+00 : f32
    %499 = vector.broadcast %cst_179 : f32 to vector<8x128xf32>
    %500 = arith.addf %499, %498 : vector<8x128xf32>
    %501 = arith.divf %499, %500 : vector<8x128xf32>
    %502 = vector.extract_strided_slice %489 {offsets = [0, 256], sizes = [8, 128], strides = [1, 1]} : vector<8x512xf32> to vector<8x128xf32>
    %503 = math.tanh %502 : vector<8x128xf32>
    %504 = vector.extract_strided_slice %489 {offsets = [0, 384], sizes = [8, 128], strides = [1, 1]} : vector<8x512xf32> to vector<8x128xf32>
    %505 = arith.negf %504 : vector<8x128xf32>
    %506 = math.exp %505 : vector<8x128xf32>
    %cst_180 = arith.constant 1.000000e+00 : f32
    %507 = vector.broadcast %cst_180 : f32 to vector<8x128xf32>
    %508 = arith.addf %507, %506 : vector<8x128xf32>
    %509 = arith.divf %507, %508 : vector<8x128xf32>
    %510 = arith.mulf %501, %481 : vector<8x128xf32>
    %511 = arith.mulf %495, %503 : vector<8x128xf32>
    %512 = arith.addf %510, %511 : vector<8x128xf32>
    %513 = math.tanh %512 : vector<8x128xf32>
    %514 = arith.mulf %509, %513 : vector<8x128xf32>
    %c6_i32_181 = arith.constant 6 : i32
    %515 = arith.index_cast %c6_i32_181 : i32 to index
    %c0_182 = arith.constant 0 : index
    %c0_183 = arith.constant 0 : index
    %516 = vector.load %arg16[%515, %c0_182, %c0_183] : memref<8x8x512xf32, #tpu.memory_space<vmem>>, vector<1x8x512xf32>
    %517 = vector.shape_cast %516 : vector<1x8x512xf32> to vector<8x512xf32>
    %c0_184 = arith.constant 0 : index
    %c0_185 = arith.constant 0 : index
    %518 = vector.load %arg21[%c0_184, %c0_185] : memref<128x512xf32, #tpu.memory_space<vmem>>, vector<128x512xf32>
    %cst_186 = arith.constant dense<0.000000e+00> : vector<8x512xf32>
    %519 = tpu.matmul %514, %518, %cst_186 {dimension_numbers = #tpu.dot_dimension_numbers<[1], [0], [0], [1], [0, 0, 1, 1], [], []>} : vector<8x128xf32>, vector<128x512xf32>, vector<8x512xf32> -> vector<8x512xf32>
    %520 = arith.addf %517, %519 : vector<8x512xf32>
    %521 = vector.extract_strided_slice %520 {offsets = [0, 0], sizes = [8, 128], strides = [1, 1]} : vector<8x512xf32> to vector<8x128xf32>
    %522 = arith.negf %521 : vector<8x128xf32>
    %523 = math.exp %522 : vector<8x128xf32>
    %cst_187 = arith.constant 1.000000e+00 : f32
    %524 = vector.broadcast %cst_187 : f32 to vector<8x128xf32>
    %525 = arith.addf %524, %523 : vector<8x128xf32>
    %526 = arith.divf %524, %525 : vector<8x128xf32>
    %527 = vector.extract_strided_slice %520 {offsets = [0, 128], sizes = [8, 128], strides = [1, 1]} : vector<8x512xf32> to vector<8x128xf32>
    %528 = arith.negf %527 : vector<8x128xf32>
    %529 = math.exp %528 : vector<8x128xf32>
    %cst_188 = arith.constant 1.000000e+00 : f32
    %530 = vector.broadcast %cst_188 : f32 to vector<8x128xf32>
    %531 = arith.addf %530, %529 : vector<8x128xf32>
    %532 = arith.divf %530, %531 : vector<8x128xf32>
    %533 = vector.extract_strided_slice %520 {offsets = [0, 256], sizes = [8, 128], strides = [1, 1]} : vector<8x512xf32> to vector<8x128xf32>
    %534 = math.tanh %533 : vector<8x128xf32>
    %535 = vector.extract_strided_slice %520 {offsets = [0, 384], sizes = [8, 128], strides = [1, 1]} : vector<8x512xf32> to vector<8x128xf32>
    %536 = arith.negf %535 : vector<8x128xf32>
    %537 = math.exp %536 : vector<8x128xf32>
    %cst_189 = arith.constant 1.000000e+00 : f32
    %538 = vector.broadcast %cst_189 : f32 to vector<8x128xf32>
    %539 = arith.addf %538, %537 : vector<8x128xf32>
    %540 = arith.divf %538, %539 : vector<8x128xf32>
    %541 = arith.mulf %532, %512 : vector<8x128xf32>
    %542 = arith.mulf %526, %534 : vector<8x128xf32>
    %543 = arith.addf %541, %542 : vector<8x128xf32>
    %544 = math.tanh %543 : vector<8x128xf32>
    %545 = arith.mulf %540, %544 : vector<8x128xf32>
    %c7_i32_190 = arith.constant 7 : i32
    %546 = arith.index_cast %c7_i32_190 : i32 to index
    %c0_191 = arith.constant 0 : index
    %c0_192 = arith.constant 0 : index
    %547 = vector.load %arg16[%546, %c0_191, %c0_192] : memref<8x8x512xf32, #tpu.memory_space<vmem>>, vector<1x8x512xf32>
    %548 = vector.shape_cast %547 : vector<1x8x512xf32> to vector<8x512xf32>
    %c0_193 = arith.constant 0 : index
    %c0_194 = arith.constant 0 : index
    %549 = vector.load %arg21[%c0_193, %c0_194] : memref<128x512xf32, #tpu.memory_space<vmem>>, vector<128x512xf32>
    %cst_195 = arith.constant dense<0.000000e+00> : vector<8x512xf32>
    %550 = tpu.matmul %545, %549, %cst_195 {dimension_numbers = #tpu.dot_dimension_numbers<[1], [0], [0], [1], [0, 0, 1, 1], [], []>} : vector<8x128xf32>, vector<128x512xf32>, vector<8x512xf32> -> vector<8x512xf32>
    %551 = arith.addf %548, %550 : vector<8x512xf32>
    %552 = vector.extract_strided_slice %551 {offsets = [0, 0], sizes = [8, 128], strides = [1, 1]} : vector<8x512xf32> to vector<8x128xf32>
    %553 = arith.negf %552 : vector<8x128xf32>
    %554 = math.exp %553 : vector<8x128xf32>
    %cst_196 = arith.constant 1.000000e+00 : f32
    %555 = vector.broadcast %cst_196 : f32 to vector<8x128xf32>
    %556 = arith.addf %555, %554 : vector<8x128xf32>
    %557 = arith.divf %555, %556 : vector<8x128xf32>
    %558 = vector.extract_strided_slice %551 {offsets = [0, 128], sizes = [8, 128], strides = [1, 1]} : vector<8x512xf32> to vector<8x128xf32>
    %559 = arith.negf %558 : vector<8x128xf32>
    %560 = math.exp %559 : vector<8x128xf32>
    %cst_197 = arith.constant 1.000000e+00 : f32
    %561 = vector.broadcast %cst_197 : f32 to vector<8x128xf32>
    %562 = arith.addf %561, %560 : vector<8x128xf32>
    %563 = arith.divf %561, %562 : vector<8x128xf32>
    %564 = vector.extract_strided_slice %551 {offsets = [0, 256], sizes = [8, 128], strides = [1, 1]} : vector<8x512xf32> to vector<8x128xf32>
    %565 = math.tanh %564 : vector<8x128xf32>
    %566 = vector.extract_strided_slice %551 {offsets = [0, 384], sizes = [8, 128], strides = [1, 1]} : vector<8x512xf32> to vector<8x128xf32>
    %567 = arith.negf %566 : vector<8x128xf32>
    %568 = math.exp %567 : vector<8x128xf32>
    %cst_198 = arith.constant 1.000000e+00 : f32
    %569 = vector.broadcast %cst_198 : f32 to vector<8x128xf32>
    %570 = arith.addf %569, %568 : vector<8x128xf32>
    %571 = arith.divf %569, %570 : vector<8x128xf32>
    %572 = arith.mulf %563, %543 : vector<8x128xf32>
    %573 = arith.mulf %557, %565 : vector<8x128xf32>
    %574 = arith.addf %572, %573 : vector<8x128xf32>
    %575 = math.tanh %574 : vector<8x128xf32>
    %576 = arith.mulf %571, %575 : vector<8x128xf32>
    %c8_i32_199 = arith.constant 8 : i32
    %c1_200 = arith.constant 1 : index
    %c0_201 = arith.constant 0 : index
    %c0_202 = arith.constant 0 : index
    %577 = vector.load %arg14[%c1_200, %c0_201, %c0_202] : memref<2x8x128xf32, #tpu.memory_space<vmem>>, vector<1x8x128xf32>
    %578 = vector.shape_cast %577 : vector<1x8x128xf32> to vector<8x128xf32>
    %579 = vector.shape_cast %576 : vector<8x128xf32> to vector<1x8x128xf32>
    tpu.vector_store %arg14[%c1_200, %c0_201, %c0_202], %579 {strides = array<i32>} : memref<2x8x128xf32, #tpu.memory_space<vmem>>, vector<1x8x128xf32>,
    %c1_203 = arith.constant 1 : index
    %c0_204 = arith.constant 0 : index
    %c0_205 = arith.constant 0 : index
    %580 = vector.load %arg15[%c1_203, %c0_204, %c0_205] : memref<2x8x128xf32, #tpu.memory_space<vmem>>, vector<1x8x128xf32>
    %581 = vector.shape_cast %580 : vector<1x8x128xf32> to vector<8x128xf32>
    %582 = vector.shape_cast %574 : vector<8x128xf32> to vector<1x8x128xf32>
    tpu.vector_store %arg15[%c1_203, %c0_204, %c0_205], %582 {strides = array<i32>} : memref<2x8x128xf32, #tpu.memory_space<vmem>>, vector<1x8x128xf32>,
    %c0_i32_206 = arith.constant 0 : i32
    %583 = arith.cmpi eq, %arg1, %c0_i32_206 : i32
    %584 = arith.extui %583 : i1 to i32
    %c0_i32_207 = arith.constant 0 : i32
    %585 = arith.cmpi ne, %584, %c0_i32_207 : i32
    scf.if %585 {
      %c1_208 = arith.constant 1 : index
      %c0_209 = arith.constant 0 : index
      %c0_210 = arith.constant 0 : index
      %586 = vector.load %arg14[%c1_208, %c0_209, %c0_210] : memref<2x8x128xf32, #tpu.memory_space<vmem>>, vector<1x8x128xf32>
      %587 = vector.shape_cast %586 : vector<1x8x128xf32> to vector<8x128xf32>
      %c0_211 = arith.constant 0 : index
      %c0_212 = arith.constant 0 : index
      %588 = vector.load %arg9[%c0_211, %c0_212] : memref<128x128xf32, #tpu.memory_space<vmem>>, vector<128x128xf32>
      %cst_213 = arith.constant dense<0.000000e+00> : vector<8x128xf32>
      %589 = tpu.matmul %587, %588, %cst_213 {dimension_numbers = #tpu.dot_dimension_numbers<[1], [0], [0], [1], [0, 0, 1, 1], [], []>} : vector<8x128xf32>, vector<128x128xf32>, vector<8x128xf32> -> vector<8x128xf32>
      %c0_214 = arith.constant 0 : index
      %c0_215 = arith.constant 0 : index
      %590 = vector.load %arg10[%c0_214, %c0_215] : memref<1x128xf32, #tpu.memory_space<vmem>>, vector<1x128xf32>
      %591 = vector.broadcast %590 : vector<1x128xf32> to vector<8x128xf32>
      %592 = arith.addf %589, %591 : vector<8x128xf32>
      %cst_216 = arith.constant 0.000000e+00 : f32
      %593 = vector.broadcast %cst_216 : f32 to vector<8x128xf32>
      %594 = arith.cmpf ogt, %592, %593 : vector<8x128xf32>
      %cst_217 = arith.constant 0.00999999977 : f32
      %595 = vector.broadcast %cst_217 : f32 to vector<8x128xf32>
      %596 = arith.mulf %595, %592 : vector<8x128xf32>
      %597 = arith.select %594, %592, %596 : vector<8x128xi1>, vector<8x128xf32>
      %c0_218 = arith.constant 0 : index
      %c0_219 = arith.constant 0 : index
      %598 = vector.load %arg11[%c0_218, %c0_219] : memref<1x128xf32, #tpu.memory_space<vmem>>, vector<1x128xf32>
      %599 = vector.broadcast %598 : vector<1x128xf32> to vector<8x128xf32>
      %600 = arith.mulf %597, %599 : vector<8x128xf32>
      %cst_220 = arith.constant dense<0.000000e+00> : vector<8xf32>
      %601 = vector.multi_reduction <add>, %600, %cst_220 [1] : vector<8x128xf32> to vector<8xf32>
      %602 = vector.shape_cast %601 : vector<8xf32> to vector<8x1xf32>
      %c0_221 = arith.constant 0 : index
      %c0_222 = arith.constant 0 : index
      %603 = vector.load %arg12[%c0_221, %c0_222] : memref<1x1xf32, #tpu.memory_space<vmem>>, vector<1x1xf32>
      %604 = vector.broadcast %603 : vector<1x1xf32> to vector<8x1xf32>
      %605 = arith.addf %602, %604 : vector<8x1xf32>
      %c0_223 = arith.constant 0 : index
      %c0_224 = arith.constant 0 : index
      %606 = vector.load %arg13[%c0_223, %c0_224] : memref<8x1xf32, #tpu.memory_space<vmem>>, vector<8x1xf32>
      tpu.vector_store %arg13[%c0_223, %c0_224], %605 {strides = array<i32>} : memref<8x1xf32, #tpu.memory_space<vmem>>, vector<8x1xf32>,
    } else {
    }
    return
  }
  func.func @transform_0(%arg0: i32, %arg1: i32) -> (i32, i32, i32) {
    %c0_i32 = arith.constant 0 : i32
    %c0_i32_0 = arith.constant 0 : i32
    return %arg1, %arg0, %c0_i32 : i32, i32, i32
  }
  func.func @transform_5(%arg0: i32, %arg1: i32) -> (i32, i32) {
    %c0_i32 = arith.constant 0 : i32
    %c0_i32_0 = arith.constant 0 : i32
    %c0_i32_1 = arith.constant 0 : i32
    return %c0_i32, %c0_i32_0 : i32, i32
  }
  func.func @transform_6(%arg0: i32, %arg1: i32) -> (i32, i32) {
    %c0_i32 = arith.constant 0 : i32
    %c0_i32_0 = arith.constant 0 : i32
    %c0_i32_1 = arith.constant 0 : i32
    return %c0_i32, %c0_i32_0 : i32, i32
  }
  func.func @transform_7(%arg0: i32, %arg1: i32) -> (i32, i32) {
    %c0_i32 = arith.constant 0 : i32
    %c0_i32_0 = arith.constant 0 : i32
    %c0_i32_1 = arith.constant 0 : i32
    return %c0_i32, %c0_i32_0 : i32, i32
  }
  func.func @transform_8(%arg0: i32, %arg1: i32) -> (i32, i32) {
    %c0_i32 = arith.constant 0 : i32
    %c0_i32_0 = arith.constant 0 : i32
    %c0_i32_1 = arith.constant 0 : i32
    return %c0_i32, %c0_i32_0 : i32, i32
  }
  func.func @transform_9(%arg0: i32, %arg1: i32) -> (i32, i32) {
    %c0_i32 = arith.constant 0 : i32
    %c0_i32_0 = arith.constant 0 : i32
    %c0_i32_1 = arith.constant 0 : i32
    return %c0_i32, %c0_i32_0 : i32, i32
  }
  func.func @transform_10(%arg0: i32, %arg1: i32) -> (i32, i32) {
    %c0_i32 = arith.constant 0 : i32
    %c0_i32_0 = arith.constant 0 : i32
    %c0_i32_1 = arith.constant 0 : i32
    return %c0_i32, %c0_i32_0 : i32, i32
  }
  func.func @transform_11(%arg0: i32, %arg1: i32) -> (i32, i32) {
    %c0_i32 = arith.constant 0 : i32
    %c0_i32_0 = arith.constant 0 : i32
    return %arg0, %c0_i32 : i32, i32
  }
}

</mosaic_0001>

<llo_original>
// kernel: tpu_custom_call.1
$region0: #{tpu_custom_call.1}
  #allocation0 [shape = 'u32[]', space=smem, size = 0x4, offset = 0x4, fixed_abs, tag = 'smem constant byte address 0x4 - core index']
  #allocation1 [shape = 'u32[144,128]{1,0:T(1,128)}', space=vmem, size = 0x12000, scoped, tag = 'internal scratch']
  #allocation2 [shape = 'f32[2,8,128]{2,1,0:T(8,128)}', space=vmem, size = 0x2000, scoped, tag = 'scratch operand']
  #allocation3 [shape = 'f32[2,8,128]{2,1,0:T(8,128)}', space=vmem, size = 0x2000, scoped, tag = 'scratch operand']
  #allocation4 [shape = 'f32[8,8,512]{2,1,0:T(8,128)}', space=vmem, size = 0x20000, scoped, tag = 'scratch operand']
  #allocation5 [shape = 'f32[8,8,128]{2,1,0:T(8,128)}', space=vmem, size = 0x8000, scoped, tag = 'scratch operand']
  #allocation6 [shape = 'f32[16,512]{1,0:T(8,128)}', space=vmem, size = 0x8000, scoped, tag = 'scratch operand']
  #allocation7 [shape = 'f32[128,512]{1,0:T(8,128)}', space=vmem, size = 0x40000, scoped, tag = 'scratch operand']
  #allocation8 [shape = 'f32[128,512]{1,0:T(8,128)}', space=vmem, size = 0x40000, scoped, tag = 'scratch operand']
  #allocation9 [shape = 'f32[128,512]{1,0:T(8,128)}', space=vmem, size = 0x40000, scoped, tag = 'scratch operand']
  #allocation10 [shape = 's32[4]{0}', space=sflag, size = 0x10, scoped, tag = 'scratch operand']
  #allocation11 [shape = 'f32[1,1]{1,0:T(1,128)S(1)}', space=vmem, size = 0x200, scoped, tag = 'scoped memory for tpu_custom_call.1']
  #allocation16 [shape = 's32[]', space=sflag, size = 0x4, offset = 0, fixed_abs, tag = 'sflag constant byte address 0x0 - dummy sync flag']
  #allocation17 [shape = 's32[]', space=sflag, size = 0x4, offset = 0, fixed_abs, tag = 'sflag constant byte address 0x0 - dummy sync flag']
  #allocation18 [shape = 'u32[]', space=smem, size = 0x4, offset = 0x44, fixed_abs, tag = 'smem constant byte address 0x44 - assertion arg 0']
  #allocation19 [shape = 'u32[]', space=smem, size = 0x4, offset = 0x48, fixed_abs, tag = 'smem constant byte address 0x48 - assertion arg 1']
  #allocation20 [shape = 's32[]', space=sflag, size = 0x4, offset = 0, fixed_abs, tag = 'sflag constant byte address 0x0 - dummy sync flag']
  #allocation21 [shape = 's32[]', space=sflag, size = 0x4, offset = 0, fixed_abs, tag = 'sflag constant byte address 0x0 - dummy sync flag']
  #allocation22 [shape = 's32[]', space=sflag, size = 0x4, offset = 0, fixed_abs, tag = 'sflag constant byte address 0x0 - dummy sync flag']
  #allocation23 [shape = 's32[]', space=sflag, size = 0x4, offset = 0, fixed_abs, tag = 'sflag constant byte address 0x0 - dummy sync flag']
  #allocation24 [shape = 's32[]', space=sflag, size = 0x4, offset = 0, fixed_abs, tag = 'sflag constant byte address 0x0 - dummy sync flag']
  #allocation25 [shape = 's32[]', space=sflag, size = 0x4, offset = 0, fixed_abs, tag = 'sflag constant byte address 0x0 - dummy sync flag']
  %s0 = inlined_call_operand.hbm [shape: f32[8,8,16], index: 0, kind: input, shape index: {}]
  %s1 = inlined_call_operand.hbm [shape: f32[16,512], index: 1, kind: input, shape index: {}]
  %s2 = inlined_call_operand.hbm [shape: f32[128,512], index: 2, kind: input, shape index: {}]
  %s3 = inlined_call_operand.hbm [shape: f32[128,512], index: 3, kind: input, shape index: {}]
  %s4 = inlined_call_operand.hbm [shape: f32[128,512], index: 4, kind: input, shape index: {}]
  %s5 = inlined_call_operand.vmem [shape: f32[1,512], index: 5, kind: input, shape index: {}]
  %s6 = inlined_call_operand.vmem [shape: f32[1,512], index: 6, kind: input, shape index: {}]
  %s7 = inlined_call_operand.hbm [shape: f32[128,128], index: 7, kind: input, shape index: {}]
  %s8 = inlined_call_operand.vmem [shape: f32[1,128], index: 8, kind: input, shape index: {}]
  %s9 = inlined_call_operand.vmem [shape: f32[1,128], index: 9, kind: input, shape index: {}]
  %s10 = inlined_call_operand.<no memory space> [shape: f32[1,1], index: 10, kind: input, shape index: {}]
  %s11 = inlined_call_operand.vmem [shape: f32[8,1], index: 11, kind: output, shape index: {}]
  %s12 = sld [smem:[#allocation0]]
  $region82: #{tpu_custom_call.1} parent=0
    _
  %s14 = ssub.s32 1, %s12
  %s15 = scalar_select 0, %s14, %s12
  %v16 = vstv %s10
  %17 = vst [vmem:[#allocation11] sm:$0x1] %v16
  $region1: #{tpu_custom_call.1} parent=0
    #allocation12 [shape = 'u8[32768]{0}', space=vmem, size = 0x8000, scoped, tag = 'input window, operand 0, single buffered']
    #allocation13 [shape = 's32[1]{0}', space=sflag, size = 0x4, scoped, tag = 'scoped memory for tpu_custom_call.1']
    #allocation14 [shape = 'u8[65536]{0}', space=vmem, size = 0x10000, scoped, tag = 'input window, operand 7, single buffered']
    #allocation15 [shape = 's32[1]{0}', space=sflag, size = 0x4, scoped, tag = 'scoped memory for tpu_custom_call.1']
    %18 = vsyncpa [#allocation13], 0
    %19 = vsyncpa [#allocation15], 0
    // Predicated region
    $region2: #{tpu_custom_call.1} parent=1 // pred_check
      _
    $region3: #{tpu_custom_call.1} parent=1 // pred_check_branch
      %21 = sbr.rel (0) target = $region5
    $region4: #{tpu_custom_call.1} parent=1 // pred_region
      %s23 = ssub.s32 1024, 1024
      %24 = vsyncadd [#allocation13], %s23
      %s25 = sshll.u32 [#allocation12], 4
      %s26 = int_to_ptr.vmem [resolvable:$true] %s25
      %31 = dma.hbm_to_vmem [thread:$0]  %s0, 1024, %s26, [#allocation13], 128, 128, 8
    $region5: #{tpu_custom_call.1} parent=1 // pred_fallthru
      _
    // Predicated region
    $region6: #{tpu_custom_call.1} parent=1 // pred_check
      _
    $region7: #{tpu_custom_call.1} parent=1 // pred_check_branch
      %33 = sbr.rel (0) target = $region9
    $region8: #{tpu_custom_call.1} parent=1 // pred_region
      _
    $region9: #{tpu_custom_call.1} parent=1 // pred_fallthru
      _
    // Predicated region
    $region10: #{tpu_custom_call.1} parent=1 // pred_check
      _
    $region11: #{tpu_custom_call.1} parent=1 // pred_check_branch
      %35 = sbr.rel (0) target = $region13
    $region12: #{tpu_custom_call.1} parent=1 // pred_region
      _
    $region13: #{tpu_custom_call.1} parent=1 // pred_fallthru
      _
    // Predicated region
    $region14: #{tpu_custom_call.1} parent=1 // pred_check
      _
    $region15: #{tpu_custom_call.1} parent=1 // pred_check_branch
      %37 = sbr.rel (0) target = $region17
    $region16: #{tpu_custom_call.1} parent=1 // pred_region
      %s39 = ssub.s32 2048, 2048
      %40 = vsyncadd [#allocation15], %s39
      %s41 = sshll.u32 [#allocation14], 4
      %s42 = int_to_ptr.vmem [resolvable:$true] %s41
      %47 = dma.hbm_to_vmem [thread:$0]  %s7, 2048, %s42, [#allocation15], 128, 128, 8
    $region17: #{tpu_custom_call.1} parent=1 // pred_fallthru
      _
    // Predicated region
    $region18: #{tpu_custom_call.1} parent=1 // pred_check
      _
    $region19: #{tpu_custom_call.1} parent=1 // pred_check_branch
      %49 = sbr.rel (0) target = $region21
    $region20: #{tpu_custom_call.1} parent=1 // pred_region
      _
    $region21: #{tpu_custom_call.1} parent=1 // pred_fallthru
      _
    // Predicated region
    $region22: #{tpu_custom_call.1} parent=1 // pred_check
      _
    $region23: #{tpu_custom_call.1} parent=1 // pred_check_branch
      %51 = sbr.rel (0) target = $region25
    $region24: #{tpu_custom_call.1} parent=1 // pred_region
      _
    $region25: #{tpu_custom_call.1} parent=1 // pred_fallthru
      _
    // Predicated region
    $region26: #{tpu_custom_call.1} parent=1 // pred_check
      _
    $region27: #{tpu_custom_call.1} parent=1 // pred_check_branch
      %53 = sbr.rel (0) target = $region29
    $region28: #{tpu_custom_call.1} parent=1 // pred_region
      _
    $region29: #{tpu_custom_call.1} parent=1 // pred_fallthru
      _
    // Predicated region
    $region30: #{tpu_custom_call.1} parent=1 // pred_check
      _
    $region31: #{tpu_custom_call.1} parent=1 // pred_check_branch
      %55 = sbr.rel (0) target = $region33
    $region32: #{tpu_custom_call.1} parent=1 // pred_region
      %56 = dma.done [#allocation13], 1024
    $region33: #{tpu_custom_call.1} parent=1 // pred_fallthru
      _
    // Predicated region
    $region34: #{tpu_custom_call.1} parent=1 // pred_check
      _
    $region35: #{tpu_custom_call.1} parent=1 // pred_check_branch
      %58 = sbr.rel (0) target = $region37
    $region36: #{tpu_custom_call.1} parent=1 // pred_region
      %59 = dma.done [#allocation15], 2048
    $region37: #{tpu_custom_call.1} parent=1 // pred_fallthru
      _
    %p60 = scmp.eq.s32.totalorder 0, 0
    // Predicated region
    $region38: #{tpu_custom_call.1} parent=1 // pred_check
      %p61 = pneg %p60
    $region39: #{tpu_custom_call.1} parent=1 // pred_check_branch
      %63 = sbr.rel (%p61) target = $region41
    $region40: #{tpu_custom_call.1} parent=1 // pred_region
      %64 = vst [vmem:[#allocation2] sm:$0xff] 0.0
      %65 = vst [vmem:[#allocation2 + $0x8] sm:$0xff] 0.0
      %66 = vst [vmem:[#allocation3] sm:$0xff] 0.0
      %67 = vst [vmem:[#allocation3 + $0x8] sm:$0xff] 0.0
      // Predicated region
      $region42: #{tpu_custom_call.1} parent=40 // pred_check
        _
      $region43: #{tpu_custom_call.1} parent=40 // pred_check_branch
        %69 = sbr.rel target = $region45
      $region44: #{tpu_custom_call.1} parent=40 // pred_region
        %70 = sst [smem:[#allocation18]] [#allocation17]
        %71 = sst [smem:[#allocation19]] [#allocation16]
      $region45: #{tpu_custom_call.1} parent=40 // pred_fallthru
        _
      %73 = shalt.err (0)
      %s75 = sshll.u32 [#allocation6], 4
      %s76 = int_to_ptr.vmem [resolvable:$true] %s75
      %78 = dma.hbm_to_vmem [thread:$0]  %s1, 1024, %s76, [#allocation10]
      %s79 = scalar_lea.sflag [#allocation10], 2
      // Predicated region
      $region46: #{tpu_custom_call.1} parent=40 // pred_check
        _
      $region47: #{tpu_custom_call.1} parent=40 // pred_check_branch
        %81 = sbr.rel target = $region49
      $region48: #{tpu_custom_call.1} parent=40 // pred_region
        %82 = sst [smem:[#allocation18]] [#allocation21]
        %83 = sst [smem:[#allocation19]] [#allocation20]
      $region49: #{tpu_custom_call.1} parent=40 // pred_fallthru
        _
      %85 = shalt.err (0)
      %s87 = sshll.u32 [#allocation8], 4
      %s88 = int_to_ptr.vmem [resolvable:$true] %s87
      %90 = dma.hbm_to_vmem [thread:$0]  %s3, 8192, %s88, %s79
      %s91 = scalar_lea.sflag [#allocation10], 1
      // Predicated region
      $region50: #{tpu_custom_call.1} parent=40 // pred_check
        _
      $region51: #{tpu_custom_call.1} parent=40 // pred_check_branch
        %93 = sbr.rel target = $region53
      $region52: #{tpu_custom_call.1} parent=40 // pred_region
        %94 = sst [smem:[#allocation18]] [#allocation23]
        %95 = sst [smem:[#allocation19]] [#allocation22]
      $region53: #{tpu_custom_call.1} parent=40 // pred_fallthru
        _
      %97 = shalt.err (0)
      %s99 = sshll.u32 [#allocation7], 4
      %s100 = int_to_ptr.vmem [resolvable:$true] %s99
      %102 = dma.hbm_to_vmem [thread:$0]  %s2, 8192, %s100, %s91
      %s103 = scalar_lea.sflag [#allocation10], 3
      // Predicated region
      $region54: #{tpu_custom_call.1} parent=40 // pred_check
        _
      $region55: #{tpu_custom_call.1} parent=40 // pred_check_branch
        %105 = sbr.rel target = $region57
      $region56: #{tpu_custom_call.1} parent=40 // pred_region
        %106 = sst [smem:[#allocation18]] [#allocation25]
        %107 = sst [smem:[#allocation19]] [#allocation24]
      $region57: #{tpu_custom_call.1} parent=40 // pred_fallthru
        _
      %109 = shalt.err (0)
      %s111 = sshll.u32 [#allocation9], 4
      %s112 = int_to_ptr.vmem [resolvable:$true] %s111
      %114 = dma.hbm_to_vmem [thread:$0]  %s4, 8192, %s112, %s103
      %s115 = smul.u32 8, 2
      %s116 = smul.u32 %s115, 4
      %s117 = sshll.u32 %s116, 4
      %118 = dma.done [#allocation10], %s117
    $region41: #{tpu_custom_call.1} parent=1 // pred_fallthru
      _
    %v119 = vld [vmem:[#allocation12] sm:$0xff]
    %v120 = vld [vmem:[#allocation12 + $0x8] sm:$0xff]
    %v121 = vld [vmem:[#allocation12 + $0x10] sm:$0xff]
    %v122 = vld [vmem:[#allocation12 + $0x18] sm:$0xff]
    %v123 = vld [vmem:[#allocation12 + $0x20] sm:$0xff]
    %v124 = vld [vmem:[#allocation12 + $0x28] sm:$0xff]
    %v125 = vld [vmem:[#allocation12 + $0x30] sm:$0xff]
    %v126 = vld [vmem:[#allocation12 + $0x38] sm:$0xff]
    %v127 = vld [vmem:[#allocation6] sm:$0xff]
    %v128 = vld [vmem:[#allocation6 + $0x8] sm:$0xff]
    %v129 = vld [vmem:[#allocation6 + $0x10] sm:$0xff]
    %v130 = vld [vmem:[#allocation6 + $0x18] sm:$0xff]
    %v131 = vld [vmem:[#allocation6 + $0x20] sm:$0xff]
    %v132 = vld [vmem:[#allocation6 + $0x28] sm:$0xff]
    %v133 = vld [vmem:[#allocation6 + $0x30] sm:$0xff]
    %v134 = vld [vmem:[#allocation6 + $0x38] sm:$0xff]
    %vm135 = vcmask 130048
    %v137 = vsel %vm135, %v119, 0
    %v140 = vsel %vm135, %v120, 0
    %v143 = vsel %vm135, %v121, 0
    %v146 = vsel %vm135, %v122, 0
    %v149 = vsel %vm135, %v123, 0
    %v152 = vsel %vm135, %v124, 0
    %v155 = vsel %vm135, %v125, 0
    %v158 = vsel %vm135, %v126, 0
    %160 = vmatprep.subr.mxu0 %v128
    %161 = vmatpush1.msra.mxu0 %v127
    %162 = vmatprep.subr.mxu0 %v132
    %163 = vmatpush1.msra.mxu0 %v131
    %164 = vmatprep.subr.mxu0 0.0
    %165 = vmatpush1.msra.mxu0 0.0
    %166 = vmatprep.subr.mxu0 0.0
    %167 = vmatpush1.msra.mxu0 0.0
    %168 = vmatprep.subr.mxu0 0.0
    %169 = vmatpush1.msra.mxu0 0.0
    %170 = vmatprep.subr.mxu0 0.0
    %171 = vmatpush1.msra.mxu0 0.0
    %172 = vmatprep.subr.mxu0 0.0
    %173 = vmatpush1.msra.mxu0 0.0
    %174 = vmatprep.subr.mxu0 0.0
    %175 = vmatpush1.msra.mxu0 0.0
    %176 = vmatprep.subr.mxu0 0.0
    %177 = vmatpush1.msra.mxu0 0.0
    %178 = vmatprep.subr.mxu0 0.0
    %179 = vmatpush1.msra.mxu0 0.0
    %180 = vmatprep.subr.mxu0 0.0
    %181 = vmatpush1.msra.mxu0 0.0
    %182 = vmatprep.subr.mxu0 0.0
    %183 = vmatpush1.msra.mxu0 0.0
    %184 = vmatprep.subr.mxu0 0.0
    %185 = vmatpush1.msra.mxu0 0.0
    %186 = vmatprep.subr.mxu0 0.0
    %187 = vmatpush1.msra.mxu0 0.0
    %188 = vmatprep.subr.mxu0 0.0
    %189 = vmatpush1.msra.mxu0 0.0
    %190 = vmatprep.subr.mxu0 0.0
    %191 = vmatpush1.msra.mxu0 0.0
    %192 = vmatprep.subr.mxu0 0.0
    %193 = vmatpush1.msra.mxu0 0.0
    %194 = vmatprep.subr.mxu0 0.0
    %195 = vmatpush1.msra.mxu0 0.0
    %196 = vmatprep.subr.mxu0 0.0
    %197 = vmatpush1.msra.mxu0 0.0
    %198 = vmatprep.subr.mxu0 0.0
    %199 = vmatpush1.msra.mxu0 0.0
    %200 = vmatprep.subr.mxu0 0.0
    %201 = vmatpush1.msra.mxu0 0.0
    %202 = vmatprep.subr.mxu0 0.0
    %203 = vmatpush1.msra.mxu0 0.0
    %204 = vmatprep.subr.mxu0 0.0
    %205 = vmatpush1.msra.mxu0 0.0
    %206 = vmatprep.subr.mxu0 0.0
    %207 = vmatpush1.msra.mxu0 0.0
    %208 = vmatprep.subr.mxu0 0.0
    %209 = vmatpush1.msra.mxu0 0.0
    %210 = vmatprep.subr.mxu0 0.0
    %211 = vmatpush1.msra.mxu0 0.0
    %212 = vmatprep.subr.mxu0 0.0
    %213 = vmatpush1.msra.mxu0 0.0
    %214 = vmatprep.subr.mxu0 0.0
    %215 = vmatpush1.msra.mxu0 0.0
    %216 = vmatprep.subr.mxu0 0.0
    %217 = vmatpush1.msra.mxu0 0.0
    %218 = vmatprep.subr.mxu0 0.0
    %219 = vmatpush1.msra.mxu0 0.0
    %220 = vmatprep.subr.mxu0 0.0
    %221 = vmatpush1.msra.mxu0 0.0
    %222 = vmatprep.subr.mxu0 0.0
    %223 = vmatpush1.msra.mxu0 0.0
    %224 = vmatprep.mubr.f32.mxu0 0.0
    %225 = vmatmul.mubr.f32.gmra.mrb[0].mxu0 %v137
    %v226 = vpop.f32.mrb[0].mxu0
    %v227 = vadd.f32 0.0, %v226
    %v228 = vpop.f32.mrb[0].mxu0
    %v229 = vadd.f32 0.0, %v228
    %230 = vmatprep.mubr.f32.mxu0 0.0
    %231 = vmatmul.mubr.f32.gmra.mrb[0].mxu0 %v140
    %v232 = vpop.f32.mrb[0].mxu0
    %v233 = vadd.f32 0.0, %v232
    %v234 = vpop.f32.mrb[0].mxu0
    %v235 = vadd.f32 0.0, %v234
    %236 = vmatprep.mubr.f32.mxu0 0.0
    %237 = vmatmul.mubr.f32.gmra.mrb[0].mxu0 %v143
    %v238 = vpop.f32.mrb[0].mxu0
    %v239 = vadd.f32 0.0, %v238
    %v240 = vpop.f32.mrb[0].mxu0
    %v241 = vadd.f32 0.0, %v240
    %242 = vmatprep.mubr.f32.mxu0 0.0
    %243 = vmatmul.mubr.f32.gmra.mrb[0].mxu0 %v146
    %v244 = vpop.f32.mrb[0].mxu0
    %v245 = vadd.f32 0.0, %v244
    %v246 = vpop.f32.mrb[0].mxu0
    %v247 = vadd.f32 0.0, %v246
    %248 = vmatprep.mubr.f32.mxu0 0.0
    %249 = vmatmul.mubr.f32.gmra.mrb[0].mxu0 %v149
    %v250 = vpop.f32.mrb[0].mxu0
    %v251 = vadd.f32 0.0, %v250
    %v252 = vpop.f32.mrb[0].mxu0
    %v253 = vadd.f32 0.0, %v252
    %254 = vmatprep.mubr.f32.mxu0 0.0
    %255 = vmatmul.mubr.f32.gmra.mrb[0].mxu0 %v152
    %v256 = vpop.f32.mrb[0].mxu0
    %v257 = vadd.f32 0.0, %v256
    %v258 = vpop.f32.mrb[0].mxu0
    %v259 = vadd.f32 0.0, %v258
    %260 = vmatprep.mubr.f32.mxu0 0.0
    %261 = vmatmul.mubr.f32.gmra.mrb[0].mxu0 %v155
    %v262 = vpop.f32.mrb[0].mxu0
    %v263 = vadd.f32 0.0, %v262
    %v264 = vpop.f32.mrb[0].mxu0
    %v265 = vadd.f32 0.0, %v264
    %266 = vmatprep.mubr.f32.mxu0 0.0
    %267 = vmatmul.mubr.f32.gmra.mrb[0].mxu0 %v158
    %v268 = vpop.f32.mrb[0].mxu0
    %v269 = vadd.f32 0.0, %v268
    %v270 = vpop.f32.mrb[0].mxu0
    %v271 = vadd.f32 0.0, %v270
    %272 = vdwg.mxu0
    %273 = vmatprep.subr.mxu0 %v130
    %274 = vmatpush1.msra.mxu0 %v129
    %275 = vmatprep.subr.mxu0 %v134
    %276 = vmatpush1.msra.mxu0 %v133
    %277 = vmatprep.subr.mxu0 0.0
    %278 = vmatpush1.msra.mxu0 0.0
    %279 = vmatprep.subr.mxu0 0.0
    %280 = vmatpush1.msra.mxu0 0.0
    %281 = vmatprep.subr.mxu0 0.0
    %282 = vmatpush1.msra.mxu0 0.0
    %283 = vmatprep.subr.mxu0 0.0
    %284 = vmatpush1.msra.mxu0 0.0
    %285 = vmatprep.subr.mxu0 0.0
    %286 = vmatpush1.msra.mxu0 0.0
    %287 = vmatprep.subr.mxu0 0.0
    %288 = vmatpush1.msra.mxu0 0.0
    %289 = vmatprep.subr.mxu0 0.0
    %290 = vmatpush1.msra.mxu0 0.0
    %291 = vmatprep.subr.mxu0 0.0
    %292 = vmatpush1.msra.mxu0 0.0
    %293 = vmatprep.subr.mxu0 0.0
    %294 = vmatpush1.msra.mxu0 0.0
    %295 = vmatprep.subr.mxu0 0.0
    %296 = vmatpush1.msra.mxu0 0.0
    %297 = vmatprep.subr.mxu0 0.0
    %298 = vmatpush1.msra.mxu0 0.0
    %299 = vmatprep.subr.mxu0 0.0
    %300 = vmatpush1.msra.mxu0 0.0
    %301 = vmatprep.subr.mxu0 0.0
    %302 = vmatpush1.msra.mxu0 0.0
    %303 = vmatprep.subr.mxu0 0.0
    %304 = vmatpush1.msra.mxu0 0.0
    %305 = vmatprep.subr.mxu0 0.0
    %306 = vmatpush1.msra.mxu0 0.0
    %307 = vmatprep.subr.mxu0 0.0
    %308 = vmatpush1.msra.mxu0 0.0
    %309 = vmatprep.subr.mxu0 0.0
    %310 = vmatpush1.msra.mxu0 0.0
    %311 = vmatprep.subr.mxu0 0.0
    %312 = vmatpush1.msra.mxu0 0.0
    %313 = vmatprep.subr.mxu0 0.0
    %314 = vmatpush1.msra.mxu0 0.0
    %315 = vmatprep.subr.mxu0 0.0
    %316 = vmatpush1.msra.mxu0 0.0
    %317 = vmatprep.subr.mxu0 0.0
    %318 = vmatpush1.msra.mxu0 0.0
    %319 = vmatprep.subr.mxu0 0.0
    %320 = vmatpush1.msra.mxu0 0.0
    %321 = vmatprep.subr.mxu0 0.0
    %322 = vmatpush1.msra.mxu0 0.0
    %323 = vmatprep.subr.mxu0 0.0
    %324 = vmatpush1.msra.mxu0 0.0
    %325 = vmatprep.subr.mxu0 0.0
    %326 = vmatpush1.msra.mxu0 0.0
    %327 = vmatprep.subr.mxu0 0.0
    %328 = vmatpush1.msra.mxu0 0.0
    %329 = vmatprep.subr.mxu0 0.0
    %330 = vmatpush1.msra.mxu0 0.0
    %331 = vmatprep.subr.mxu0 0.0
    %332 = vmatpush1.msra.mxu0 0.0
    %333 = vmatprep.subr.mxu0 0.0
    %334 = vmatpush1.msra.mxu0 0.0
    %335 = vmatprep.subr.mxu0 0.0
    %336 = vmatpush1.msra.mxu0 0.0
    %337 = vmatprep.mubr.f32.mxu0 0.0
    %338 = vmatmul.mubr.f32.gmra.mrb[0].mxu0 %v137
    %v339 = vpop.f32.mrb[0].mxu0
    %v340 = vadd.f32 0.0, %v339
    %v341 = vpop.f32.mrb[0].mxu0
    %v342 = vadd.f32 0.0, %v341
    %343 = vmatprep.mubr.f32.mxu0 0.0
    %344 = vmatmul.mubr.f32.gmra.mrb[0].mxu0 %v140
    %v345 = vpop.f32.mrb[0].mxu0
    %v346 = vadd.f32 0.0, %v345
    %v347 = vpop.f32.mrb[0].mxu0
    %v348 = vadd.f32 0.0, %v347
    %349 = vmatprep.mubr.f32.mxu0 0.0
    %350 = vmatmul.mubr.f32.gmra.mrb[0].mxu0 %v143
    %v351 = vpop.f32.mrb[0].mxu0
    %v352 = vadd.f32 0.0, %v351
    %v353 = vpop.f32.mrb[0].mxu0
    %v354 = vadd.f32 0.0, %v353
    %355 = vmatprep.mubr.f32.mxu0 0.0
    %356 = vmatmul.mubr.f32.gmra.mrb[0].mxu0 %v146
    %v357 = vpop.f32.mrb[0].mxu0
    %v358 = vadd.f32 0.0, %v357
    %v359 = vpop.f32.mrb[0].mxu0
    %v360 = vadd.f32 0.0, %v359
    %361 = vmatprep.mubr.f32.mxu0 0.0
    %362 = vmatmul.mubr.f32.gmra.mrb[0].mxu0 %v149
    %v363 = vpop.f32.mrb[0].mxu0
    %v364 = vadd.f32 0.0, %v363
    %v365 = vpop.f32.mrb[0].mxu0
    %v366 = vadd.f32 0.0, %v365
    %367 = vmatprep.mubr.f32.mxu0 0.0
    %368 = vmatmul.mubr.f32.gmra.mrb[0].mxu0 %v152
    %v369 = vpop.f32.mrb[0].mxu0
    %v370 = vadd.f32 0.0, %v369
    %v371 = vpop.f32.mrb[0].mxu0
    %v372 = vadd.f32 0.0, %v371
    %373 = vmatprep.mubr.f32.mxu0 0.0
    %374 = vmatmul.mubr.f32.gmra.mrb[0].mxu0 %v155
    %v375 = vpop.f32.mrb[0].mxu0
    %v376 = vadd.f32 0.0, %v375
    %v377 = vpop.f32.mrb[0].mxu0
    %v378 = vadd.f32 0.0, %v377
    %379 = vmatprep.mubr.f32.mxu0 0.0
    %380 = vmatmul.mubr.f32.gmra.mrb[0].mxu0 %v158
    %v381 = vpop.f32.mrb[0].mxu0
    %v382 = vadd.f32 0.0, %v381
    %v383 = vpop.f32.mrb[0].mxu0
    %v384 = vadd.f32 0.0, %v383
    %385 = vdwg.mxu0
    %v386 = vld [vmem:[%s5] sm:$0xf]
    %v388 = vlaneseq
    %v389 = vshrl.u32 %v388, 7
    %v390 = vsub.s32 0, %v389
    %v391 = vrot.slane %v386, %v390
    %v392 = vlaneseq
    %v393 = vshrl.u32 %v392, 7
    %v394 = vsub.s32 1, %v393
    %v395 = vrot.slane %v386, %v394
    %v396 = vlaneseq
    %v397 = vshrl.u32 %v396, 7
    %v398 = vsub.s32 2, %v397
    %v399 = vrot.slane %v386, %v398
    %v400 = vlaneseq
    %v401 = vshrl.u32 %v400, 7
    %v402 = vsub.s32 3, %v401
    %v403 = vrot.slane %v386, %v402
    %v408 = vadd.f32 %v227, %v391
    %v409 = vadd.f32 %v229, %v395
    %v410 = vadd.f32 %v340, %v399
    %v411 = vadd.f32 %v342, %v403
    %v412 = vadd.f32 %v233, %v391
    %v413 = vadd.f32 %v235, %v395
    %v414 = vadd.f32 %v346, %v399
    %v415 = vadd.f32 %v348, %v403
    %v416 = vadd.f32 %v239, %v391
    %v417 = vadd.f32 %v241, %v395
    %v418 = vadd.f32 %v352, %v399
    %v419 = vadd.f32 %v354, %v403
    %v420 = vadd.f32 %v245, %v391
    %v421 = vadd.f32 %v247, %v395
    %v422 = vadd.f32 %v358, %v399
    %v423 = vadd.f32 %v360, %v403
    %v424 = vadd.f32 %v251, %v391
    %v425 = vadd.f32 %v253, %v395
    %v426 = vadd.f32 %v364, %v399
    %v427 = vadd.f32 %v366, %v403
    %v428 = vadd.f32 %v257, %v391
    %v429 = vadd.f32 %v259, %v395
    %v430 = vadd.f32 %v370, %v399
    %v431 = vadd.f32 %v372, %v403
    %v432 = vadd.f32 %v263, %v391
    %v433 = vadd.f32 %v265, %v395
    %v434 = vadd.f32 %v376, %v399
    %v435 = vadd.f32 %v378, %v403
    %v436 = vadd.f32 %v269, %v391
    %v437 = vadd.f32 %v271, %v395
    %v438 = vadd.f32 %v382, %v399
    %v439 = vadd.f32 %v384, %v403
    %440 = vst [vmem:[#allocation4] sm:$0xff] %v408
    %441 = vst [vmem:[#allocation4 + $0x8] sm:$0xff] %v409
    %442 = vst [vmem:[#allocation4 + $0x10] sm:$0xff] %v410
    %443 = vst [vmem:[#allocation4 + $0x18] sm:$0xff] %v411
    %444 = vst [vmem:[#allocation4 + $0x20] sm:$0xff] %v412
    %445 = vst [vmem:[#allocation4 + $0x28] sm:$0xff] %v413
    %446 = vst [vmem:[#allocation4 + $0x30] sm:$0xff] %v414
    %447 = vst [vmem:[#allocation4 + $0x38] sm:$0xff] %v415
    %448 = vst [vmem:[#allocation4 + $0x40] sm:$0xff] %v416
    %449 = vst [vmem:[#allocation4 + $0x48] sm:$0xff] %v417
    %450 = vst [vmem:[#allocation4 + $0x50] sm:$0xff] %v418
    %451 = vst [vmem:[#allocation4 + $0x58] sm:$0xff] %v419
    %452 = vst [vmem:[#allocation4 + $0x60] sm:$0xff] %v420
    %453 = vst [vmem:[#allocation4 + $0x68] sm:$0xff] %v421
    %454 = vst [vmem:[#allocation4 + $0x70] sm:$0xff] %v422
    %455 = vst [vmem:[#allocation4 + $0x78] sm:$0xff] %v423
    %456 = vst [vmem:[#allocation4 + $0x80] sm:$0xff] %v424
    %457 = vst [vmem:[#allocation4 + $0x88] sm:$0xff] %v425
    %458 = vst [vmem:[#allocation4 + $0x90] sm:$0xff] %v426
    %459 = vst [vmem:[#allocation4 + $0x98] sm:$0xff] %v427
    %460 = vst [vmem:[#allocation4 + $0xa0] sm:$0xff] %v428
    %461 = vst [vmem:[#allocation4 + $0xa8] sm:$0xff] %v429
    %462 = vst [vmem:[#allocation4 + $0xb0] sm:$0xff] %v430
    %463 = vst [vmem:[#allocation4 + $0xb8] sm:$0xff] %v431
    %464 = vst [vmem:[#allocation4 + $0xc0] sm:$0xff] %v432
    %465 = vst [vmem:[#allocation4 + $0xc8] sm:$0xff] %v433
    %466 = vst [vmem:[#allocation4 + $0xd0] sm:$0xff] %v434
    %467 = vst [vmem:[#allocation4 + $0xd8] sm:$0xff] %v435
    %468 = vst [vmem:[#allocation4 + $0xe0] sm:$0xff] %v436
    %469 = vst [vmem:[#allocation4 + $0xe8] sm:$0xff] %v437
    %470 = vst [vmem:[#allocation4 + $0xf0] sm:$0xff] %v438
    %471 = vst [vmem:[#allocation4 + $0xf8] sm:$0xff] %v439
    // Predicated region
    $region58: #{tpu_custom_call.1} parent=1 // pred_check
      %p472 = pneg %p60
    $region59: #{tpu_custom_call.1} parent=1 // pred_check_branch
      %474 = sbr.rel (%p472) target = $region61
    $region60: #{tpu_custom_call.1} parent=1 // pred_region
      %s475 = scalar_lea.sflag [#allocation10], 2
      %s476 = smul.u32 8, 16
      %s477 = smul.u32 %s476, 4
      %s478 = sshll.u32 %s477, 4
      %479 = dma.done %s475, %s478
    $region61: #{tpu_custom_call.1} parent=1 // pred_fallthru
      _
    %v480 = vld [vmem:[#allocation2] sm:$0xff]
    %v481 = vld [vmem:[#allocation3] sm:$0xff]
    %v482 = vld [vmem:[#allocation4] sm:$0xff]
    %v483 = vld [vmem:[#allocation4 + $0x8] sm:$0xff]
    %v484 = vld [vmem:[#allocation4 + $0x10] sm:$0xff]
    %v485 = vld [vmem:[#allocation4 + $0x18] sm:$0xff]
    %v486 = vld [vmem:[#allocation8] sm:$0xff]
    %v487 = vld [vmem:[#allocation8 + $0x8] sm:$0xff]
    %v488 = vld [vmem:[#allocation8 + $0x10] sm:$0xff]
    %v489 = vld [vmem:[#allocation8 + $0x18] sm:$0xff]
    %v490 = vld [vmem:[#allocation8 + $0x20] sm:$0xff]
    %v491 = vld [vmem:[#allocation8 + $0x28] sm:$0xff]
    %v492 = vld [vmem:[#allocation8 + $0x30] sm:$0xff]
    %v493 = vld [vmem:[#allocation8 + $0x38] sm:$0xff]
    %v494 = vld [vmem:[#allocation8 + $0x40] sm:$0xff]
    %v495 = vld [vmem:[#allocation8 + $0x48] sm:$0xff]
    %v496 = vld [vmem:[#allocation8 + $0x50] sm:$0xff]
    %v497 = vld [vmem:[#allocation8 + $0x58] sm:$0xff]
    %v498 = vld [vmem:[#allocation8 + $0x60] sm:$0xff]
    %v499 = vld [vmem:[#allocation8 + $0x68] sm:$0xff]
    %v500 = vld [vmem:[#allocation8 + $0x70] sm:$0xff]
    %v501 = vld [vmem:[#allocation8 + $0x78] sm:$0xff]
    %v502 = vld [vmem:[#allocation8 + $0x80] sm:$0xff]
    %v503 = vld [vmem:[#allocation8 + $0x88] sm:$0xff]
    %v504 = vld [vmem:[#allocation8 + $0x90] sm:$0xff]
    %v505 = vld [vmem:[#allocation8 + $0x98] sm:$0xff]
    %v506 = vld [vmem:[#allocation8 + $0xa0] sm:$0xff]
    %v507 = vld [vmem:[#allocation8 + $0xa8] sm:$0xff]
    %v508 = vld [vmem:[#allocation8 + $0xb0] sm:$0xff]
    %v509 = vld [vmem:[#allocation8 + $0xb8] sm:$0xff]
    %v510 = vld [vmem:[#allocation8 + $0xc0] sm:$0xff]
    %v511 = vld [vmem:[#allocation8 + $0xc8] sm:$0xff]
    %v512 = vld [vmem:[#allocation8 + $0xd0] sm:$0xff]
    %v513 = vld [vmem:[#allocation8 + $0xd8] sm:$0xff]
    %v514 = vld [vmem:[#allocation8 + $0xe0] sm:$0xff]
    %v515 = vld [vmem:[#allocation8 + $0xe8] sm:$0xff]
    %v516 = vld [vmem:[#allocation8 + $0xf0] sm:$0xff]
    %v517 = vld [vmem:[#allocation8 + $0xf8] sm:$0xff]
    %v518 = vld [vmem:[#allocation8 + $0x100] sm:$0xff]
    %v519 = vld [vmem:[#allocation8 + $0x108] sm:$0xff]
    %v520 = vld [vmem:[#allocation8 + $0x110] sm:$0xff]
    %v521 = vld [vmem:[#allocation8 + $0x118] sm:$0xff]
    %v522 = vld [vmem:[#allocation8 + $0x120] sm:$0xff]
    %v523 = vld [vmem:[#allocation8 + $0x128] sm:$0xff]
    %v524 = vld [vmem:[#allocation8 + $0x130] sm:$0xff]
    %v525 = vld [vmem:[#allocation8 + $0x138] sm:$0xff]
    %v526 = vld [vmem:[#allocation8 + $0x140] sm:$0xff]
    %v527 = vld [vmem:[#allocation8 + $0x148] sm:$0xff]
    %v528 = vld [vmem:[#allocation8 + $0x150] sm:$0xff]
    %v529 = vld [vmem:[#allocation8 + $0x158] sm:$0xff]
    %v530 = vld [vmem:[#allocation8 + $0x160] sm:$0xff]
    %v531 = vld [vmem:[#allocation8 + $0x168] sm:$0xff]
    %v532 = vld [vmem:[#allocation8 + $0x170] sm:$0xff]
    %v533 = vld [vmem:[#allocation8 + $0x178] sm:$0xff]
    %v534 = vld [vmem:[#allocation8 + $0x180] sm:$0xff]
    %v535 = vld [vmem:[#allocation8 + $0x188] sm:$0xff]
    %v536 = vld [vmem:[#allocation8 + $0x190] sm:$0xff]
    %v537 = vld [vmem:[#allocation8 + $0x198] sm:$0xff]
    %v538 = vld [vmem:[#allocation8 + $0x1a0] sm:$0xff]
    %v539 = vld [vmem:[#allocation8 + $0x1a8] sm:$0xff]
    %v540 = vld [vmem:[#allocation8 + $0x1b0] sm:$0xff]
    %v541 = vld [vmem:[#allocation8 + $0x1b8] sm:$0xff]
    %v542 = vld [vmem:[#allocation8 + $0x1c0] sm:$0xff]
    %v543 = vld [vmem:[#allocation8 + $0x1c8] sm:$0xff]
    %v544 = vld [vmem:[#allocation8 + $0x1d0] sm:$0xff]
    %v545 = vld [vmem:[#allocation8 + $0x1d8] sm:$0xff]
    %v546 = vld [vmem:[#allocation8 + $0x1e0] sm:$0xff]
    %v547 = vld [vmem:[#allocation8 + $0x1e8] sm:$0xff]
    %v548 = vld [vmem:[#allocation8 + $0x1f0] sm:$0xff]
    %v549 = vld [vmem:[#allocation8 + $0x1f8] sm:$0xff]
    %550 = vmatprep.subr.mxu0 %v487
    %551 = vmatpush1.msra.mxu0 %v486
    %552 = vmatprep.subr.mxu0 %v491
    %553 = vmatpush1.msra.mxu0 %v490
    %554 = vmatprep.subr.mxu0 %v495
    %555 = vmatpush1.msra.mxu0 %v494
    %556 = vmatprep.subr.mxu0 %v499
    %557 = vmatpush1.msra.mxu0 %v498
    %558 = vmatprep.subr.mxu0 %v503
    %559 = vmatpush1.msra.mxu0 %v502
    %560 = vmatprep.subr.mxu0 %v507
    %561 = vmatpush1.msra.mxu0 %v506
    %562 = vmatprep.subr.mxu0 %v511
    %563 = vmatpush1.msra.mxu0 %v510
    %564 = vmatprep.subr.mxu0 %v515
    %565 = vmatpush1.msra.mxu0 %v514
    %566 = vmatprep.subr.mxu0 %v519
    %567 = vmatpush1.msra.mxu0 %v518
    %568 = vmatprep.subr.mxu0 %v523
    %569 = vmatpush1.msra.mxu0 %v522
    %570 = vmatprep.subr.mxu0 %v527
    %571 = vmatpush1.msra.mxu0 %v526
    %572 = vmatprep.subr.mxu0 %v531
    %573 = vmatpush1.msra.mxu0 %v530
    %574 = vmatprep.subr.mxu0 %v535
    %575 = vmatpush1.msra.mxu0 %v534
    %576 = vmatprep.subr.mxu0 %v539
    %577 = vmatpush1.msra.mxu0 %v538
    %578 = vmatprep.subr.mxu0 %v543
    %579 = vmatpush1.msra.mxu0 %v542
    %580 = vmatprep.subr.mxu0 %v547
    %581 = vmatpush1.msra.mxu0 %v546
    %582 = vmatprep.subr.mxu0 0.0
    %583 = vmatpush1.msra.mxu0 0.0
    %584 = vmatprep.subr.mxu0 0.0
    %585 = vmatpush1.msra.mxu0 0.0
    %586 = vmatprep.subr.mxu0 0.0
    %587 = vmatpush1.msra.mxu0 0.0
    %588 = vmatprep.subr.mxu0 0.0
    %589 = vmatpush1.msra.mxu0 0.0
    %590 = vmatprep.subr.mxu0 0.0
    %591 = vmatpush1.msra.mxu0 0.0
    %592 = vmatprep.subr.mxu0 0.0
    %593 = vmatpush1.msra.mxu0 0.0
    %594 = vmatprep.subr.mxu0 0.0
    %595 = vmatpush1.msra.mxu0 0.0
    %596 = vmatprep.subr.mxu0 0.0
    %597 = vmatpush1.msra.mxu0 0.0
    %598 = vmatprep.subr.mxu0 0.0
    %599 = vmatpush1.msra.mxu0 0.0
    %600 = vmatprep.subr.mxu0 0.0
    %601 = vmatpush1.msra.mxu0 0.0
    %602 = vmatprep.subr.mxu0 0.0
    %603 = vmatpush1.msra.mxu0 0.0
    %604 = vmatprep.subr.mxu0 0.0
    %605 = vmatpush1.msra.mxu0 0.0
    %606 = vmatprep.subr.mxu0 0.0
    %607 = vmatpush1.msra.mxu0 0.0
    %608 = vmatprep.subr.mxu0 0.0
    %609 = vmatpush1.msra.mxu0 0.0
    %610 = vmatprep.subr.mxu0 0.0
    %611 = vmatpush1.msra.mxu0 0.0
    %612 = vmatprep.subr.mxu0 0.0
    %613 = vmatpush1.msra.mxu0 0.0
    %614 = vmatprep.mubr.f32.mxu0 0.0
    %615 = vmatmul.mubr.f32.gmra.mrb[0].mxu0 %v480
    %v616 = vpop.f32.mrb[0].mxu0
    %v617 = vadd.f32 0.0, %v616
    %v618 = vpop.f32.mrb[0].mxu0
    %v619 = vadd.f32 0.0, %v618
    %620 = vdwg.mxu0
    %621 = vmatprep.subr.mxu0 %v489
    %622 = vmatpush1.msra.mxu0 %v488
    %623 = vmatprep.subr.mxu0 %v493
    %624 = vmatpush1.msra.mxu0 %v492
    %625 = vmatprep.subr.mxu0 %v497
    %626 = vmatpush1.msra.mxu0 %v496
    %627 = vmatprep.subr.mxu0 %v501
    %628 = vmatpush1.msra.mxu0 %v500
    %629 = vmatprep.subr.mxu0 %v505
    %630 = vmatpush1.msra.mxu0 %v504
    %631 = vmatprep.subr.mxu0 %v509
    %632 = vmatpush1.msra.mxu0 %v508
    %633 = vmatprep.subr.mxu0 %v513
    %634 = vmatpush1.msra.mxu0 %v512
    %635 = vmatprep.subr.mxu0 %v517
    %636 = vmatpush1.msra.mxu0 %v516
    %637 = vmatprep.subr.mxu0 %v521
    %638 = vmatpush1.msra.mxu0 %v520
    %639 = vmatprep.subr.mxu0 %v525
    %640 = vmatpush1.msra.mxu0 %v524
    %641 = vmatprep.subr.mxu0 %v529
    %642 = vmatpush1.msra.mxu0 %v528
    %643 = vmatprep.subr.mxu0 %v533
    %644 = vmatpush1.msra.mxu0 %v532
    %645 = vmatprep.subr.mxu0 %v537
    %646 = vmatpush1.msra.mxu0 %v536
    %647 = vmatprep.subr.mxu0 %v541
    %648 = vmatpush1.msra.mxu0 %v540
    %649 = vmatprep.subr.mxu0 %v545
    %650 = vmatpush1.msra.mxu0 %v544
    %651 = vmatprep.subr.mxu0 %v549
    %652 = vmatpush1.msra.mxu0 %v548
    %653 = vmatprep.subr.mxu0 0.0
    %654 = vmatpush1.msra.mxu0 0.0
    %655 = vmatprep.subr.mxu0 0.0
    %656 = vmatpush1.msra.mxu0 0.0
    %657 = vmatprep.subr.mxu0 0.0
    %658 = vmatpush1.msra.mxu0 0.0
    %659 = vmatprep.subr.mxu0 0.0
    %660 = vmatpush1.msra.mxu0 0.0
    %661 = vmatprep.subr.mxu0 0.0
    %662 = vmatpush1.msra.mxu0 0.0
    %663 = vmatprep.subr.mxu0 0.0
    %664 = vmatpush1.msra.mxu0 0.0
    %665 = vmatprep.subr.mxu0 0.0
    %666 = vmatpush1.msra.mxu0 0.0
    %667 = vmatprep.subr.mxu0 0.0
    %668 = vmatpush1.msra.mxu0 0.0
    %669 = vmatprep.subr.mxu0 0.0
    %670 = vmatpush1.msra.mxu0 0.0
    %671 = vmatprep.subr.mxu0 0.0
    %672 = vmatpush1.msra.mxu0 0.0
    %673 = vmatprep.subr.mxu0 0.0
    %674 = vmatpush1.msra.mxu0 0.0
    %675 = vmatprep.subr.mxu0 0.0
    %676 = vmatpush1.msra.mxu0 0.0
    %677 = vmatprep.subr.mxu0 0.0
    %678 = vmatpush1.msra.mxu0 0.0
    %679 = vmatprep.subr.mxu0 0.0
    %680 = vmatpush1.msra.mxu0 0.0
    %681 = vmatprep.subr.mxu0 0.0
    %682 = vmatpush1.msra.mxu0 0.0
    %683 = vmatprep.subr.mxu0 0.0
    %684 = vmatpush1.msra.mxu0 0.0
    %685 = vmatprep.mubr.f32.mxu0 0.0
    %686 = vmatmul.mubr.f32.gmra.mrb[0].mxu0 %v480
    %v687 = vpop.f32.mrb[0].mxu0
    %v688 = vadd.f32 0.0, %v687
    %v689 = vpop.f32.mrb[0].mxu0
    %v690 = vadd.f32 0.0, %v689
    %691 = vdwg.mxu0
    %v692 = vadd.f32 %v482, %v617
    %v693 = vadd.f32 %v483, %v619
    %v694 = vadd.f32 %v484, %v688
    %v695 = vadd.f32 %v485, %v690
    %v696 = vxor.u32 %v692, 2147483648
    %v697 = vmul.f32 %v696, 1.442695
    %v698 = vpow.pop %v697
    %v699 = vadd.f32 %v698, 1.0
    %v700 = vrcp.pop %v699
    %v701 = vmul.f32 1.0, %v700
    %v702 = vxor.u32 %v693, 2147483648
    %v703 = vmul.f32 %v702, 1.442695
    %v704 = vpow.pop %v703
    %v705 = vadd.f32 %v704, 1.0
    %v706 = vrcp.pop %v705
    %v707 = vmul.f32 1.0, %v706
    %v708 = vtanh.pop %v694
    %v709 = vxor.u32 %v695, 2147483648
    %v710 = vmul.f32 %v709, 1.442695
    %v711 = vpow.pop %v710
    %v712 = vadd.f32 %v711, 1.0
    %v713 = vrcp.pop %v712
    %v714 = vmul.f32 1.0, %v713
    %v715 = vmul.f32 %v707, %v481
    %v716 = vmul.f32 %v701, %v708
    %v717 = vadd.f32 %v715, %v716
    %v718 = vtanh.pop %v717
    %v719 = vmul.f32 %v714, %v718
    %720 = vst [vmem:[#allocation5] sm:$0xff] %v719
    %s721 = scalar_lea.vmem [#allocation4], 32
    %v722 = vld [vmem:[%s721] sm:$0xff]
    %v723 = vld [vmem:[%s721 + $0x8] sm:$0xff]
    %v724 = vld [vmem:[%s721 + $0x10] sm:$0xff]
    %v725 = vld [vmem:[%s721 + $0x18] sm:$0xff]
    %v726 = vld [vmem:[#allocation8] sm:$0xff]
    %v727 = vld [vmem:[#allocation8 + $0x8] sm:$0xff]
    %v728 = vld [vmem:[#allocation8 + $0x10] sm:$0xff]
    %v729 = vld [vmem:[#allocation8 + $0x18] sm:$0xff]
    %v730 = vld [vmem:[#allocation8 + $0x20] sm:$0xff]
    %v731 = vld [vmem:[#allocation8 + $0x28] sm:$0xff]
    %v732 = vld [vmem:[#allocation8 + $0x30] sm:$0xff]
    %v733 = vld [vmem:[#allocation8 + $0x38] sm:$0xff]
    %v734 = vld [vmem:[#allocation8 + $0x40] sm:$0xff]
    %v735 = vld [vmem:[#allocation8 + $0x48] sm:$0xff]
    %v736 = vld [vmem:[#allocation8 + $0x50] sm:$0xff]
    %v737 = vld [vmem:[#allocation8 + $0x58] sm:$0xff]
    %v738 = vld [vmem:[#allocation8 + $0x60] sm:$0xff]
    %v739 = vld [vmem:[#allocation8 + $0x68] sm:$0xff]
    %v740 = vld [vmem:[#allocation8 + $0x70] sm:$0xff]
    %v741 = vld [vmem:[#allocation8 + $0x78] sm:$0xff]
    %v742 = vld [vmem:[#allocation8 + $0x80] sm:$0xff]
    %v743 = vld [vmem:[#allocation8 + $0x88] sm:$0xff]
    %v744 = vld [vmem:[#allocation8 + $0x90] sm:$0xff]
    %v745 = vld [vmem:[#allocation8 + $0x98] sm:$0xff]
    %v746 = vld [vmem:[#allocation8 + $0xa0] sm:$0xff]
    %v747 = vld [vmem:[#allocation8 + $0xa8] sm:$0xff]
    %v748 = vld [vmem:[#allocation8 + $0xb0] sm:$0xff]
    %v749 = vld [vmem:[#allocation8 + $0xb8] sm:$0xff]
    %v750 = vld [vmem:[#allocation8 + $0xc0] sm:$0xff]
    %v751 = vld [vmem:[#allocation8 + $0xc8] sm:$0xff]
    %v752 = vld [vmem:[#allocation8 + $0xd0] sm:$0xff]
    %v753 = vld [vmem:[#allocation8 + $0xd8] sm:$0xff]
    %v754 = vld [vmem:[#allocation8 + $0xe0] sm:$0xff]
    %v755 = vld [vmem:[#allocation8 + $0xe8] sm:$0xff]
    %v756 = vld [vmem:[#allocation8 + $0xf0] sm:$0xff]
    %v757 = vld [vmem:[#allocation8 + $0xf8] sm:$0xff]
    %v758 = vld [vmem:[#allocation8 + $0x100] sm:$0xff]
    %v759 = vld [vmem:[#allocation8 + $0x108] sm:$0xff]
    %v760 = vld [vmem:[#allocation8 + $0x110] sm:$0xff]
    %v761 = vld [vmem:[#allocation8 + $0x118] sm:$0xff]
    %v762 = vld [vmem:[#allocation8 + $0x120] sm:$0xff]
    %v763 = vld [vmem:[#allocation8 + $0x128] sm:$0xff]
    %v764 = vld [vmem:[#allocation8 + $0x130] sm:$0xff]
    %v765 = vld [vmem:[#allocation8 + $0x138] sm:$0xff]
    %v766 = vld [vmem:[#allocation8 + $0x140] sm:$0xff]
    %v767 = vld [vmem:[#allocation8 + $0x148] sm:$0xff]
    %v768 = vld [vmem:[#allocation8 + $0x150] sm:$0xff]
    %v769 = vld [vmem:[#allocation8 + $0x158] sm:$0xff]
    %v770 = vld [vmem:[#allocation8 + $0x160] sm:$0xff]
    %v771 = vld [vmem:[#allocation8 + $0x168] sm:$0xff]
    %v772 = vld [vmem:[#allocation8 + $0x170] sm:$0xff]
    %v773 = vld [vmem:[#allocation8 + $0x178] sm:$0xff]
    %v774 = vld [vmem:[#allocation8 + $0x180] sm:$0xff]
    %v775 = vld [vmem:[#allocation8 + $0x188] sm:$0xff]
    %v776 = vld [vmem:[#allocation8 + $0x190] sm:$0xff]
    %v777 = vld [vmem:[#allocation8 + $0x198] sm:$0xff]
    %v778 = vld [vmem:[#allocation8 + $0x1a0] sm:$0xff]
    %v779 = vld [vmem:[#allocation8 + $0x1a8] sm:$0xff]
    %v780 = vld [vmem:[#allocation8 + $0x1b0] sm:$0xff]
    %v781 = vld [vmem:[#allocation8 + $0x1b8] sm:$0xff]
    %v782 = vld [vmem:[#allocation8 + $0x1c0] sm:$0xff]
    %v783 = vld [vmem:[#allocation8 + $0x1c8] sm:$0xff]
    %v784 = vld [vmem:[#allocation8 + $0x1d0] sm:$0xff]
    %v785 = vld [vmem:[#allocation8 + $0x1d8] sm:$0xff]
    %v786 = vld [vmem:[#allocation8 + $0x1e0] sm:$0xff]
    %v787 = vld [vmem:[#allocation8 + $0x1e8] sm:$0xff]
    %v788 = vld [vmem:[#allocation8 + $0x1f0] sm:$0xff]
    %v789 = vld [vmem:[#allocation8 + $0x1f8] sm:$0xff]
    %790 = vmatprep.subr.mxu0 %v727
    %791 = vmatpush1.msra.mxu0 %v726
    %792 = vmatprep.subr.mxu0 %v731
    %793 = vmatpush1.msra.mxu0 %v730
    %794 = vmatprep.subr.mxu0 %v735
    %795 = vmatpush1.msra.mxu0 %v734
    %796 = vmatprep.subr.mxu0 %v739
    %797 = vmatpush1.msra.mxu0 %v738
    %798 = vmatprep.subr.mxu0 %v743
    %799 = vmatpush1.msra.mxu0 %v742
    %800 = vmatprep.subr.mxu0 %v747
    %801 = vmatpush1.msra.mxu0 %v746
    %802 = vmatprep.subr.mxu0 %v751
    %803 = vmatpush1.msra.mxu0 %v750
    %804 = vmatprep.subr.mxu0 %v755
    %805 = vmatpush1.msra.mxu0 %v754
    %806 = vmatprep.subr.mxu0 %v759
    %807 = vmatpush1.msra.mxu0 %v758
    %808 = vmatprep.subr.mxu0 %v763
    %809 = vmatpush1.msra.mxu0 %v762
    %810 = vmatprep.subr.mxu0 %v767
    %811 = vmatpush1.msra.mxu0 %v766
    %812 = vmatprep.subr.mxu0 %v771
    %813 = vmatpush1.msra.mxu0 %v770
    %814 = vmatprep.subr.mxu0 %v775
    %815 = vmatpush1.msra.mxu0 %v774
    %816 = vmatprep.subr.mxu0 %v779
    %817 = vmatpush1.msra.mxu0 %v778
    %818 = vmatprep.subr.mxu0 %v783
    %819 = vmatpush1.msra.mxu0 %v782
    %820 = vmatprep.subr.mxu0 %v787
    %821 = vmatpush1.msra.mxu0 %v786
    %822 = vmatprep.subr.mxu0 0.0
    %823 = vmatpush1.msra.mxu0 0.0
    %824 = vmatprep.subr.mxu0 0.0
    %825 = vmatpush1.msra.mxu0 0.0
    %826 = vmatprep.subr.mxu0 0.0
    %827 = vmatpush1.msra.mxu0 0.0
    %828 = vmatprep.subr.mxu0 0.0
    %829 = vmatpush1.msra.mxu0 0.0
    %830 = vmatprep.subr.mxu0 0.0
    %831 = vmatpush1.msra.mxu0 0.0
    %832 = vmatprep.subr.mxu0 0.0
    %833 = vmatpush1.msra.mxu0 0.0
    %834 = vmatprep.subr.mxu0 0.0
    %835 = vmatpush1.msra.mxu0 0.0
    %836 = vmatprep.subr.mxu0 0.0
    %837 = vmatpush1.msra.mxu0 0.0
    %838 = vmatprep.subr.mxu0 0.0
    %839 = vmatpush1.msra.mxu0 0.0
    %840 = vmatprep.subr.mxu0 0.0
    %841 = vmatpush1.msra.mxu0 0.0
    %842 = vmatprep.subr.mxu0 0.0
    %843 = vmatpush1.msra.mxu0 0.0
    %844 = vmatprep.subr.mxu0 0.0
    %845 = vmatpush1.msra.mxu0 0.0
    %846 = vmatprep.subr.mxu0 0.0
    %847 = vmatpush1.msra.mxu0 0.0
    %848 = vmatprep.subr.mxu0 0.0
    %849 = vmatpush1.msra.mxu0 0.0
    %850 = vmatprep.subr.mxu0 0.0
    %851 = vmatpush1.msra.mxu0 0.0
    %852 = vmatprep.subr.mxu0 0.0
    %853 = vmatpush1.msra.mxu0 0.0
    %854 = vmatprep.mubr.f32.mxu0 0.0
    %855 = vmatmul.mubr.f32.gmra.mrb[0].mxu0 %v719
    %v856 = vpop.f32.mrb[0].mxu0
    %v857 = vadd.f32 0.0, %v856
    %v858 = vpop.f32.mrb[0].mxu0
    %v859 = vadd.f32 0.0, %v858
    %860 = vdwg.mxu0
    %861 = vmatprep.subr.mxu0 %v729
    %862 = vmatpush1.msra.mxu0 %v728
    %863 = vmatprep.subr.mxu0 %v733
    %864 = vmatpush1.msra.mxu0 %v732
    %865 = vmatprep.subr.mxu0 %v737
    %866 = vmatpush1.msra.mxu0 %v736
    %867 = vmatprep.subr.mxu0 %v741
    %868 = vmatpush1.msra.mxu0 %v740
    %869 = vmatprep.subr.mxu0 %v745
    %870 = vmatpush1.msra.mxu0 %v744
    %871 = vmatprep.subr.mxu0 %v749
    %872 = vmatpush1.msra.mxu0 %v748
    %873 = vmatprep.subr.mxu0 %v753
    %874 = vmatpush1.msra.mxu0 %v752
    %875 = vmatprep.subr.mxu0 %v757
    %876 = vmatpush1.msra.mxu0 %v756
    %877 = vmatprep.subr.mxu0 %v761
    %878 = vmatpush1.msra.mxu0 %v760
    %879 = vmatprep.subr.mxu0 %v765
    %880 = vmatpush1.msra.mxu0 %v764
    %881 = vmatprep.subr.mxu0 %v769
    %882 = vmatpush1.msra.mxu0 %v768
    %883 = vmatprep.subr.mxu0 %v773
    %884 = vmatpush1.msra.mxu0 %v772
    %885 = vmatprep.subr.mxu0 %v777
    %886 = vmatpush1.msra.mxu0 %v776
    %887 = vmatprep.subr.mxu0 %v781
    %888 = vmatpush1.msra.mxu0 %v780
    %889 = vmatprep.subr.mxu0 %v785
    %890 = vmatpush1.msra.mxu0 %v784
    %891 = vmatprep.subr.mxu0 %v789
    %892 = vmatpush1.msra.mxu0 %v788
    %893 = vmatprep.subr.mxu0 0.0
    %894 = vmatpush1.msra.mxu0 0.0
    %895 = vmatprep.subr.mxu0 0.0
    %896 = vmatpush1.msra.mxu0 0.0
    %897 = vmatprep.subr.mxu0 0.0
    %898 = vmatpush1.msra.mxu0 0.0
    %899 = vmatprep.subr.mxu0 0.0
    %900 = vmatpush1.msra.mxu0 0.0
    %901 = vmatprep.subr.mxu0 0.0
    %902 = vmatpush1.msra.mxu0 0.0
    %903 = vmatprep.subr.mxu0 0.0
    %904 = vmatpush1.msra.mxu0 0.0
    %905 = vmatprep.subr.mxu0 0.0
    %906 = vmatpush1.msra.mxu0 0.0
    %907 = vmatprep.subr.mxu0 0.0
    %908 = vmatpush1.msra.mxu0 0.0
    %909 = vmatprep.subr.mxu0 0.0
    %910 = vmatpush1.msra.mxu0 0.0
    %911 = vmatprep.subr.mxu0 0.0
    %912 = vmatpush1.msra.mxu0 0.0
    %913 = vmatprep.subr.mxu0 0.0
    %914 = vmatpush1.msra.mxu0 0.0
    %915 = vmatprep.subr.mxu0 0.0
    %916 = vmatpush1.msra.mxu0 0.0
    %917 = vmatprep.subr.mxu0 0.0
    %918 = vmatpush1.msra.mxu0 0.0
    %919 = vmatprep.subr.mxu0 0.0
    %920 = vmatpush1.msra.mxu0 0.0
    %921 = vmatprep.subr.mxu0 0.0
    %922 = vmatpush1.msra.mxu0 0.0
    %923 = vmatprep.subr.mxu0 0.0
    %924 = vmatpush1.msra.mxu0 0.0
    %925 = vmatprep.mubr.f32.mxu0 0.0
    %926 = vmatmul.mubr.f32.gmra.mrb[0].mxu0 %v719
    %v927 = vpop.f32.mrb[0].mxu0
    %v928 = vadd.f32 0.0, %v927
    %v929 = vpop.f32.mrb[0].mxu0
    %v930 = vadd.f32 0.0, %v929
    %931 = vdwg.mxu0
    %v932 = vadd.f32 %v722, %v857
    %v933 = vadd.f32 %v723, %v859
    %v934 = vadd.f32 %v724, %v928
    %v935 = vadd.f32 %v725, %v930
    %v936 = vxor.u32 %v932, 2147483648
    %v937 = vmul.f32 %v936, 1.442695
    %v938 = vpow.pop %v937
    %v939 = vadd.f32 %v938, 1.0
    %v940 = vrcp.pop %v939
    %v941 = vmul.f32 1.0, %v940
    %v942 = vxor.u32 %v933, 2147483648
    %v943 = vmul.f32 %v942, 1.442695
    %v944 = vpow.pop %v943
    %v945 = vadd.f32 %v944, 1.0
    %v946 = vrcp.pop %v945
    %v947 = vmul.f32 1.0, %v946
    %v948 = vtanh.pop %v934
    %v949 = vxor.u32 %v935, 2147483648
    %v950 = vmul.f32 %v949, 1.442695
    %v951 = vpow.pop %v950
    %v952 = vadd.f32 %v951, 1.0
    %v953 = vrcp.pop %v952
    %v954 = vmul.f32 1.0, %v953
    %v955 = vmul.f32 %v947, %v717
    %v956 = vmul.f32 %v941, %v948
    %v957 = vadd.f32 %v955, %v956
    %v958 = vtanh.pop %v957
    %v959 = vmul.f32 %v954, %v958
    %s960 = scalar_lea.vmem [#allocation5], 8
    %961 = vst [vmem:[%s960] sm:$0xff] %v959
    %s962 = scalar_lea.vmem [#allocation4], 64
    %v963 = vld [vmem:[%s962] sm:$0xff]
    %v964 = vld [vmem:[%s962 + $0x8] sm:$0xff]
    %v965 = vld [vmem:[%s962 + $0x10] sm:$0xff]
    %v966 = vld [vmem:[%s962 + $0x18] sm:$0xff]
    %v967 = vld [vmem:[#allocation8] sm:$0xff]
    %v968 = vld [vmem:[#allocation8 + $0x8] sm:$0xff]
    %v969 = vld [vmem:[#allocation8 + $0x10] sm:$0xff]
    %v970 = vld [vmem:[#allocation8 + $0x18] sm:$0xff]
    %v971 = vld [vmem:[#allocation8 + $0x20] sm:$0xff]
    %v972 = vld [vmem:[#allocation8 + $0x28] sm:$0xff]
    %v973 = vld [vmem:[#allocation8 + $0x30] sm:$0xff]
    %v974 = vld [vmem:[#allocation8 + $0x38] sm:$0xff]
    %v975 = vld [vmem:[#allocation8 + $0x40] sm:$0xff]
    %v976 = vld [vmem:[#allocation8 + $0x48] sm:$0xff]
    %v977 = vld [vmem:[#allocation8 + $0x50] sm:$0xff]
    %v978 = vld [vmem:[#allocation8 + $0x58] sm:$0xff]
    %v979 = vld [vmem:[#allocation8 + $0x60] sm:$0xff]
    %v980 = vld [vmem:[#allocation8 + $0x68] sm:$0xff]
    %v981 = vld [vmem:[#allocation8 + $0x70] sm:$0xff]
    %v982 = vld [vmem:[#allocation8 + $0x78] sm:$0xff]
    %v983 = vld [vmem:[#allocation8 + $0x80] sm:$0xff]
    %v984 = vld [vmem:[#allocation8 + $0x88] sm:$0xff]
    %v985 = vld [vmem:[#allocation8 + $0x90] sm:$0xff]
    %v986 = vld [vmem:[#allocation8 + $0x98] sm:$0xff]
    %v987 = vld [vmem:[#allocation8 + $0xa0] sm:$0xff]
    %v988 = vld [vmem:[#allocation8 + $0xa8] sm:$0xff]
    %v989 = vld [vmem:[#allocation8 + $0xb0] sm:$0xff]
    %v990 = vld [vmem:[#allocation8 + $0xb8] sm:$0xff]
    %v991 = vld [vmem:[#allocation8 + $0xc0] sm:$0xff]
    %v992 = vld [vmem:[#allocation8 + $0xc8] sm:$0xff]
    %v993 = vld [vmem:[#allocation8 + $0xd0] sm:$0xff]
    %v994 = vld [vmem:[#allocation8 + $0xd8] sm:$0xff]
    %v995 = vld [vmem:[#allocation8 + $0xe0] sm:$0xff]
    %v996 = vld [vmem:[#allocation8 + $0xe8] sm:$0xff]
    %v997 = vld [vmem:[#allocation8 + $0xf0] sm:$0xff]
    %v998 = vld [vmem:[#allocation8 + $0xf8] sm:$0xff]
    %v999 = vld [vmem:[#allocation8 + $0x100] sm:$0xff]
    %v1000 = vld [vmem:[#allocation8 + $0x108] sm:$0xff]
    %v1001 = vld [vmem:[#allocation8 + $0x110] sm:$0xff]
    %v1002 = vld [vmem:[#allocation8 + $0x118] sm:$0xff]
    %v1003 = vld [vmem:[#allocation8 + $0x120] sm:$0xff]
    %v1004 = vld [vmem:[#allocation8 + $0x128] sm:$0xff]
    %v1005 = vld [vmem:[#allocation8 + $0x130] sm:$0xff]
    %v1006 = vld [vmem:[#allocation8 + $0x138] sm:$0xff]
    %v1007 = vld [vmem:[#allocation8 + $0x140] sm:$0xff]
    %v1008 = vld [vmem:[#allocation8 + $0x148] sm:$0xff]
    %v1009 = vld [vmem:[#allocation8 + $0x150] sm:$0xff]
    %v1010 = vld [vmem:[#allocation8 + $0x158] sm:$0xff]
    %v1011 = vld [vmem:[#allocation8 + $0x160] sm:$0xff]
    %v1012 = vld [vmem:[#allocation8 + $0x168] sm:$0xff]
    %v1013 = vld [vmem:[#allocation8 + $0x170] sm:$0xff]
    %v1014 = vld [vmem:[#allocation8 + $0x178] sm:$0xff]
    %v1015 = vld [vmem:[#allocation8 + $0x180] sm:$0xff]
    %v1016 = vld [vmem:[#allocation8 + $0x188] sm:$0xff]
    %v1017 = vld [vmem:[#allocation8 + $0x190] sm:$0xff]
    %v1018 = vld [vmem:[#allocation8 + $0x198] sm:$0xff]
    %v1019 = vld [vmem:[#allocation8 + $0x1a0] sm:$0xff]
    %v1020 = vld [vmem:[#allocation8 + $0x1a8] sm:$0xff]
    %v1021 = vld [vmem:[#allocation8 + $0x1b0] sm:$0xff]
    %v1022 = vld [vmem:[#allocation8 + $0x1b8] sm:$0xff]
    %v1023 = vld [vmem:[#allocation8 + $0x1c0] sm:$0xff]
    %v1024 = vld [vmem:[#allocation8 + $0x1c8] sm:$0xff]
    %v1025 = vld [vmem:[#allocation8 + $0x1d0] sm:$0xff]
    %v1026 = vld [vmem:[#allocation8 + $0x1d8] sm:$0xff]
    %v1027 = vld [vmem:[#allocation8 + $0x1e0] sm:$0xff]
    %v1028 = vld [vmem:[#allocation8 + $0x1e8] sm:$0xff]
    %v1029 = vld [vmem:[#allocation8 + $0x1f0] sm:$0xff]
    %v1030 = vld [vmem:[#allocation8 + $0x1f8] sm:$0xff]
    %1031 = vmatprep.subr.mxu0 %v968
    %1032 = vmatpush1.msra.mxu0 %v967
    %1033 = vmatprep.subr.mxu0 %v972
    %1034 = vmatpush1.msra.mxu0 %v971
    %1035 = vmatprep.subr.mxu0 %v976
    %1036 = vmatpush1.msra.mxu0 %v975
    %1037 = vmatprep.subr.mxu0 %v980
    %1038 = vmatpush1.msra.mxu0 %v979
    %1039 = vmatprep.subr.mxu0 %v984
    %1040 = vmatpush1.msra.mxu0 %v983
    %1041 = vmatprep.subr.mxu0 %v988
    %1042 = vmatpush1.msra.mxu0 %v987
    %1043 = vmatprep.subr.mxu0 %v992
    %1044 = vmatpush1.msra.mxu0 %v991
    %1045 = vmatprep.subr.mxu0 %v996
    %1046 = vmatpush1.msra.mxu0 %v995
    %1047 = vmatprep.subr.mxu0 %v1000
    %1048 = vmatpush1.msra.mxu0 %v999
    %1049 = vmatprep.subr.mxu0 %v1004
    %1050 = vmatpush1.msra.mxu0 %v1003
    %1051 = vmatprep.subr.mxu0 %v1008
    %1052 = vmatpush1.msra.mxu0 %v1007
    %1053 = vmatprep.subr.mxu0 %v1012
    %1054 = vmatpush1.msra.mxu0 %v1011
    %1055 = vmatprep.subr.mxu0 %v1016
    %1056 = vmatpush1.msra.mxu0 %v1015
    %1057 = vmatprep.subr.mxu0 %v1020
    %1058 = vmatpush1.msra.mxu0 %v1019
    %1059 = vmatprep.subr.mxu0 %v1024
    %1060 = vmatpush1.msra.mxu0 %v1023
    %1061 = vmatprep.subr.mxu0 %v1028
    %1062 = vmatpush1.msra.mxu0 %v1027
    %1063 = vmatprep.subr.mxu0 0.0
    %1064 = vmatpush1.msra.mxu0 0.0
    %1065 = vmatprep.subr.mxu0 0.0
    %1066 = vmatpush1.msra.mxu0 0.0
    %1067 = vmatprep.subr.mxu0 0.0
    %1068 = vmatpush1.msra.mxu0 0.0
    %1069 = vmatprep.subr.mxu0 0.0
    %1070 = vmatpush1.msra.mxu0 0.0
    %1071 = vmatprep.subr.mxu0 0.0
    %1072 = vmatpush1.msra.mxu0 0.0
    %1073 = vmatprep.subr.mxu0 0.0
    %1074 = vmatpush1.msra.mxu0 0.0
    %1075 = vmatprep.subr.mxu0 0.0
    %1076 = vmatpush1.msra.mxu0 0.0
    %1077 = vmatprep.subr.mxu0 0.0
    %1078 = vmatpush1.msra.mxu0 0.0
    %1079 = vmatprep.subr.mxu0 0.0
    %1080 = vmatpush1.msra.mxu0 0.0
    %1081 = vmatprep.subr.mxu0 0.0
    %1082 = vmatpush1.msra.mxu0 0.0
    %1083 = vmatprep.subr.mxu0 0.0
    %1084 = vmatpush1.msra.mxu0 0.0
    %1085 = vmatprep.subr.mxu0 0.0
    %1086 = vmatpush1.msra.mxu0 0.0
    %1087 = vmatprep.subr.mxu0 0.0
    %1088 = vmatpush1.msra.mxu0 0.0
    %1089 = vmatprep.subr.mxu0 0.0
    %1090 = vmatpush1.msra.mxu0 0.0
    %1091 = vmatprep.subr.mxu0 0.0
    %1092 = vmatpush1.msra.mxu0 0.0
    %1093 = vmatprep.subr.mxu0 0.0
    %1094 = vmatpush1.msra.mxu0 0.0
    %1095 = vmatprep.mubr.f32.mxu0 0.0
    %1096 = vmatmul.mubr.f32.gmra.mrb[0].mxu0 %v959
    %v1097 = vpop.f32.mrb[0].mxu0
    %v1098 = vadd.f32 0.0, %v1097
    %v1099 = vpop.f32.mrb[0].mxu0
    %v1100 = vadd.f32 0.0, %v1099
    %1101 = vdwg.mxu0
    %1102 = vmatprep.subr.mxu0 %v970
    %1103 = vmatpush1.msra.mxu0 %v969
    %1104 = vmatprep.subr.mxu0 %v974
    %1105 = vmatpush1.msra.mxu0 %v973
    %1106 = vmatprep.subr.mxu0 %v978
    %1107 = vmatpush1.msra.mxu0 %v977
    %1108 = vmatprep.subr.mxu0 %v982
    %1109 = vmatpush1.msra.mxu0 %v981
    %1110 = vmatprep.subr.mxu0 %v986
    %1111 = vmatpush1.msra.mxu0 %v985
    %1112 = vmatprep.subr.mxu0 %v990
    %1113 = vmatpush1.msra.mxu0 %v989
    %1114 = vmatprep.subr.mxu0 %v994
    %1115 = vmatpush1.msra.mxu0 %v993
    %1116 = vmatprep.subr.mxu0 %v998
    %1117 = vmatpush1.msra.mxu0 %v997
    %1118 = vmatprep.subr.mxu0 %v1002
    %1119 = vmatpush1.msra.mxu0 %v1001
    %1120 = vmatprep.subr.mxu0 %v1006
    %1121 = vmatpush1.msra.mxu0 %v1005
    %1122 = vmatprep.subr.mxu0 %v1010
    %1123 = vmatpush1.msra.mxu0 %v1009
    %1124 = vmatprep.subr.mxu0 %v1014
    %1125 = vmatpush1.msra.mxu0 %v1013
    %1126 = vmatprep.subr.mxu0 %v1018
    %1127 = vmatpush1.msra.mxu0 %v1017
    %1128 = vmatprep.subr.mxu0 %v1022
    %1129 = vmatpush1.msra.mxu0 %v1021
    %1130 = vmatprep.subr.mxu0 %v1026
    %1131 = vmatpush1.msra.mxu0 %v1025
    %1132 = vmatprep.subr.mxu0 %v1030
    %1133 = vmatpush1.msra.mxu0 %v1029
    %1134 = vmatprep.subr.mxu0 0.0
    %1135 = vmatpush1.msra.mxu0 0.0
    %1136 = vmatprep.subr.mxu0 0.0
    %1137 = vmatpush1.msra.mxu0 0.0
    %1138 = vmatprep.subr.mxu0 0.0
    %1139 = vmatpush1.msra.mxu0 0.0
    %1140 = vmatprep.subr.mxu0 0.0
    %1141 = vmatpush1.msra.mxu0 0.0
    %1142 = vmatprep.subr.mxu0 0.0
    %1143 = vmatpush1.msra.mxu0 0.0
    %1144 = vmatprep.subr.mxu0 0.0
    %1145 = vmatpush1.msra.mxu0 0.0
    %1146 = vmatprep.subr.mxu0 0.0
    %1147 = vmatpush1.msra.mxu0 0.0
    %1148 = vmatprep.subr.mxu0 0.0
    %1149 = vmatpush1.msra.mxu0 0.0
    %1150 = vmatprep.subr.mxu0 0.0
    %1151 = vmatpush1.msra.mxu0 0.0
    %1152 = vmatprep.subr.mxu0 0.0
    %1153 = vmatpush1.msra.mxu0 0.0
    %1154 = vmatprep.subr.mxu0 0.0
    %1155 = vmatpush1.msra.mxu0 0.0
    %1156 = vmatprep.subr.mxu0 0.0
    %1157 = vmatpush1.msra.mxu0 0.0
    %1158 = vmatprep.subr.mxu0 0.0
    %1159 = vmatpush1.msra.mxu0 0.0
    %1160 = vmatprep.subr.mxu0 0.0
    %1161 = vmatpush1.msra.mxu0 0.0
    %1162 = vmatprep.subr.mxu0 0.0
    %1163 = vmatpush1.msra.mxu0 0.0
    %1164 = vmatprep.subr.mxu0 0.0
    %1165 = vmatpush1.msra.mxu0 0.0
    %1166 = vmatprep.mubr.f32.mxu0 0.0
    %1167 = vmatmul.mubr.f32.gmra.mrb[0].mxu0 %v959
    %v1168 = vpop.f32.mrb[0].mxu0
    %v1169 = vadd.f32 0.0, %v1168
    %v1170 = vpop.f32.mrb[0].mxu0
    %v1171 = vadd.f32 0.0, %v1170
    %1172 = vdwg.mxu0
    %v1173 = vadd.f32 %v963, %v1098
    %v1174 = vadd.f32 %v964, %v1100
    %v1175 = vadd.f32 %v965, %v1169
    %v1176 = vadd.f32 %v966, %v1171
    %v1177 = vxor.u32 %v1173, 2147483648
    %v1178 = vmul.f32 %v1177, 1.442695
    %v1179 = vpow.pop %v1178
    %v1180 = vadd.f32 %v1179, 1.0
    %v1181 = vrcp.pop %v1180
    %v1182 = vmul.f32 1.0, %v1181
    %v1183 = vxor.u32 %v1174, 2147483648
    %v1184 = vmul.f32 %v1183, 1.442695
    %v1185 = vpow.pop %v1184
    %v1186 = vadd.f32 %v1185, 1.0
    %v1187 = vrcp.pop %v1186
    %v1188 = vmul.f32 1.0, %v1187
    %v1189 = vtanh.pop %v1175
    %v1190 = vxor.u32 %v1176, 2147483648
    %v1191 = vmul.f32 %v1190, 1.442695
    %v1192 = vpow.pop %v1191
    %v1193 = vadd.f32 %v1192, 1.0
    %v1194 = vrcp.pop %v1193
    %v1195 = vmul.f32 1.0, %v1194
    %v1196 = vmul.f32 %v1188, %v957
    %v1197 = vmul.f32 %v1182, %v1189
    %v1198 = vadd.f32 %v1196, %v1197
    %v1199 = vtanh.pop %v1198
    %v1200 = vmul.f32 %v1195, %v1199
    %s1201 = scalar_lea.vmem [#allocation5], 16
    %1202 = vst [vmem:[%s1201] sm:$0xff] %v1200
    %s1203 = scalar_lea.vmem [#allocation4], 96
    %v1204 = vld [vmem:[%s1203] sm:$0xff]
    %v1205 = vld [vmem:[%s1203 + $0x8] sm:$0xff]
    %v1206 = vld [vmem:[%s1203 + $0x10] sm:$0xff]
    %v1207 = vld [vmem:[%s1203 + $0x18] sm:$0xff]
    %v1208 = vld [vmem:[#allocation8] sm:$0xff]
    %v1209 = vld [vmem:[#allocation8 + $0x8] sm:$0xff]
    %v1210 = vld [vmem:[#allocation8 + $0x10] sm:$0xff]
    %v1211 = vld [vmem:[#allocation8 + $0x18] sm:$0xff]
    %v1212 = vld [vmem:[#allocation8 + $0x20] sm:$0xff]
    %v1213 = vld [vmem:[#allocation8 + $0x28] sm:$0xff]
    %v1214 = vld [vmem:[#allocation8 + $0x30] sm:$0xff]
    %v1215 = vld [vmem:[#allocation8 + $0x38] sm:$0xff]
    %v1216 = vld [vmem:[#allocation8 + $0x40] sm:$0xff]
    %v1217 = vld [vmem:[#allocation8 + $0x48] sm:$0xff]
    %v1218 = vld [vmem:[#allocation8 + $0x50] sm:$0xff]
    %v1219 = vld [vmem:[#allocation8 + $0x58] sm:$0xff]
    %v1220 = vld [vmem:[#allocation8 + $0x60] sm:$0xff]
    %v1221 = vld [vmem:[#allocation8 + $0x68] sm:$0xff]
    %v1222 = vld [vmem:[#allocation8 + $0x70] sm:$0xff]
    %v1223 = vld [vmem:[#allocation8 + $0x78] sm:$0xff]
    %v1224 = vld [vmem:[#allocation8 + $0x80] sm:$0xff]
    %v1225 = vld [vmem:[#allocation8 + $0x88] sm:$0xff]
    %v1226 = vld [vmem:[#allocation8 + $0x90] sm:$0xff]
    %v1227 = vld [vmem:[#allocation8 + $0x98] sm:$0xff]
    %v1228 = vld [vmem:[#allocation8 + $0xa0] sm:$0xff]
    %v1229 = vld [vmem:[#allocation8 + $0xa8] sm:$0xff]
    %v1230 = vld [vmem:[#allocation8 + $0xb0] sm:$0xff]
    %v1231 = vld [vmem:[#allocation8 + $0xb8] sm:$0xff]
    %v1232 = vld [vmem:[#allocation8 + $0xc0] sm:$0xff]
    %v1233 = vld [vmem:[#allocation8 + $0xc8] sm:$0xff]
    %v1234 = vld [vmem:[#allocation8 + $0xd0] sm:$0xff]
    %v1235 = vld [vmem:[#allocation8 + $0xd8] sm:$0xff]
    %v1236 = vld [vmem:[#allocation8 + $0xe0] sm:$0xff]
    %v1237 = vld [vmem:[#allocation8 + $0xe8] sm:$0xff]
    %v1238 = vld [vmem:[#allocation8 + $0xf0] sm:$0xff]
    %v1239 = vld [vmem:[#allocation8 + $0xf8] sm:$0xff]
    %v1240 = vld [vmem:[#allocation8 + $0x100] sm:$0xff]
    %v1241 = vld [vmem:[#allocation8 + $0x108] sm:$0xff]
    %v1242 = vld [vmem:[#allocation8 + $0x110] sm:$0xff]
    %v1243 = vld [vmem:[#allocation8 + $0x118] sm:$0xff]
    %v1244 = vld [vmem:[#allocation8 + $0x120] sm:$0xff]
    %v1245 = vld [vmem:[#allocation8 + $0x128] sm:$0xff]
    %v1246 = vld [vmem:[#allocation8 + $0x130] sm:$0xff]
    %v1247 = vld [vmem:[#allocation8 + $0x138] sm:$0xff]
    %v1248 = vld [vmem:[#allocation8 + $0x140] sm:$0xff]
    %v1249 = vld [vmem:[#allocation8 + $0x148] sm:$0xff]
    %v1250 = vld [vmem:[#allocation8 + $0x150] sm:$0xff]
    %v1251 = vld [vmem:[#allocation8 + $0x158] sm:$0xff]
    %v1252 = vld [vmem:[#allocation8 + $0x160] sm:$0xff]
    %v1253 = vld [vmem:[#allocation8 + $0x168] sm:$0xff]
    %v1254 = vld [vmem:[#allocation8 + $0x170] sm:$0xff]
    %v1255 = vld [vmem:[#allocation8 + $0x178] sm:$0xff]
    %v1256 = vld [vmem:[#allocation8 + $0x180] sm:$0xff]
    %v1257 = vld [vmem:[#allocation8 + $0x188] sm:$0xff]
    %v1258 = vld [vmem:[#allocation8 + $0x190] sm:$0xff]
    %v1259 = vld [vmem:[#allocation8 + $0x198] sm:$0xff]
    %v1260 = vld [vmem:[#allocation8 + $0x1a0] sm:$0xff]
    %v1261 = vld [vmem:[#allocation8 + $0x1a8] sm:$0xff]
    %v1262 = vld [vmem:[#allocation8 + $0x1b0] sm:$0xff]
    %v1263 = vld [vmem:[#allocation8 + $0x1b8] sm:$0xff]
    %v1264 = vld [vmem:[#allocation8 + $0x1c0] sm:$0xff]
    %v1265 = vld [vmem:[#allocation8 + $0x1c8] sm:$0xff]
    %v1266 = vld [vmem:[#allocation8 + $0x1d0] sm:$0xff]
    %v1267 = vld [vmem:[#allocation8 + $0x1d8] sm:$0xff]
    %v1268 = vld [vmem:[#allocation8 + $0x1e0] sm:$0xff]
    %v1269 = vld [vmem:[#allocation8 + $0x1e8] sm:$0xff]
    %v1270 = vld [vmem:[#allocation8 + $0x1f0] sm:$0xff]
    %v1271 = vld [vmem:[#allocation8 + $0x1f8] sm:$0xff]
    %1272 = vmatprep.subr.mxu0 %v1209
    %1273 = vmatpush1.msra.mxu0 %v1208
    %1274 = vmatprep.subr.mxu0 %v1213
    %1275 = vmatpush1.msra.mxu0 %v1212
    %1276 = vmatprep.subr.mxu0 %v1217
    %1277 = vmatpush1.msra.mxu0 %v1216
    %1278 = vmatprep.subr.mxu0 %v1221
    %1279 = vmatpush1.msra.mxu0 %v1220
    %1280 = vmatprep.subr.mxu0 %v1225
    %1281 = vmatpush1.msra.mxu0 %v1224
    %1282 = vmatprep.subr.mxu0 %v1229
    %1283 = vmatpush1.msra.mxu0 %v1228
    %1284 = vmatprep.subr.mxu0 %v1233
    %1285 = vmatpush1.msra.mxu0 %v1232
    %1286 = vmatprep.subr.mxu0 %v1237
    %1287 = vmatpush1.msra.mxu0 %v1236
    %1288 = vmatprep.subr.mxu0 %v1241
    %1289 = vmatpush1.msra.mxu0 %v1240
    %1290 = vmatprep.subr.mxu0 %v1245
    %1291 = vmatpush1.msra.mxu0 %v1244
    %1292 = vmatprep.subr.mxu0 %v1249
    %1293 = vmatpush1.msra.mxu0 %v1248
    %1294 = vmatprep.subr.mxu0 %v1253
    %1295 = vmatpush1.msra.mxu0 %v1252
    %1296 = vmatprep.subr.mxu0 %v1257
    %1297 = vmatpush1.msra.mxu0 %v1256
    %1298 = vmatprep.subr.mxu0 %v1261
    %1299 = vmatpush1.msra.mxu0 %v1260
    %1300 = vmatprep.subr.mxu0 %v1265
    %1301 = vmatpush1.msra.mxu0 %v1264
    %1302 = vmatprep.subr.mxu0 %v1269
    %1303 = vmatpush1.msra.mxu0 %v1268
    %1304 = vmatprep.subr.mxu0 0.0
    %1305 = vmatpush1.msra.mxu0 0.0
    %1306 = vmatprep.subr.mxu0 0.0
    %1307 = vmatpush1.msra.mxu0 0.0
    %1308 = vmatprep.subr.mxu0 0.0
    %1309 = vmatpush1.msra.mxu0 0.0
    %1310 = vmatprep.subr.mxu0 0.0
    %1311 = vmatpush1.msra.mxu0 0.0
    %1312 = vmatprep.subr.mxu0 0.0
    %1313 = vmatpush1.msra.mxu0 0.0
    %1314 = vmatprep.subr.mxu0 0.0
    %1315 = vmatpush1.msra.mxu0 0.0
    %1316 = vmatprep.subr.mxu0 0.0
    %1317 = vmatpush1.msra.mxu0 0.0
    %1318 = vmatprep.subr.mxu0 0.0
    %1319 = vmatpush1.msra.mxu0 0.0
    %1320 = vmatprep.subr.mxu0 0.0
    %1321 = vmatpush1.msra.mxu0 0.0
    %1322 = vmatprep.subr.mxu0 0.0
    %1323 = vmatpush1.msra.mxu0 0.0
    %1324 = vmatprep.subr.mxu0 0.0
    %1325 = vmatpush1.msra.mxu0 0.0
    %1326 = vmatprep.subr.mxu0 0.0
    %1327 = vmatpush1.msra.mxu0 0.0
    %1328 = vmatprep.subr.mxu0 0.0
    %1329 = vmatpush1.msra.mxu0 0.0
    %1330 = vmatprep.subr.mxu0 0.0
    %1331 = vmatpush1.msra.mxu0 0.0
    %1332 = vmatprep.subr.mxu0 0.0
    %1333 = vmatpush1.msra.mxu0 0.0
    %1334 = vmatprep.subr.mxu0 0.0
    %1335 = vmatpush1.msra.mxu0 0.0
    %1336 = vmatprep.mubr.f32.mxu0 0.0
    %1337 = vmatmul.mubr.f32.gmra.mrb[0].mxu0 %v1200
    %v1338 = vpop.f32.mrb[0].mxu0
    %v1339 = vadd.f32 0.0, %v1338
    %v1340 = vpop.f32.mrb[0].mxu0
    %v1341 = vadd.f32 0.0, %v1340
    %1342 = vdwg.mxu0
    %1343 = vmatprep.subr.mxu0 %v1211
    %1344 = vmatpush1.msra.mxu0 %v1210
    %1345 = vmatprep.subr.mxu0 %v1215
    %1346 = vmatpush1.msra.mxu0 %v1214
    %1347 = vmatprep.subr.mxu0 %v1219
    %1348 = vmatpush1.msra.mxu0 %v1218
    %1349 = vmatprep.subr.mxu0 %v1223
    %1350 = vmatpush1.msra.mxu0 %v1222
    %1351 = vmatprep.subr.mxu0 %v1227
    %1352 = vmatpush1.msra.mxu0 %v1226
    %1353 = vmatprep.subr.mxu0 %v1231
    %1354 = vmatpush1.msra.mxu0 %v1230
    %1355 = vmatprep.subr.mxu0 %v1235
    %1356 = vmatpush1.msra.mxu0 %v1234
    %1357 = vmatprep.subr.mxu0 %v1239
    %1358 = vmatpush1.msra.mxu0 %v1238
    %1359 = vmatprep.subr.mxu0 %v1243
    %1360 = vmatpush1.msra.mxu0 %v1242
    %1361 = vmatprep.subr.mxu0 %v1247
    %1362 = vmatpush1.msra.mxu0 %v1246
    %1363 = vmatprep.subr.mxu0 %v1251
    %1364 = vmatpush1.msra.mxu0 %v1250
    %1365 = vmatprep.subr.mxu0 %v1255
    %1366 = vmatpush1.msra.mxu0 %v1254
    %1367 = vmatprep.subr.mxu0 %v1259
    %1368 = vmatpush1.msra.mxu0 %v1258
    %1369 = vmatprep.subr.mxu0 %v1263
    %1370 = vmatpush1.msra.mxu0 %v1262
    %1371 = vmatprep.subr.mxu0 %v1267
    %1372 = vmatpush1.msra.mxu0 %v1266
    %1373 = vmatprep.subr.mxu0 %v1271
    %1374 = vmatpush1.msra.mxu0 %v1270
    %1375 = vmatprep.subr.mxu0 0.0
    %1376 = vmatpush1.msra.mxu0 0.0
    %1377 = vmatprep.subr.mxu0 0.0
    %1378 = vmatpush1.msra.mxu0 0.0
    %1379 = vmatprep.subr.mxu0 0.0
    %1380 = vmatpush1.msra.mxu0 0.0
    %1381 = vmatprep.subr.mxu0 0.0
    %1382 = vmatpush1.msra.mxu0 0.0
    %1383 = vmatprep.subr.mxu0 0.0
    %1384 = vmatpush1.msra.mxu0 0.0
    %1385 = vmatprep.subr.mxu0 0.0
    %1386 = vmatpush1.msra.mxu0 0.0
    %1387 = vmatprep.subr.mxu0 0.0
    %1388 = vmatpush1.msra.mxu0 0.0
    %1389 = vmatprep.subr.mxu0 0.0
    %1390 = vmatpush1.msra.mxu0 0.0
    %1391 = vmatprep.subr.mxu0 0.0
    %1392 = vmatpush1.msra.mxu0 0.0
    %1393 = vmatprep.subr.mxu0 0.0
    %1394 = vmatpush1.msra.mxu0 0.0
    %1395 = vmatprep.subr.mxu0 0.0
    %1396 = vmatpush1.msra.mxu0 0.0
    %1397 = vmatprep.subr.mxu0 0.0
    %1398 = vmatpush1.msra.mxu0 0.0
    %1399 = vmatprep.subr.mxu0 0.0
    %1400 = vmatpush1.msra.mxu0 0.0
    %1401 = vmatprep.subr.mxu0 0.0
    %1402 = vmatpush1.msra.mxu0 0.0
    %1403 = vmatprep.subr.mxu0 0.0
    %1404 = vmatpush1.msra.mxu0 0.0
    %1405 = vmatprep.subr.mxu0 0.0
    %1406 = vmatpush1.msra.mxu0 0.0
    %1407 = vmatprep.mubr.f32.mxu0 0.0
    %1408 = vmatmul.mubr.f32.gmra.mrb[0].mxu0 %v1200
    %v1409 = vpop.f32.mrb[0].mxu0
    %v1410 = vadd.f32 0.0, %v1409
    %v1411 = vpop.f32.mrb[0].mxu0
    %v1412 = vadd.f32 0.0, %v1411
    %1413 = vdwg.mxu0
    %v1414 = vadd.f32 %v1204, %v1339
    %v1415 = vadd.f32 %v1205, %v1341
    %v1416 = vadd.f32 %v1206, %v1410
    %v1417 = vadd.f32 %v1207, %v1412
    %v1418 = vxor.u32 %v1414, 2147483648
    %v1419 = vmul.f32 %v1418, 1.442695
    %v1420 = vpow.pop %v1419
    %v1421 = vadd.f32 %v1420, 1.0
    %v1422 = vrcp.pop %v1421
    %v1423 = vmul.f32 1.0, %v1422
    %v1424 = vxor.u32 %v1415, 2147483648
    %v1425 = vmul.f32 %v1424, 1.442695
    %v1426 = vpow.pop %v1425
    %v1427 = vadd.f32 %v1426, 1.0
    %v1428 = vrcp.pop %v1427
    %v1429 = vmul.f32 1.0, %v1428
    %v1430 = vtanh.pop %v1416
    %v1431 = vxor.u32 %v1417, 2147483648
    %v1432 = vmul.f32 %v1431, 1.442695
    %v1433 = vpow.pop %v1432
    %v1434 = vadd.f32 %v1433, 1.0
    %v1435 = vrcp.pop %v1434
    %v1436 = vmul.f32 1.0, %v1435
    %v1437 = vmul.f32 %v1429, %v1198
    %v1438 = vmul.f32 %v1423, %v1430
    %v1439 = vadd.f32 %v1437, %v1438
    %v1440 = vtanh.pop %v1439
    %v1441 = vmul.f32 %v1436, %v1440
    %s1442 = scalar_lea.vmem [#allocation5], 24
    %1443 = vst [vmem:[%s1442] sm:$0xff] %v1441
    %s1444 = scalar_lea.vmem [#allocation4], 128
    %v1445 = vld [vmem:[%s1444] sm:$0xff]
    %v1446 = vld [vmem:[%s1444 + $0x8] sm:$0xff]
    %v1447 = vld [vmem:[%s1444 + $0x10] sm:$0xff]
    %v1448 = vld [vmem:[%s1444 + $0x18] sm:$0xff]
    %v1449 = vld [vmem:[#allocation8] sm:$0xff]
    %v1450 = vld [vmem:[#allocation8 + $0x8] sm:$0xff]
    %v1451 = vld [vmem:[#allocation8 + $0x10] sm:$0xff]
    %v1452 = vld [vmem:[#allocation8 + $0x18] sm:$0xff]
    %v1453 = vld [vmem:[#allocation8 + $0x20] sm:$0xff]
    %v1454 = vld [vmem:[#allocation8 + $0x28] sm:$0xff]
    %v1455 = vld [vmem:[#allocation8 + $0x30] sm:$0xff]
    %v1456 = vld [vmem:[#allocation8 + $0x38] sm:$0xff]
    %v1457 = vld [vmem:[#allocation8 + $0x40] sm:$0xff]
    %v1458 = vld [vmem:[#allocation8 + $0x48] sm:$0xff]
    %v1459 = vld [vmem:[#allocation8 + $0x50] sm:$0xff]
    %v1460 = vld [vmem:[#allocation8 + $0x58] sm:$0xff]
    %v1461 = vld [vmem:[#allocation8 + $0x60] sm:$0xff]
    %v1462 = vld [vmem:[#allocation8 + $0x68] sm:$0xff]
    %v1463 = vld [vmem:[#allocation8 + $0x70] sm:$0xff]
    %v1464 = vld [vmem:[#allocation8 + $0x78] sm:$0xff]
    %v1465 = vld [vmem:[#allocation8 + $0x80] sm:$0xff]
    %v1466 = vld [vmem:[#allocation8 + $0x88] sm:$0xff]
    %v1467 = vld [vmem:[#allocation8 + $0x90] sm:$0xff]
    %v1468 = vld [vmem:[#allocation8 + $0x98] sm:$0xff]
    %v1469 = vld [vmem:[#allocation8 + $0xa0] sm:$0xff]
    %v1470 = vld [vmem:[#allocation8 + $0xa8] sm:$0xff]
    %v1471 = vld [vmem:[#allocation8 + $0xb0] sm:$0xff]
    %v1472 = vld [vmem:[#allocation8 + $0xb8] sm:$0xff]
    %v1473 = vld [vmem:[#allocation8 + $0xc0] sm:$0xff]
    %v1474 = vld [vmem:[#allocation8 + $0xc8] sm:$0xff]
    %v1475 = vld [vmem:[#allocation8 + $0xd0] sm:$0xff]
    %v1476 = vld [vmem:[#allocation8 + $0xd8] sm:$0xff]
    %v1477 = vld [vmem:[#allocation8 + $0xe0] sm:$0xff]
    %v1478 = vld [vmem:[#allocation8 + $0xe8] sm:$0xff]
    %v1479 = vld [vmem:[#allocation8 + $0xf0] sm:$0xff]
    %v1480 = vld [vmem:[#allocation8 + $0xf8] sm:$0xff]
    %v1481 = vld [vmem:[#allocation8 + $0x100] sm:$0xff]
    %v1482 = vld [vmem:[#allocation8 + $0x108] sm:$0xff]
    %v1483 = vld [vmem:[#allocation8 + $0x110] sm:$0xff]
    %v1484 = vld [vmem:[#allocation8 + $0x118] sm:$0xff]
    %v1485 = vld [vmem:[#allocation8 + $0x120] sm:$0xff]
    %v1486 = vld [vmem:[#allocation8 + $0x128] sm:$0xff]
    %v1487 = vld [vmem:[#allocation8 + $0x130] sm:$0xff]
    %v1488 = vld [vmem:[#allocation8 + $0x138] sm:$0xff]
    %v1489 = vld [vmem:[#allocation8 + $0x140] sm:$0xff]
    %v1490 = vld [vmem:[#allocation8 + $0x148] sm:$0xff]
    %v1491 = vld [vmem:[#allocation8 + $0x150] sm:$0xff]
    %v1492 = vld [vmem:[#allocation8 + $0x158] sm:$0xff]
    %v1493 = vld [vmem:[#allocation8 + $0x160] sm:$0xff]
    %v1494 = vld [vmem:[#allocation8 + $0x168] sm:$0xff]
    %v1495 = vld [vmem:[#allocation8 + $0x170] sm:$0xff]
    %v1496 = vld [vmem:[#allocation8 + $0x178] sm:$0xff]
    %v1497 = vld [vmem:[#allocation8 + $0x180] sm:$0xff]
    %v1498 = vld [vmem:[#allocation8 + $0x188] sm:$0xff]
    %v1499 = vld [vmem:[#allocation8 + $0x190] sm:$0xff]
    %v1500 = vld [vmem:[#allocation8 + $0x198] sm:$0xff]
    %v1501 = vld [vmem:[#allocation8 + $0x1a0] sm:$0xff]
    %v1502 = vld [vmem:[#allocation8 + $0x1a8] sm:$0xff]
    %v1503 = vld [vmem:[#allocation8 + $0x1b0] sm:$0xff]
    %v1504 = vld [vmem:[#allocation8 + $0x1b8] sm:$0xff]
    %v1505 = vld [vmem:[#allocation8 + $0x1c0] sm:$0xff]
    %v1506 = vld [vmem:[#allocation8 + $0x1c8] sm:$0xff]
    %v1507 = vld [vmem:[#allocation8 + $0x1d0] sm:$0xff]
    %v1508 = vld [vmem:[#allocation8 + $0x1d8] sm:$0xff]
    %v1509 = vld [vmem:[#allocation8 + $0x1e0] sm:$0xff]
    %v1510 = vld [vmem:[#allocation8 + $0x1e8] sm:$0xff]
    %v1511 = vld [vmem:[#allocation8 + $0x1f0] sm:$0xff]
    %v1512 = vld [vmem:[#allocation8 + $0x1f8] sm:$0xff]
    %1513 = vmatprep.subr.mxu0 %v1450
    %1514 = vmatpush1.msra.mxu0 %v1449
    %1515 = vmatprep.subr.mxu0 %v1454
    %1516 = vmatpush1.msra.mxu0 %v1453
    %1517 = vmatprep.subr.mxu0 %v1458
    %1518 = vmatpush1.msra.mxu0 %v1457
    %1519 = vmatprep.subr.mxu0 %v1462
    %1520 = vmatpush1.msra.mxu0 %v1461
    %1521 = vmatprep.subr.mxu0 %v1466
    %1522 = vmatpush1.msra.mxu0 %v1465
    %1523 = vmatprep.subr.mxu0 %v1470
    %1524 = vmatpush1.msra.mxu0 %v1469
    %1525 = vmatprep.subr.mxu0 %v1474
    %1526 = vmatpush1.msra.mxu0 %v1473
    %1527 = vmatprep.subr.mxu0 %v1478
    %1528 = vmatpush1.msra.mxu0 %v1477
    %1529 = vmatprep.subr.mxu0 %v1482
    %1530 = vmatpush1.msra.mxu0 %v1481
    %1531 = vmatprep.subr.mxu0 %v1486
    %1532 = vmatpush1.msra.mxu0 %v1485
    %1533 = vmatprep.subr.mxu0 %v1490
    %1534 = vmatpush1.msra.mxu0 %v1489
    %1535 = vmatprep.subr.mxu0 %v1494
    %1536 = vmatpush1.msra.mxu0 %v1493
    %1537 = vmatprep.subr.mxu0 %v1498
    %1538 = vmatpush1.msra.mxu0 %v1497
    %1539 = vmatprep.subr.mxu0 %v1502
    %1540 = vmatpush1.msra.mxu0 %v1501
    %1541 = vmatprep.subr.mxu0 %v1506
    %1542 = vmatpush1.msra.mxu0 %v1505
    %1543 = vmatprep.subr.mxu0 %v1510
    %1544 = vmatpush1.msra.mxu0 %v1509
    %1545 = vmatprep.subr.mxu0 0.0
    %1546 = vmatpush1.msra.mxu0 0.0
    %1547 = vmatprep.subr.mxu0 0.0
    %1548 = vmatpush1.msra.mxu0 0.0
    %1549 = vmatprep.subr.mxu0 0.0
    %1550 = vmatpush1.msra.mxu0 0.0
    %1551 = vmatprep.subr.mxu0 0.0
    %1552 = vmatpush1.msra.mxu0 0.0
    %1553 = vmatprep.subr.mxu0 0.0
    %1554 = vmatpush1.msra.mxu0 0.0
    %1555 = vmatprep.subr.mxu0 0.0
    %1556 = vmatpush1.msra.mxu0 0.0
    %1557 = vmatprep.subr.mxu0 0.0
    %1558 = vmatpush1.msra.mxu0 0.0
    %1559 = vmatprep.subr.mxu0 0.0
    %1560 = vmatpush1.msra.mxu0 0.0
    %1561 = vmatprep.subr.mxu0 0.0
    %1562 = vmatpush1.msra.mxu0 0.0
    %1563 = vmatprep.subr.mxu0 0.0
    %1564 = vmatpush1.msra.mxu0 0.0
    %1565 = vmatprep.subr.mxu0 0.0
    %1566 = vmatpush1.msra.mxu0 0.0
    %1567 = vmatprep.subr.mxu0 0.0
    %1568 = vmatpush1.msra.mxu0 0.0
    %1569 = vmatprep.subr.mxu0 0.0
    %1570 = vmatpush1.msra.mxu0 0.0
    %1571 = vmatprep.subr.mxu0 0.0
    %1572 = vmatpush1.msra.mxu0 0.0
    %1573 = vmatprep.subr.mxu0 0.0
    %1574 = vmatpush1.msra.mxu0 0.0
    %1575 = vmatprep.subr.mxu0 0.0
    %1576 = vmatpush1.msra.mxu0 0.0
    %1577 = vmatprep.mubr.f32.mxu0 0.0
    %1578 = vmatmul.mubr.f32.gmra.mrb[0].mxu0 %v1441
    %v1579 = vpop.f32.mrb[0].mxu0
    %v1580 = vadd.f32 0.0, %v1579
    %v1581 = vpop.f32.mrb[0].mxu0
    %v1582 = vadd.f32 0.0, %v1581
    %1583 = vdwg.mxu0
    %1584 = vmatprep.subr.mxu0 %v1452
    %1585 = vmatpush1.msra.mxu0 %v1451
    %1586 = vmatprep.subr.mxu0 %v1456
    %1587 = vmatpush1.msra.mxu0 %v1455
    %1588 = vmatprep.subr.mxu0 %v1460
    %1589 = vmatpush1.msra.mxu0 %v1459
    %1590 = vmatprep.subr.mxu0 %v1464
    %1591 = vmatpush1.msra.mxu0 %v1463
    %1592 = vmatprep.subr.mxu0 %v1468
    %1593 = vmatpush1.msra.mxu0 %v1467
    %1594 = vmatprep.subr.mxu0 %v1472
    %1595 = vmatpush1.msra.mxu0 %v1471
    %1596 = vmatprep.subr.mxu0 %v1476
    %1597 = vmatpush1.msra.mxu0 %v1475
    %1598 = vmatprep.subr.mxu0 %v1480
    %1599 = vmatpush1.msra.mxu0 %v1479
    %1600 = vmatprep.subr.mxu0 %v1484
    %1601 = vmatpush1.msra.mxu0 %v1483
    %1602 = vmatprep.subr.mxu0 %v1488
    %1603 = vmatpush1.msra.mxu0 %v1487
    %1604 = vmatprep.subr.mxu0 %v1492
    %1605 = vmatpush1.msra.mxu0 %v1491
    %1606 = vmatprep.subr.mxu0 %v1496
    %1607 = vmatpush1.msra.mxu0 %v1495
    %1608 = vmatprep.subr.mxu0 %v1500
    %1609 = vmatpush1.msra.mxu0 %v1499
    %1610 = vmatprep.subr.mxu0 %v1504
    %1611 = vmatpush1.msra.mxu0 %v1503
    %1612 = vmatprep.subr.mxu0 %v1508
    %1613 = vmatpush1.msra.mxu0 %v1507
    %1614 = vmatprep.subr.mxu0 %v1512
    %1615 = vmatpush1.msra.mxu0 %v1511
    %1616 = vmatprep.subr.mxu0 0.0
    %1617 = vmatpush1.msra.mxu0 0.0
    %1618 = vmatprep.subr.mxu0 0.0
    %1619 = vmatpush1.msra.mxu0 0.0
    %1620 = vmatprep.subr.mxu0 0.0
    %1621 = vmatpush1.msra.mxu0 0.0
    %1622 = vmatprep.subr.mxu0 0.0
    %1623 = vmatpush1.msra.mxu0 0.0
    %1624 = vmatprep.subr.mxu0 0.0
    %1625 = vmatpush1.msra.mxu0 0.0
    %1626 = vmatprep.subr.mxu0 0.0
    %1627 = vmatpush1.msra.mxu0 0.0
    %1628 = vmatprep.subr.mxu0 0.0
    %1629 = vmatpush1.msra.mxu0 0.0
    %1630 = vmatprep.subr.mxu0 0.0
    %1631 = vmatpush1.msra.mxu0 0.0
    %1632 = vmatprep.subr.mxu0 0.0
    %1633 = vmatpush1.msra.mxu0 0.0
    %1634 = vmatprep.subr.mxu0 0.0
    %1635 = vmatpush1.msra.mxu0 0.0
    %1636 = vmatprep.subr.mxu0 0.0
    %1637 = vmatpush1.msra.mxu0 0.0
    %1638 = vmatprep.subr.mxu0 0.0
    %1639 = vmatpush1.msra.mxu0 0.0
    %1640 = vmatprep.subr.mxu0 0.0
    %1641 = vmatpush1.msra.mxu0 0.0
    %1642 = vmatprep.subr.mxu0 0.0
    %1643 = vmatpush1.msra.mxu0 0.0
    %1644 = vmatprep.subr.mxu0 0.0
    %1645 = vmatpush1.msra.mxu0 0.0
    %1646 = vmatprep.subr.mxu0 0.0
    %1647 = vmatpush1.msra.mxu0 0.0
    %1648 = vmatprep.mubr.f32.mxu0 0.0
    %1649 = vmatmul.mubr.f32.gmra.mrb[0].mxu0 %v1441
    %v1650 = vpop.f32.mrb[0].mxu0
    %v1651 = vadd.f32 0.0, %v1650
    %v1652 = vpop.f32.mrb[0].mxu0
    %v1653 = vadd.f32 0.0, %v1652
    %1654 = vdwg.mxu0
    %v1655 = vadd.f32 %v1445, %v1580
    %v1656 = vadd.f32 %v1446, %v1582
    %v1657 = vadd.f32 %v1447, %v1651
    %v1658 = vadd.f32 %v1448, %v1653
    %v1659 = vxor.u32 %v1655, 2147483648
    %v1660 = vmul.f32 %v1659, 1.442695
    %v1661 = vpow.pop %v1660
    %v1662 = vadd.f32 %v1661, 1.0
    %v1663 = vrcp.pop %v1662
    %v1664 = vmul.f32 1.0, %v1663
    %v1665 = vxor.u32 %v1656, 2147483648
    %v1666 = vmul.f32 %v1665, 1.442695
    %v1667 = vpow.pop %v1666
    %v1668 = vadd.f32 %v1667, 1.0
    %v1669 = vrcp.pop %v1668
    %v1670 = vmul.f32 1.0, %v1669
    %v1671 = vtanh.pop %v1657
    %v1672 = vxor.u32 %v1658, 2147483648
    %v1673 = vmul.f32 %v1672, 1.442695
    %v1674 = vpow.pop %v1673
    %v1675 = vadd.f32 %v1674, 1.0
    %v1676 = vrcp.pop %v1675
    %v1677 = vmul.f32 1.0, %v1676
    %v1678 = vmul.f32 %v1670, %v1439
    %v1679 = vmul.f32 %v1664, %v1671
    %v1680 = vadd.f32 %v1678, %v1679
    %v1681 = vtanh.pop %v1680
    %v1682 = vmul.f32 %v1677, %v1681
    %s1683 = scalar_lea.vmem [#allocation5], 32
    %1684 = vst [vmem:[%s1683] sm:$0xff] %v1682
    %s1685 = scalar_lea.vmem [#allocation4], 160
    %v1686 = vld [vmem:[%s1685] sm:$0xff]
    %v1687 = vld [vmem:[%s1685 + $0x8] sm:$0xff]
    %v1688 = vld [vmem:[%s1685 + $0x10] sm:$0xff]
    %v1689 = vld [vmem:[%s1685 + $0x18] sm:$0xff]
    %v1690 = vld [vmem:[#allocation8] sm:$0xff]
    %v1691 = vld [vmem:[#allocation8 + $0x8] sm:$0xff]
    %v1692 = vld [vmem:[#allocation8 + $0x10] sm:$0xff]
    %v1693 = vld [vmem:[#allocation8 + $0x18] sm:$0xff]
    %v1694 = vld [vmem:[#allocation8 + $0x20] sm:$0xff]
    %v1695 = vld [vmem:[#allocation8 + $0x28] sm:$0xff]
    %v1696 = vld [vmem:[#allocation8 + $0x30] sm:$0xff]
    %v1697 = vld [vmem:[#allocation8 + $0x38] sm:$0xff]
    %v1698 = vld [vmem:[#allocation8 + $0x40] sm:$0xff]
    %v1699 = vld [vmem:[#allocation8 + $0x48] sm:$0xff]
    %v1700 = vld [vmem:[#allocation8 + $0x50] sm:$0xff]
    %v1701 = vld [vmem:[#allocation8 + $0x58] sm:$0xff]
    %v1702 = vld [vmem:[#allocation8 + $0x60] sm:$0xff]
    %v1703 = vld [vmem:[#allocation8 + $0x68] sm:$0xff]
    %v1704 = vld [vmem:[#allocation8 + $0x70] sm:$0xff]
    %v1705 = vld [vmem:[#allocation8 + $0x78] sm:$0xff]
    %v1706 = vld [vmem:[#allocation8 + $0x80] sm:$0xff]
    %v1707 = vld [vmem:[#allocation8 + $0x88] sm:$0xff]
    %v1708 = vld [vmem:[#allocation8 + $0x90] sm:$0xff]
    %v1709 = vld [vmem:[#allocation8 + $0x98] sm:$0xff]
    %v1710 = vld [vmem:[#allocation8 + $0xa0] sm:$0xff]
    %v1711 = vld [vmem:[#allocation8 + $0xa8] sm:$0xff]
    %v1712 = vld [vmem:[#allocation8 + $0xb0] sm:$0xff]
    %v1713 = vld [vmem:[#allocation8 + $0xb8] sm:$0xff]
    %v1714 = vld [vmem:[#allocation8 + $0xc0] sm:$0xff]
    %v1715 = vld [vmem:[#allocation8 + $0xc8] sm:$0xff]
    %v1716 = vld [vmem:[#allocation8 + $0xd0] sm:$0xff]
    %v1717 = vld [vmem:[#allocation8 + $0xd8] sm:$0xff]
    %v1718 = vld [vmem:[#allocation8 + $0xe0] sm:$0xff]
    %v1719 = vld [vmem:[#allocation8 + $0xe8] sm:$0xff]
    %v1720 = vld [vmem:[#allocation8 + $0xf0] sm:$0xff]
    %v1721 = vld [vmem:[#allocation8 + $0xf8] sm:$0xff]
    %v1722 = vld [vmem:[#allocation8 + $0x100] sm:$0xff]
    %v1723 = vld [vmem:[#allocation8 + $0x108] sm:$0xff]
    %v1724 = vld [vmem:[#allocation8 + $0x110] sm:$0xff]
    %v1725 = vld [vmem:[#allocation8 + $0x118] sm:$0xff]
    %v1726 = vld [vmem:[#allocation8 + $0x120] sm:$0xff]
    %v1727 = vld [vmem:[#allocation8 + $0x128] sm:$0xff]
    %v1728 = vld [vmem:[#allocation8 + $0x130] sm:$0xff]
    %v1729 = vld [vmem:[#allocation8 + $0x138] sm:$0xff]
    %v1730 = vld [vmem:[#allocation8 + $0x140] sm:$0xff]
    %v1731 = vld [vmem:[#allocation8 + $0x148] sm:$0xff]
    %v1732 = vld [vmem:[#allocation8 + $0x150] sm:$0xff]
    %v1733 = vld [vmem:[#allocation8 + $0x158] sm:$0xff]
    %v1734 = vld [vmem:[#allocation8 + $0x160] sm:$0xff]
    %v1735 = vld [vmem:[#allocation8 + $0x168] sm:$0xff]
    %v1736 = vld [vmem:[#allocation8 + $0x170] sm:$0xff]
    %v1737 = vld [vmem:[#allocation8 + $0x178] sm:$0xff]
    %v1738 = vld [vmem:[#allocation8 + $0x180] sm:$0xff]
    %v1739 = vld [vmem:[#allocation8 + $0x188] sm:$0xff]
    %v1740 = vld [vmem:[#allocation8 + $0x190] sm:$0xff]
    %v1741 = vld [vmem:[#allocation8 + $0x198] sm:$0xff]
    %v1742 = vld [vmem:[#allocation8 + $0x1a0] sm:$0xff]
    %v1743 = vld [vmem:[#allocation8 + $0x1a8] sm:$0xff]
    %v1744 = vld [vmem:[#allocation8 + $0x1b0] sm:$0xff]
    %v1745 = vld [vmem:[#allocation8 + $0x1b8] sm:$0xff]
    %v1746 = vld [vmem:[#allocation8 + $0x1c0] sm:$0xff]
    %v1747 = vld [vmem:[#allocation8 + $0x1c8] sm:$0xff]
    %v1748 = vld [vmem:[#allocation8 + $0x1d0] sm:$0xff]
    %v1749 = vld [vmem:[#allocation8 + $0x1d8] sm:$0xff]
    %v1750 = vld [vmem:[#allocation8 + $0x1e0] sm:$0xff]
    %v1751 = vld [vmem:[#allocation8 + $0x1e8] sm:$0xff]
    %v1752 = vld [vmem:[#allocation8 + $0x1f0] sm:$0xff]
    %v1753 = vld [vmem:[#allocation8 + $0x1f8] sm:$0xff]
    %1754 = vmatprep.subr.mxu0 %v1691
    %1755 = vmatpush1.msra.mxu0 %v1690
    %1756 = vmatprep.subr.mxu0 %v1695
    %1757 = vmatpush1.msra.mxu0 %v1694
    %1758 = vmatprep.subr.mxu0 %v1699
    %1759 = vmatpush1.msra.mxu0 %v1698
    %1760 = vmatprep.subr.mxu0 %v1703
    %1761 = vmatpush1.msra.mxu0 %v1702
    %1762 = vmatprep.subr.mxu0 %v1707
    %1763 = vmatpush1.msra.mxu0 %v1706
    %1764 = vmatprep.subr.mxu0 %v1711
    %1765 = vmatpush1.msra.mxu0 %v1710
    %1766 = vmatprep.subr.mxu0 %v1715
    %1767 = vmatpush1.msra.mxu0 %v1714
    %1768 = vmatprep.subr.mxu0 %v1719
    %1769 = vmatpush1.msra.mxu0 %v1718
    %1770 = vmatprep.subr.mxu0 %v1723
    %1771 = vmatpush1.msra.mxu0 %v1722
    %1772 = vmatprep.subr.mxu0 %v1727
    %1773 = vmatpush1.msra.mxu0 %v1726
    %1774 = vmatprep.subr.mxu0 %v1731
    %1775 = vmatpush1.msra.mxu0 %v1730
    %1776 = vmatprep.subr.mxu0 %v1735
    %1777 = vmatpush1.msra.mxu0 %v1734
    %1778 = vmatprep.subr.mxu0 %v1739
    %1779 = vmatpush1.msra.mxu0 %v1738
    %1780 = vmatprep.subr.mxu0 %v1743
    %1781 = vmatpush1.msra.mxu0 %v1742
    %1782 = vmatprep.subr.mxu0 %v1747
    %1783 = vmatpush1.msra.mxu0 %v1746
    %1784 = vmatprep.subr.mxu0 %v1751
    %1785 = vmatpush1.msra.mxu0 %v1750
    %1786 = vmatprep.subr.mxu0 0.0
    %1787 = vmatpush1.msra.mxu0 0.0
    %1788 = vmatprep.subr.mxu0 0.0
    %1789 = vmatpush1.msra.mxu0 0.0
    %1790 = vmatprep.subr.mxu0 0.0
    %1791 = vmatpush1.msra.mxu0 0.0
    %1792 = vmatprep.subr.mxu0 0.0
    %1793 = vmatpush1.msra.mxu0 0.0
    %1794 = vmatprep.subr.mxu0 0.0
    %1795 = vmatpush1.msra.mxu0 0.0
    %1796 = vmatprep.subr.mxu0 0.0
    %1797 = vmatpush1.msra.mxu0 0.0
    %1798 = vmatprep.subr.mxu0 0.0
    %1799 = vmatpush1.msra.mxu0 0.0
    %1800 = vmatprep.subr.mxu0 0.0
    %1801 = vmatpush1.msra.mxu0 0.0
    %1802 = vmatprep.subr.mxu0 0.0
    %1803 = vmatpush1.msra.mxu0 0.0
    %1804 = vmatprep.subr.mxu0 0.0
    %1805 = vmatpush1.msra.mxu0 0.0
    %1806 = vmatprep.subr.mxu0 0.0
    %1807 = vmatpush1.msra.mxu0 0.0
    %1808 = vmatprep.subr.mxu0 0.0
    %1809 = vmatpush1.msra.mxu0 0.0
    %1810 = vmatprep.subr.mxu0 0.0
    %1811 = vmatpush1.msra.mxu0 0.0
    %1812 = vmatprep.subr.mxu0 0.0
    %1813 = vmatpush1.msra.mxu0 0.0
    %1814 = vmatprep.subr.mxu0 0.0
    %1815 = vmatpush1.msra.mxu0 0.0
    %1816 = vmatprep.subr.mxu0 0.0
    %1817 = vmatpush1.msra.mxu0 0.0
    %1818 = vmatprep.mubr.f32.mxu0 0.0
    %1819 = vmatmul.mubr.f32.gmra.mrb[0].mxu0 %v1682
    %v1820 = vpop.f32.mrb[0].mxu0
    %v1821 = vadd.f32 0.0, %v1820
    %v1822 = vpop.f32.mrb[0].mxu0
    %v1823 = vadd.f32 0.0, %v1822
    %1824 = vdwg.mxu0
    %1825 = vmatprep.subr.mxu0 %v1693
    %1826 = vmatpush1.msra.mxu0 %v1692
    %1827 = vmatprep.subr.mxu0 %v1697
    %1828 = vmatpush1.msra.mxu0 %v1696
    %1829 = vmatprep.subr.mxu0 %v1701
    %1830 = vmatpush1.msra.mxu0 %v1700
    %1831 = vmatprep.subr.mxu0 %v1705
    %1832 = vmatpush1.msra.mxu0 %v1704
    %1833 = vmatprep.subr.mxu0 %v1709
    %1834 = vmatpush1.msra.mxu0 %v1708
    %1835 = vmatprep.subr.mxu0 %v1713
    %1836 = vmatpush1.msra.mxu0 %v1712
    %1837 = vmatprep.subr.mxu0 %v1717
    %1838 = vmatpush1.msra.mxu0 %v1716
    %1839 = vmatprep.subr.mxu0 %v1721
    %1840 = vmatpush1.msra.mxu0 %v1720
    %1841 = vmatprep.subr.mxu0 %v1725
    %1842 = vmatpush1.msra.mxu0 %v1724
    %1843 = vmatprep.subr.mxu0 %v1729
    %1844 = vmatpush1.msra.mxu0 %v1728
    %1845 = vmatprep.subr.mxu0 %v1733
    %1846 = vmatpush1.msra.mxu0 %v1732
    %1847 = vmatprep.subr.mxu0 %v1737
    %1848 = vmatpush1.msra.mxu0 %v1736
    %1849 = vmatprep.subr.mxu0 %v1741
    %1850 = vmatpush1.msra.mxu0 %v1740
    %1851 = vmatprep.subr.mxu0 %v1745
    %1852 = vmatpush1.msra.mxu0 %v1744
    %1853 = vmatprep.subr.mxu0 %v1749
    %1854 = vmatpush1.msra.mxu0 %v1748
    %1855 = vmatprep.subr.mxu0 %v1753
    %1856 = vmatpush1.msra.mxu0 %v1752
    %1857 = vmatprep.subr.mxu0 0.0
    %1858 = vmatpush1.msra.mxu0 0.0
    %1859 = vmatprep.subr.mxu0 0.0
    %1860 = vmatpush1.msra.mxu0 0.0
    %1861 = vmatprep.subr.mxu0 0.0
    %1862 = vmatpush1.msra.mxu0 0.0
    %1863 = vmatprep.subr.mxu0 0.0
    %1864 = vmatpush1.msra.mxu0 0.0
    %1865 = vmatprep.subr.mxu0 0.0
    %1866 = vmatpush1.msra.mxu0 0.0
    %1867 = vmatprep.subr.mxu0 0.0
    %1868 = vmatpush1.msra.mxu0 0.0
    %1869 = vmatprep.subr.mxu0 0.0
    %1870 = vmatpush1.msra.mxu0 0.0
    %1871 = vmatprep.subr.mxu0 0.0
    %1872 = vmatpush1.msra.mxu0 0.0
    %1873 = vmatprep.subr.mxu0 0.0
    %1874 = vmatpush1.msra.mxu0 0.0
    %1875 = vmatprep.subr.mxu0 0.0
    %1876 = vmatpush1.msra.mxu0 0.0
    %1877 = vmatprep.subr.mxu0 0.0
    %1878 = vmatpush1.msra.mxu0 0.0
    %1879 = vmatprep.subr.mxu0 0.0
    %1880 = vmatpush1.msra.mxu0 0.0
    %1881 = vmatprep.subr.mxu0 0.0
    %1882 = vmatpush1.msra.mxu0 0.0
    %1883 = vmatprep.subr.mxu0 0.0
    %1884 = vmatpush1.msra.mxu0 0.0
    %1885 = vmatprep.subr.mxu0 0.0
    %1886 = vmatpush1.msra.mxu0 0.0
    %1887 = vmatprep.subr.mxu0 0.0
    %1888 = vmatpush1.msra.mxu0 0.0
    %1889 = vmatprep.mubr.f32.mxu0 0.0
    %1890 = vmatmul.mubr.f32.gmra.mrb[0].mxu0 %v1682
    %v1891 = vpop.f32.mrb[0].mxu0
    %v1892 = vadd.f32 0.0, %v1891
    %v1893 = vpop.f32.mrb[0].mxu0
    %v1894 = vadd.f32 0.0, %v1893
    %1895 = vdwg.mxu0
    %v1896 = vadd.f32 %v1686, %v1821
    %v1897 = vadd.f32 %v1687, %v1823
    %v1898 = vadd.f32 %v1688, %v1892
    %v1899 = vadd.f32 %v1689, %v1894
    %v1900 = vxor.u32 %v1896, 2147483648
    %v1901 = vmul.f32 %v1900, 1.442695
    %v1902 = vpow.pop %v1901
    %v1903 = vadd.f32 %v1902, 1.0
    %v1904 = vrcp.pop %v1903
    %v1905 = vmul.f32 1.0, %v1904
    %v1906 = vxor.u32 %v1897, 2147483648
    %v1907 = vmul.f32 %v1906, 1.442695
    %v1908 = vpow.pop %v1907
    %v1909 = vadd.f32 %v1908, 1.0
    %v1910 = vrcp.pop %v1909
    %v1911 = vmul.f32 1.0, %v1910
    %v1912 = vtanh.pop %v1898
    %v1913 = vxor.u32 %v1899, 2147483648
    %v1914 = vmul.f32 %v1913, 1.442695
    %v1915 = vpow.pop %v1914
    %v1916 = vadd.f32 %v1915, 1.0
    %v1917 = vrcp.pop %v1916
    %v1918 = vmul.f32 1.0, %v1917
    %v1919 = vmul.f32 %v1911, %v1680
    %v1920 = vmul.f32 %v1905, %v1912
    %v1921 = vadd.f32 %v1919, %v1920
    %v1922 = vtanh.pop %v1921
    %v1923 = vmul.f32 %v1918, %v1922
    %s1924 = scalar_lea.vmem [#allocation5], 40
    %1925 = vst [vmem:[%s1924] sm:$0xff] %v1923
    %s1926 = scalar_lea.vmem [#allocation4], 192
    %v1927 = vld [vmem:[%s1926] sm:$0xff]
    %v1928 = vld [vmem:[%s1926 + $0x8] sm:$0xff]
    %v1929 = vld [vmem:[%s1926 + $0x10] sm:$0xff]
    %v1930 = vld [vmem:[%s1926 + $0x18] sm:$0xff]
    %v1931 = vld [vmem:[#allocation8] sm:$0xff]
    %v1932 = vld [vmem:[#allocation8 + $0x8] sm:$0xff]
    %v1933 = vld [vmem:[#allocation8 + $0x10] sm:$0xff]
    %v1934 = vld [vmem:[#allocation8 + $0x18] sm:$0xff]
    %v1935 = vld [vmem:[#allocation8 + $0x20] sm:$0xff]
    %v1936 = vld [vmem:[#allocation8 + $0x28] sm:$0xff]
    %v1937 = vld [vmem:[#allocation8 + $0x30] sm:$0xff]
    %v1938 = vld [vmem:[#allocation8 + $0x38] sm:$0xff]
    %v1939 = vld [vmem:[#allocation8 + $0x40] sm:$0xff]
    %v1940 = vld [vmem:[#allocation8 + $0x48] sm:$0xff]
    %v1941 = vld [vmem:[#allocation8 + $0x50] sm:$0xff]
    %v1942 = vld [vmem:[#allocation8 + $0x58] sm:$0xff]
    %v1943 = vld [vmem:[#allocation8 + $0x60] sm:$0xff]
    %v1944 = vld [vmem:[#allocation8 + $0x68] sm:$0xff]
    %v1945 = vld [vmem:[#allocation8 + $0x70] sm:$0xff]
    %v1946 = vld [vmem:[#allocation8 + $0x78] sm:$0xff]
    %v1947 = vld [vmem:[#allocation8 + $0x80] sm:$0xff]
    %v1948 = vld [vmem:[#allocation8 + $0x88] sm:$0xff]
    %v1949 = vld [vmem:[#allocation8 + $0x90] sm:$0xff]
    %v1950 = vld [vmem:[#allocation8 + $0x98] sm:$0xff]
    %v1951 = vld [vmem:[#allocation8 + $0xa0] sm:$0xff]
    %v1952 = vld [vmem:[#allocation8 + $0xa8] sm:$0xff]
    %v1953 = vld [vmem:[#allocation8 + $0xb0] sm:$0xff]
    %v1954 = vld [vmem:[#allocation8 + $0xb8] sm:$0xff]
    %v1955 = vld [vmem:[#allocation8 + $0xc0] sm:$0xff]
    %v1956 = vld [vmem:[#allocation8 + $0xc8] sm:$0xff]
    %v1957 = vld [vmem:[#allocation8 + $0xd0] sm:$0xff]
    %v1958 = vld [vmem:[#allocation8 + $0xd8] sm:$0xff]
    %v1959 = vld [vmem:[#allocation8 + $0xe0] sm:$0xff]
    %v1960 = vld [vmem:[#allocation8 + $0xe8] sm:$0xff]
    %v1961 = vld [vmem:[#allocation8 + $0xf0] sm:$0xff]
    %v1962 = vld [vmem:[#allocation8 + $0xf8] sm:$0xff]
    %v1963 = vld [vmem:[#allocation8 + $0x100] sm:$0xff]
    %v1964 = vld [vmem:[#allocation8 + $0x108] sm:$0xff]
    %v1965 = vld [vmem:[#allocation8 + $0x110] sm:$0xff]
    %v1966 = vld [vmem:[#allocation8 + $0x118] sm:$0xff]
    %v1967 = vld [vmem:[#allocation8 + $0x120] sm:$0xff]
    %v1968 = vld [vmem:[#allocation8 + $0x128] sm:$0xff]
    %v1969 = vld [vmem:[#allocation8 + $0x130] sm:$0xff]
    %v1970 = vld [vmem:[#allocation8 + $0x138] sm:$0xff]
    %v1971 = vld [vmem:[#allocation8 + $0x140] sm:$0xff]
    %v1972 = vld [vmem:[#allocation8 + $0x148] sm:$0xff]
    %v1973 = vld [vmem:[#allocation8 + $0x150] sm:$0xff]
    %v1974 = vld [vmem:[#allocation8 + $0x158] sm:$0xff]
    %v1975 = vld [vmem:[#allocation8 + $0x160] sm:$0xff]
    %v1976 = vld [vmem:[#allocation8 + $0x168] sm:$0xff]
    %v1977 = vld [vmem:[#allocation8 + $0x170] sm:$0xff]
    %v1978 = vld [vmem:[#allocation8 + $0x178] sm:$0xff]
    %v1979 = vld [vmem:[#allocation8 + $0x180] sm:$0xff]
    %v1980 = vld [vmem:[#allocation8 + $0x188] sm:$0xff]
    %v1981 = vld [vmem:[#allocation8 + $0x190] sm:$0xff]
    %v1982 = vld [vmem:[#allocation8 + $0x198] sm:$0xff]
    %v1983 = vld [vmem:[#allocation8 + $0x1a0] sm:$0xff]
    %v1984 = vld [vmem:[#allocation8 + $0x1a8] sm:$0xff]
    %v1985 = vld [vmem:[#allocation8 + $0x1b0] sm:$0xff]
    %v1986 = vld [vmem:[#allocation8 + $0x1b8] sm:$0xff]
    %v1987 = vld [vmem:[#allocation8 + $0x1c0] sm:$0xff]
    %v1988 = vld [vmem:[#allocation8 + $0x1c8] sm:$0xff]
    %v1989 = vld [vmem:[#allocation8 + $0x1d0] sm:$0xff]
    %v1990 = vld [vmem:[#allocation8 + $0x1d8] sm:$0xff]
    %v1991 = vld [vmem:[#allocation8 + $0x1e0] sm:$0xff]
    %v1992 = vld [vmem:[#allocation8 + $0x1e8] sm:$0xff]
    %v1993 = vld [vmem:[#allocation8 + $0x1f0] sm:$0xff]
    %v1994 = vld [vmem:[#allocation8 + $0x1f8] sm:$0xff]
    %1995 = vmatprep.subr.mxu0 %v1932
    %1996 = vmatpush1.msra.mxu0 %v1931
    %1997 = vmatprep.subr.mxu0 %v1936
    %1998 = vmatpush1.msra.mxu0 %v1935
    %1999 = vmatprep.subr.mxu0 %v1940
    %2000 = vmatpush1.msra.mxu0 %v1939
    %2001 = vmatprep.subr.mxu0 %v1944
    %2002 = vmatpush1.msra.mxu0 %v1943
    %2003 = vmatprep.subr.mxu0 %v1948
    %2004 = vmatpush1.msra.mxu0 %v1947
    %2005 = vmatprep.subr.mxu0 %v1952
    %2006 = vmatpush1.msra.mxu0 %v1951
    %2007 = vmatprep.subr.mxu0 %v1956
    %2008 = vmatpush1.msra.mxu0 %v1955
    %2009 = vmatprep.subr.mxu0 %v1960
    %2010 = vmatpush1.msra.mxu0 %v1959
    %2011 = vmatprep.subr.mxu0 %v1964
    %2012 = vmatpush1.msra.mxu0 %v1963
    %2013 = vmatprep.subr.mxu0 %v1968
    %2014 = vmatpush1.msra.mxu0 %v1967
    %2015 = vmatprep.subr.mxu0 %v1972
    %2016 = vmatpush1.msra.mxu0 %v1971
    %2017 = vmatprep.subr.mxu0 %v1976
    %2018 = vmatpush1.msra.mxu0 %v1975
    %2019 = vmatprep.subr.mxu0 %v1980
    %2020 = vmatpush1.msra.mxu0 %v1979
    %2021 = vmatprep.subr.mxu0 %v1984
    %2022 = vmatpush1.msra.mxu0 %v1983
    %2023 = vmatprep.subr.mxu0 %v1988
    %2024 = vmatpush1.msra.mxu0 %v1987
    %2025 = vmatprep.subr.mxu0 %v1992
    %2026 = vmatpush1.msra.mxu0 %v1991
    %2027 = vmatprep.subr.mxu0 0.0
    %2028 = vmatpush1.msra.mxu0 0.0
    %2029 = vmatprep.subr.mxu0 0.0
    %2030 = vmatpush1.msra.mxu0 0.0
    %2031 = vmatprep.subr.mxu0 0.0
    %2032 = vmatpush1.msra.mxu0 0.0
    %2033 = vmatprep.subr.mxu0 0.0
    %2034 = vmatpush1.msra.mxu0 0.0
    %2035 = vmatprep.subr.mxu0 0.0
    %2036 = vmatpush1.msra.mxu0 0.0
    %2037 = vmatprep.subr.mxu0 0.0
    %2038 = vmatpush1.msra.mxu0 0.0
    %2039 = vmatprep.subr.mxu0 0.0
    %2040 = vmatpush1.msra.mxu0 0.0
    %2041 = vmatprep.subr.mxu0 0.0
    %2042 = vmatpush1.msra.mxu0 0.0
    %2043 = vmatprep.subr.mxu0 0.0
    %2044 = vmatpush1.msra.mxu0 0.0
    %2045 = vmatprep.subr.mxu0 0.0
    %2046 = vmatpush1.msra.mxu0 0.0
    %2047 = vmatprep.subr.mxu0 0.0
    %2048 = vmatpush1.msra.mxu0 0.0
    %2049 = vmatprep.subr.mxu0 0.0
    %2050 = vmatpush1.msra.mxu0 0.0
    %2051 = vmatprep.subr.mxu0 0.0
    %2052 = vmatpush1.msra.mxu0 0.0
    %2053 = vmatprep.subr.mxu0 0.0
    %2054 = vmatpush1.msra.mxu0 0.0
    %2055 = vmatprep.subr.mxu0 0.0
    %2056 = vmatpush1.msra.mxu0 0.0
    %2057 = vmatprep.subr.mxu0 0.0
    %2058 = vmatpush1.msra.mxu0 0.0
    %2059 = vmatprep.mubr.f32.mxu0 0.0
    %2060 = vmatmul.mubr.f32.gmra.mrb[0].mxu0 %v1923
    %v2061 = vpop.f32.mrb[0].mxu0
    %v2062 = vadd.f32 0.0, %v2061
    %v2063 = vpop.f32.mrb[0].mxu0
    %v2064 = vadd.f32 0.0, %v2063
    %2065 = vdwg.mxu0
    %2066 = vmatprep.subr.mxu0 %v1934
    %2067 = vmatpush1.msra.mxu0 %v1933
    %2068 = vmatprep.subr.mxu0 %v1938
    %2069 = vmatpush1.msra.mxu0 %v1937
    %2070 = vmatprep.subr.mxu0 %v1942
    %2071 = vmatpush1.msra.mxu0 %v1941
    %2072 = vmatprep.subr.mxu0 %v1946
    %2073 = vmatpush1.msra.mxu0 %v1945
    %2074 = vmatprep.subr.mxu0 %v1950
    %2075 = vmatpush1.msra.mxu0 %v1949
    %2076 = vmatprep.subr.mxu0 %v1954
    %2077 = vmatpush1.msra.mxu0 %v1953
    %2078 = vmatprep.subr.mxu0 %v1958
    %2079 = vmatpush1.msra.mxu0 %v1957
    %2080 = vmatprep.subr.mxu0 %v1962
    %2081 = vmatpush1.msra.mxu0 %v1961
    %2082 = vmatprep.subr.mxu0 %v1966
    %2083 = vmatpush1.msra.mxu0 %v1965
    %2084 = vmatprep.subr.mxu0 %v1970
    %2085 = vmatpush1.msra.mxu0 %v1969
    %2086 = vmatprep.subr.mxu0 %v1974
    %2087 = vmatpush1.msra.mxu0 %v1973
    %2088 = vmatprep.subr.mxu0 %v1978
    %2089 = vmatpush1.msra.mxu0 %v1977
    %2090 = vmatprep.subr.mxu0 %v1982
    %2091 = vmatpush1.msra.mxu0 %v1981
    %2092 = vmatprep.subr.mxu0 %v1986
    %2093 = vmatpush1.msra.mxu0 %v1985
    %2094 = vmatprep.subr.mxu0 %v1990
    %2095 = vmatpush1.msra.mxu0 %v1989
    %2096 = vmatprep.subr.mxu0 %v1994
    %2097 = vmatpush1.msra.mxu0 %v1993
    %2098 = vmatprep.subr.mxu0 0.0
    %2099 = vmatpush1.msra.mxu0 0.0
    %2100 = vmatprep.subr.mxu0 0.0
    %2101 = vmatpush1.msra.mxu0 0.0
    %2102 = vmatprep.subr.mxu0 0.0
    %2103 = vmatpush1.msra.mxu0 0.0
    %2104 = vmatprep.subr.mxu0 0.0
    %2105 = vmatpush1.msra.mxu0 0.0
    %2106 = vmatprep.subr.mxu0 0.0
    %2107 = vmatpush1.msra.mxu0 0.0
    %2108 = vmatprep.subr.mxu0 0.0
    %2109 = vmatpush1.msra.mxu0 0.0
    %2110 = vmatprep.subr.mxu0 0.0
    %2111 = vmatpush1.msra.mxu0 0.0
    %2112 = vmatprep.subr.mxu0 0.0
    %2113 = vmatpush1.msra.mxu0 0.0
    %2114 = vmatprep.subr.mxu0 0.0
    %2115 = vmatpush1.msra.mxu0 0.0
    %2116 = vmatprep.subr.mxu0 0.0
    %2117 = vmatpush1.msra.mxu0 0.0
    %2118 = vmatprep.subr.mxu0 0.0
    %2119 = vmatpush1.msra.mxu0 0.0
    %2120 = vmatprep.subr.mxu0 0.0
    %2121 = vmatpush1.msra.mxu0 0.0
    %2122 = vmatprep.subr.mxu0 0.0
    %2123 = vmatpush1.msra.mxu0 0.0
    %2124 = vmatprep.subr.mxu0 0.0
    %2125 = vmatpush1.msra.mxu0 0.0
    %2126 = vmatprep.subr.mxu0 0.0
    %2127 = vmatpush1.msra.mxu0 0.0
    %2128 = vmatprep.subr.mxu0 0.0
    %2129 = vmatpush1.msra.mxu0 0.0
    %2130 = vmatprep.mubr.f32.mxu0 0.0
    %2131 = vmatmul.mubr.f32.gmra.mrb[0].mxu0 %v1923
    %v2132 = vpop.f32.mrb[0].mxu0
    %v2133 = vadd.f32 0.0, %v2132
    %v2134 = vpop.f32.mrb[0].mxu0
    %v2135 = vadd.f32 0.0, %v2134
    %2136 = vdwg.mxu0
    %v2137 = vadd.f32 %v1927, %v2062
    %v2138 = vadd.f32 %v1928, %v2064
    %v2139 = vadd.f32 %v1929, %v2133
    %v2140 = vadd.f32 %v1930, %v2135
    %v2141 = vxor.u32 %v2137, 2147483648
    %v2142 = vmul.f32 %v2141, 1.442695
    %v2143 = vpow.pop %v2142
    %v2144 = vadd.f32 %v2143, 1.0
    %v2145 = vrcp.pop %v2144
    %v2146 = vmul.f32 1.0, %v2145
    %v2147 = vxor.u32 %v2138, 2147483648
    %v2148 = vmul.f32 %v2147, 1.442695
    %v2149 = vpow.pop %v2148
    %v2150 = vadd.f32 %v2149, 1.0
    %v2151 = vrcp.pop %v2150
    %v2152 = vmul.f32 1.0, %v2151
    %v2153 = vtanh.pop %v2139
    %v2154 = vxor.u32 %v2140, 2147483648
    %v2155 = vmul.f32 %v2154, 1.442695
    %v2156 = vpow.pop %v2155
    %v2157 = vadd.f32 %v2156, 1.0
    %v2158 = vrcp.pop %v2157
    %v2159 = vmul.f32 1.0, %v2158
    %v2160 = vmul.f32 %v2152, %v1921
    %v2161 = vmul.f32 %v2146, %v2153
    %v2162 = vadd.f32 %v2160, %v2161
    %v2163 = vtanh.pop %v2162
    %v2164 = vmul.f32 %v2159, %v2163
    %s2165 = scalar_lea.vmem [#allocation5], 48
    %2166 = vst [vmem:[%s2165] sm:$0xff] %v2164
    %s2167 = scalar_lea.vmem [#allocation4], 224
    %v2168 = vld [vmem:[%s2167] sm:$0xff]
    %v2169 = vld [vmem:[%s2167 + $0x8] sm:$0xff]
    %v2170 = vld [vmem:[%s2167 + $0x10] sm:$0xff]
    %v2171 = vld [vmem:[%s2167 + $0x18] sm:$0xff]
    %v2172 = vld [vmem:[#allocation8] sm:$0xff]
    %v2173 = vld [vmem:[#allocation8 + $0x8] sm:$0xff]
    %v2174 = vld [vmem:[#allocation8 + $0x10] sm:$0xff]
    %v2175 = vld [vmem:[#allocation8 + $0x18] sm:$0xff]
    %v2176 = vld [vmem:[#allocation8 + $0x20] sm:$0xff]
    %v2177 = vld [vmem:[#allocation8 + $0x28] sm:$0xff]
    %v2178 = vld [vmem:[#allocation8 + $0x30] sm:$0xff]
    %v2179 = vld [vmem:[#allocation8 + $0x38] sm:$0xff]
    %v2180 = vld [vmem:[#allocation8 + $0x40] sm:$0xff]
    %v2181 = vld [vmem:[#allocation8 + $0x48] sm:$0xff]
    %v2182 = vld [vmem:[#allocation8 + $0x50] sm:$0xff]
    %v2183 = vld [vmem:[#allocation8 + $0x58] sm:$0xff]
    %v2184 = vld [vmem:[#allocation8 + $0x60] sm:$0xff]
    %v2185 = vld [vmem:[#allocation8 + $0x68] sm:$0xff]
    %v2186 = vld [vmem:[#allocation8 + $0x70] sm:$0xff]
    %v2187 = vld [vmem:[#allocation8 + $0x78] sm:$0xff]
    %v2188 = vld [vmem:[#allocation8 + $0x80] sm:$0xff]
    %v2189 = vld [vmem:[#allocation8 + $0x88] sm:$0xff]
    %v2190 = vld [vmem:[#allocation8 + $0x90] sm:$0xff]
    %v2191 = vld [vmem:[#allocation8 + $0x98] sm:$0xff]
    %v2192 = vld [vmem:[#allocation8 + $0xa0] sm:$0xff]
    %v2193 = vld [vmem:[#allocation8 + $0xa8] sm:$0xff]
    %v2194 = vld [vmem:[#allocation8 + $0xb0] sm:$0xff]
    %v2195 = vld [vmem:[#allocation8 + $0xb8] sm:$0xff]
    %v2196 = vld [vmem:[#allocation8 + $0xc0] sm:$0xff]
    %v2197 = vld [vmem:[#allocation8 + $0xc8] sm:$0xff]
    %v2198 = vld [vmem:[#allocation8 + $0xd0] sm:$0xff]
    %v2199 = vld [vmem:[#allocation8 + $0xd8] sm:$0xff]
    %v2200 = vld [vmem:[#allocation8 + $0xe0] sm:$0xff]
    %v2201 = vld [vmem:[#allocation8 + $0xe8] sm:$0xff]
    %v2202 = vld [vmem:[#allocation8 + $0xf0] sm:$0xff]
    %v2203 = vld [vmem:[#allocation8 + $0xf8] sm:$0xff]
    %v2204 = vld [vmem:[#allocation8 + $0x100] sm:$0xff]
    %v2205 = vld [vmem:[#allocation8 + $0x108] sm:$0xff]
    %v2206 = vld [vmem:[#allocation8 + $0x110] sm:$0xff]
    %v2207 = vld [vmem:[#allocation8 + $0x118] sm:$0xff]
    %v2208 = vld [vmem:[#allocation8 + $0x120] sm:$0xff]
    %v2209 = vld [vmem:[#allocation8 + $0x128] sm:$0xff]
    %v2210 = vld [vmem:[#allocation8 + $0x130] sm:$0xff]
    %v2211 = vld [vmem:[#allocation8 + $0x138] sm:$0xff]
    %v2212 = vld [vmem:[#allocation8 + $0x140] sm:$0xff]
    %v2213 = vld [vmem:[#allocation8 + $0x148] sm:$0xff]
    %v2214 = vld [vmem:[#allocation8 + $0x150] sm:$0xff]
    %v2215 = vld [vmem:[#allocation8 + $0x158] sm:$0xff]
    %v2216 = vld [vmem:[#allocation8 + $0x160] sm:$0xff]
    %v2217 = vld [vmem:[#allocation8 + $0x168] sm:$0xff]
    %v2218 = vld [vmem:[#allocation8 + $0x170] sm:$0xff]
    %v2219 = vld [vmem:[#allocation8 + $0x178] sm:$0xff]
    %v2220 = vld [vmem:[#allocation8 + $0x180] sm:$0xff]
    %v2221 = vld [vmem:[#allocation8 + $0x188] sm:$0xff]
    %v2222 = vld [vmem:[#allocation8 + $0x190] sm:$0xff]
    %v2223 = vld [vmem:[#allocation8 + $0x198] sm:$0xff]
    %v2224 = vld [vmem:[#allocation8 + $0x1a0] sm:$0xff]
    %v2225 = vld [vmem:[#allocation8 + $0x1a8] sm:$0xff]
    %v2226 = vld [vmem:[#allocation8 + $0x1b0] sm:$0xff]
    %v2227 = vld [vmem:[#allocation8 + $0x1b8] sm:$0xff]
    %v2228 = vld [vmem:[#allocation8 + $0x1c0] sm:$0xff]
    %v2229 = vld [vmem:[#allocation8 + $0x1c8] sm:$0xff]
    %v2230 = vld [vmem:[#allocation8 + $0x1d0] sm:$0xff]
    %v2231 = vld [vmem:[#allocation8 + $0x1d8] sm:$0xff]
    %v2232 = vld [vmem:[#allocation8 + $0x1e0] sm:$0xff]
    %v2233 = vld [vmem:[#allocation8 + $0x1e8] sm:$0xff]
    %v2234 = vld [vmem:[#allocation8 + $0x1f0] sm:$0xff]
    %v2235 = vld [vmem:[#allocation8 + $0x1f8] sm:$0xff]
    %2236 = vmatprep.subr.mxu0 %v2173
    %2237 = vmatpush1.msra.mxu0 %v2172
    %2238 = vmatprep.subr.mxu0 %v2177
    %2239 = vmatpush1.msra.mxu0 %v2176
    %2240 = vmatprep.subr.mxu0 %v2181
    %2241 = vmatpush1.msra.mxu0 %v2180
    %2242 = vmatprep.subr.mxu0 %v2185
    %2243 = vmatpush1.msra.mxu0 %v2184
    %2244 = vmatprep.subr.mxu0 %v2189
    %2245 = vmatpush1.msra.mxu0 %v2188
    %2246 = vmatprep.subr.mxu0 %v2193
    %2247 = vmatpush1.msra.mxu0 %v2192
    %2248 = vmatprep.subr.mxu0 %v2197
    %2249 = vmatpush1.msra.mxu0 %v2196
    %2250 = vmatprep.subr.mxu0 %v2201
    %2251 = vmatpush1.msra.mxu0 %v2200
    %2252 = vmatprep.subr.mxu0 %v2205
    %2253 = vmatpush1.msra.mxu0 %v2204
    %2254 = vmatprep.subr.mxu0 %v2209
    %2255 = vmatpush1.msra.mxu0 %v2208
    %2256 = vmatprep.subr.mxu0 %v2213
    %2257 = vmatpush1.msra.mxu0 %v2212
    %2258 = vmatprep.subr.mxu0 %v2217
    %2259 = vmatpush1.msra.mxu0 %v2216
    %2260 = vmatprep.subr.mxu0 %v2221
    %2261 = vmatpush1.msra.mxu0 %v2220
    %2262 = vmatprep.subr.mxu0 %v2225
    %2263 = vmatpush1.msra.mxu0 %v2224
    %2264 = vmatprep.subr.mxu0 %v2229
    %2265 = vmatpush1.msra.mxu0 %v2228
    %2266 = vmatprep.subr.mxu0 %v2233
    %2267 = vmatpush1.msra.mxu0 %v2232
    %2268 = vmatprep.subr.mxu0 0.0
    %2269 = vmatpush1.msra.mxu0 0.0
    %2270 = vmatprep.subr.mxu0 0.0
    %2271 = vmatpush1.msra.mxu0 0.0
    %2272 = vmatprep.subr.mxu0 0.0
    %2273 = vmatpush1.msra.mxu0 0.0
    %2274 = vmatprep.subr.mxu0 0.0
    %2275 = vmatpush1.msra.mxu0 0.0
    %2276 = vmatprep.subr.mxu0 0.0
    %2277 = vmatpush1.msra.mxu0 0.0
    %2278 = vmatprep.subr.mxu0 0.0
    %2279 = vmatpush1.msra.mxu0 0.0
    %2280 = vmatprep.subr.mxu0 0.0
    %2281 = vmatpush1.msra.mxu0 0.0
    %2282 = vmatprep.subr.mxu0 0.0
    %2283 = vmatpush1.msra.mxu0 0.0
    %2284 = vmatprep.subr.mxu0 0.0
    %2285 = vmatpush1.msra.mxu0 0.0
    %2286 = vmatprep.subr.mxu0 0.0
    %2287 = vmatpush1.msra.mxu0 0.0
    %2288 = vmatprep.subr.mxu0 0.0
    %2289 = vmatpush1.msra.mxu0 0.0
    %2290 = vmatprep.subr.mxu0 0.0
    %2291 = vmatpush1.msra.mxu0 0.0
    %2292 = vmatprep.subr.mxu0 0.0
    %2293 = vmatpush1.msra.mxu0 0.0
    %2294 = vmatprep.subr.mxu0 0.0
    %2295 = vmatpush1.msra.mxu0 0.0
    %2296 = vmatprep.subr.mxu0 0.0
    %2297 = vmatpush1.msra.mxu0 0.0
    %2298 = vmatprep.subr.mxu0 0.0
    %2299 = vmatpush1.msra.mxu0 0.0
    %2300 = vmatprep.mubr.f32.mxu0 0.0
    %2301 = vmatmul.mubr.f32.gmra.mrb[0].mxu0 %v2164
    %v2302 = vpop.f32.mrb[0].mxu0
    %v2303 = vadd.f32 0.0, %v2302
    %v2304 = vpop.f32.mrb[0].mxu0
    %v2305 = vadd.f32 0.0, %v2304
    %2306 = vdwg.mxu0
    %2307 = vmatprep.subr.mxu0 %v2175
    %2308 = vmatpush1.msra.mxu0 %v2174
    %2309 = vmatprep.subr.mxu0 %v2179
    %2310 = vmatpush1.msra.mxu0 %v2178
    %2311 = vmatprep.subr.mxu0 %v2183
    %2312 = vmatpush1.msra.mxu0 %v2182
    %2313 = vmatprep.subr.mxu0 %v2187
    %2314 = vmatpush1.msra.mxu0 %v2186
    %2315 = vmatprep.subr.mxu0 %v2191
    %2316 = vmatpush1.msra.mxu0 %v2190
    %2317 = vmatprep.subr.mxu0 %v2195
    %2318 = vmatpush1.msra.mxu0 %v2194
    %2319 = vmatprep.subr.mxu0 %v2199
    %2320 = vmatpush1.msra.mxu0 %v2198
    %2321 = vmatprep.subr.mxu0 %v2203
    %2322 = vmatpush1.msra.mxu0 %v2202
    %2323 = vmatprep.subr.mxu0 %v2207
    %2324 = vmatpush1.msra.mxu0 %v2206
    %2325 = vmatprep.subr.mxu0 %v2211
    %2326 = vmatpush1.msra.mxu0 %v2210
    %2327 = vmatprep.subr.mxu0 %v2215
    %2328 = vmatpush1.msra.mxu0 %v2214
    %2329 = vmatprep.subr.mxu0 %v2219
    %2330 = vmatpush1.msra.mxu0 %v2218
    %2331 = vmatprep.subr.mxu0 %v2223
    %2332 = vmatpush1.msra.mxu0 %v2222
    %2333 = vmatprep.subr.mxu0 %v2227
    %2334 = vmatpush1.msra.mxu0 %v2226
    %2335 = vmatprep.subr.mxu0 %v2231
    %2336 = vmatpush1.msra.mxu0 %v2230
    %2337 = vmatprep.subr.mxu0 %v2235
    %2338 = vmatpush1.msra.mxu0 %v2234
    %2339 = vmatprep.subr.mxu0 0.0
    %2340 = vmatpush1.msra.mxu0 0.0
    %2341 = vmatprep.subr.mxu0 0.0
    %2342 = vmatpush1.msra.mxu0 0.0
    %2343 = vmatprep.subr.mxu0 0.0
    %2344 = vmatpush1.msra.mxu0 0.0
    %2345 = vmatprep.subr.mxu0 0.0
    %2346 = vmatpush1.msra.mxu0 0.0
    %2347 = vmatprep.subr.mxu0 0.0
    %2348 = vmatpush1.msra.mxu0 0.0
    %2349 = vmatprep.subr.mxu0 0.0
    %2350 = vmatpush1.msra.mxu0 0.0
    %2351 = vmatprep.subr.mxu0 0.0
    %2352 = vmatpush1.msra.mxu0 0.0
    %2353 = vmatprep.subr.mxu0 0.0
    %2354 = vmatpush1.msra.mxu0 0.0
    %2355 = vmatprep.subr.mxu0 0.0
    %2356 = vmatpush1.msra.mxu0 0.0
    %2357 = vmatprep.subr.mxu0 0.0
    %2358 = vmatpush1.msra.mxu0 0.0
    %2359 = vmatprep.subr.mxu0 0.0
    %2360 = vmatpush1.msra.mxu0 0.0
    %2361 = vmatprep.subr.mxu0 0.0
    %2362 = vmatpush1.msra.mxu0 0.0
    %2363 = vmatprep.subr.mxu0 0.0
    %2364 = vmatpush1.msra.mxu0 0.0
    %2365 = vmatprep.subr.mxu0 0.0
    %2366 = vmatpush1.msra.mxu0 0.0
    %2367 = vmatprep.subr.mxu0 0.0
    %2368 = vmatpush1.msra.mxu0 0.0
    %2369 = vmatprep.subr.mxu0 0.0
    %2370 = vmatpush1.msra.mxu0 0.0
    %2371 = vmatprep.mubr.f32.mxu0 0.0
    %2372 = vmatmul.mubr.f32.gmra.mrb[0].mxu0 %v2164
    %v2373 = vpop.f32.mrb[0].mxu0
    %v2374 = vadd.f32 0.0, %v2373
    %v2375 = vpop.f32.mrb[0].mxu0
    %v2376 = vadd.f32 0.0, %v2375
    %2377 = vdwg.mxu0
    %v2378 = vadd.f32 %v2168, %v2303
    %v2379 = vadd.f32 %v2169, %v2305
    %v2380 = vadd.f32 %v2170, %v2374
    %v2381 = vadd.f32 %v2171, %v2376
    %v2382 = vxor.u32 %v2378, 2147483648
    %v2383 = vmul.f32 %v2382, 1.442695
    %v2384 = vpow.pop %v2383
    %v2385 = vadd.f32 %v2384, 1.0
    %v2386 = vrcp.pop %v2385
    %v2387 = vmul.f32 1.0, %v2386
    %v2388 = vxor.u32 %v2379, 2147483648
    %v2389 = vmul.f32 %v2388, 1.442695
    %v2390 = vpow.pop %v2389
    %v2391 = vadd.f32 %v2390, 1.0
    %v2392 = vrcp.pop %v2391
    %v2393 = vmul.f32 1.0, %v2392
    %v2394 = vtanh.pop %v2380
    %v2395 = vxor.u32 %v2381, 2147483648
    %v2396 = vmul.f32 %v2395, 1.442695
    %v2397 = vpow.pop %v2396
    %v2398 = vadd.f32 %v2397, 1.0
    %v2399 = vrcp.pop %v2398
    %v2400 = vmul.f32 1.0, %v2399
    %v2401 = vmul.f32 %v2393, %v2162
    %v2402 = vmul.f32 %v2387, %v2394
    %v2403 = vadd.f32 %v2401, %v2402
    %v2404 = vtanh.pop %v2403
    %v2405 = vmul.f32 %v2400, %v2404
    %s2406 = scalar_lea.vmem [#allocation5], 56
    %2407 = vst [vmem:[%s2406] sm:$0xff] %v2405
    %2408 = vst [vmem:[#allocation2] sm:$0xff] %v2405
    %2409 = vst [vmem:[#allocation3] sm:$0xff] %v2403
    // Predicated region
    $region62: #{tpu_custom_call.1} parent=1 // pred_check
      %p2410 = pneg %p60
    $region63: #{tpu_custom_call.1} parent=1 // pred_check_branch
      %2412 = sbr.rel (%p2410) target = $region65
    $region64: #{tpu_custom_call.1} parent=1 // pred_region
      %s2413 = scalar_lea.sflag [#allocation10], 1
      %s2414 = smul.u32 8, 16
      %s2415 = smul.u32 %s2414, 4
      %s2416 = sshll.u32 %s2415, 4
      %2417 = dma.done %s2413, %s2416
    $region65: #{tpu_custom_call.1} parent=1 // pred_fallthru
      _
    %v2418 = vld [vmem:[#allocation5] sm:$0xff]
    %v2419 = vld [vmem:[#allocation5 + $0x8] sm:$0xff]
    %v2420 = vld [vmem:[#allocation5 + $0x10] sm:$0xff]
    %v2421 = vld [vmem:[#allocation5 + $0x18] sm:$0xff]
    %v2422 = vld [vmem:[#allocation5 + $0x20] sm:$0xff]
    %v2423 = vld [vmem:[#allocation5 + $0x28] sm:$0xff]
    %v2424 = vld [vmem:[#allocation5 + $0x30] sm:$0xff]
    %v2425 = vld [vmem:[#allocation5 + $0x38] sm:$0xff]
    %v2426 = vld [vmem:[#allocation7] sm:$0xff]
    %v2427 = vld [vmem:[#allocation7 + $0x8] sm:$0xff]
    %v2428 = vld [vmem:[#allocation7 + $0x10] sm:$0xff]
    %v2429 = vld [vmem:[#allocation7 + $0x18] sm:$0xff]
    %v2430 = vld [vmem:[#allocation7 + $0x20] sm:$0xff]
    %v2431 = vld [vmem:[#allocation7 + $0x28] sm:$0xff]
    %v2432 = vld [vmem:[#allocation7 + $0x30] sm:$0xff]
    %v2433 = vld [vmem:[#allocation7 + $0x38] sm:$0xff]
    %v2434 = vld [vmem:[#allocation7 + $0x40] sm:$0xff]
    %v2435 = vld [vmem:[#allocation7 + $0x48] sm:$0xff]
    %v2436 = vld [vmem:[#allocation7 + $0x50] sm:$0xff]
    %v2437 = vld [vmem:[#allocation7 + $0x58] sm:$0xff]
    %v2438 = vld [vmem:[#allocation7 + $0x60] sm:$0xff]
    %v2439 = vld [vmem:[#allocation7 + $0x68] sm:$0xff]
    %v2440 = vld [vmem:[#allocation7 + $0x70] sm:$0xff]
    %v2441 = vld [vmem:[#allocation7 + $0x78] sm:$0xff]
    %v2442 = vld [vmem:[#allocation7 + $0x80] sm:$0xff]
    %v2443 = vld [vmem:[#allocation7 + $0x88] sm:$0xff]
    %v2444 = vld [vmem:[#allocation7 + $0x90] sm:$0xff]
    %v2445 = vld [vmem:[#allocation7 + $0x98] sm:$0xff]
    %v2446 = vld [vmem:[#allocation7 + $0xa0] sm:$0xff]
    %v2447 = vld [vmem:[#allocation7 + $0xa8] sm:$0xff]
    %v2448 = vld [vmem:[#allocation7 + $0xb0] sm:$0xff]
    %v2449 = vld [vmem:[#allocation7 + $0xb8] sm:$0xff]
    %v2450 = vld [vmem:[#allocation7 + $0xc0] sm:$0xff]
    %v2451 = vld [vmem:[#allocation7 + $0xc8] sm:$0xff]
    %v2452 = vld [vmem:[#allocation7 + $0xd0] sm:$0xff]
    %v2453 = vld [vmem:[#allocation7 + $0xd8] sm:$0xff]
    %v2454 = vld [vmem:[#allocation7 + $0xe0] sm:$0xff]
    %v2455 = vld [vmem:[#allocation7 + $0xe8] sm:$0xff]
    %v2456 = vld [vmem:[#allocation7 + $0xf0] sm:$0xff]
    %v2457 = vld [vmem:[#allocation7 + $0xf8] sm:$0xff]
    %v2458 = vld [vmem:[#allocation7 + $0x100] sm:$0xff]
    %v2459 = vld [vmem:[#allocation7 + $0x108] sm:$0xff]
    %v2460 = vld [vmem:[#allocation7 + $0x110] sm:$0xff]
    %v2461 = vld [vmem:[#allocation7 + $0x118] sm:$0xff]
    %v2462 = vld [vmem:[#allocation7 + $0x120] sm:$0xff]
    %v2463 = vld [vmem:[#allocation7 + $0x128] sm:$0xff]
    %v2464 = vld [vmem:[#allocation7 + $0x130] sm:$0xff]
    %v2465 = vld [vmem:[#allocation7 + $0x138] sm:$0xff]
    %v2466 = vld [vmem:[#allocation7 + $0x140] sm:$0xff]
    %v2467 = vld [vmem:[#allocation7 + $0x148] sm:$0xff]
    %v2468 = vld [vmem:[#allocation7 + $0x150] sm:$0xff]
    %v2469 = vld [vmem:[#allocation7 + $0x158] sm:$0xff]
    %v2470 = vld [vmem:[#allocation7 + $0x160] sm:$0xff]
    %v2471 = vld [vmem:[#allocation7 + $0x168] sm:$0xff]
    %v2472 = vld [vmem:[#allocation7 + $0x170] sm:$0xff]
    %v2473 = vld [vmem:[#allocation7 + $0x178] sm:$0xff]
    %v2474 = vld [vmem:[#allocation7 + $0x180] sm:$0xff]
    %v2475 = vld [vmem:[#allocation7 + $0x188] sm:$0xff]
    %v2476 = vld [vmem:[#allocation7 + $0x190] sm:$0xff]
    %v2477 = vld [vmem:[#allocation7 + $0x198] sm:$0xff]
    %v2478 = vld [vmem:[#allocation7 + $0x1a0] sm:$0xff]
    %v2479 = vld [vmem:[#allocation7 + $0x1a8] sm:$0xff]
    %v2480 = vld [vmem:[#allocation7 + $0x1b0] sm:$0xff]
    %v2481 = vld [vmem:[#allocation7 + $0x1b8] sm:$0xff]
    %v2482 = vld [vmem:[#allocation7 + $0x1c0] sm:$0xff]
    %v2483 = vld [vmem:[#allocation7 + $0x1c8] sm:$0xff]
    %v2484 = vld [vmem:[#allocation7 + $0x1d0] sm:$0xff]
    %v2485 = vld [vmem:[#allocation7 + $0x1d8] sm:$0xff]
    %v2486 = vld [vmem:[#allocation7 + $0x1e0] sm:$0xff]
    %v2487 = vld [vmem:[#allocation7 + $0x1e8] sm:$0xff]
    %v2488 = vld [vmem:[#allocation7 + $0x1f0] sm:$0xff]
    %v2489 = vld [vmem:[#allocation7 + $0x1f8] sm:$0xff]
    %2490 = vmatprep.subr.mxu0 %v2427
    %2491 = vmatpush1.msra.mxu0 %v2426
    %2492 = vmatprep.subr.mxu0 %v2431
    %2493 = vmatpush1.msra.mxu0 %v2430
    %2494 = vmatprep.subr.mxu0 %v2435
    %2495 = vmatpush1.msra.mxu0 %v2434
    %2496 = vmatprep.subr.mxu0 %v2439
    %2497 = vmatpush1.msra.mxu0 %v2438
    %2498 = vmatprep.subr.mxu0 %v2443
    %2499 = vmatpush1.msra.mxu0 %v2442
    %2500 = vmatprep.subr.mxu0 %v2447
    %2501 = vmatpush1.msra.mxu0 %v2446
    %2502 = vmatprep.subr.mxu0 %v2451
    %2503 = vmatpush1.msra.mxu0 %v2450
    %2504 = vmatprep.subr.mxu0 %v2455
    %2505 = vmatpush1.msra.mxu0 %v2454
    %2506 = vmatprep.subr.mxu0 %v2459
    %2507 = vmatpush1.msra.mxu0 %v2458
    %2508 = vmatprep.subr.mxu0 %v2463
    %2509 = vmatpush1.msra.mxu0 %v2462
    %2510 = vmatprep.subr.mxu0 %v2467
    %2511 = vmatpush1.msra.mxu0 %v2466
    %2512 = vmatprep.subr.mxu0 %v2471
    %2513 = vmatpush1.msra.mxu0 %v2470
    %2514 = vmatprep.subr.mxu0 %v2475
    %2515 = vmatpush1.msra.mxu0 %v2474
    %2516 = vmatprep.subr.mxu0 %v2479
    %2517 = vmatpush1.msra.mxu0 %v2478
    %2518 = vmatprep.subr.mxu0 %v2483
    %2519 = vmatpush1.msra.mxu0 %v2482
    %2520 = vmatprep.subr.mxu0 %v2487
    %2521 = vmatpush1.msra.mxu0 %v2486
    %2522 = vmatprep.subr.mxu0 0.0
    %2523 = vmatpush1.msra.mxu0 0.0
    %2524 = vmatprep.subr.mxu0 0.0
    %2525 = vmatpush1.msra.mxu0 0.0
    %2526 = vmatprep.subr.mxu0 0.0
    %2527 = vmatpush1.msra.mxu0 0.0
    %2528 = vmatprep.subr.mxu0 0.0
    %2529 = vmatpush1.msra.mxu0 0.0
    %2530 = vmatprep.subr.mxu0 0.0
    %2531 = vmatpush1.msra.mxu0 0.0
    %2532 = vmatprep.subr.mxu0 0.0
    %2533 = vmatpush1.msra.mxu0 0.0
    %2534 = vmatprep.subr.mxu0 0.0
    %2535 = vmatpush1.msra.mxu0 0.0
    %2536 = vmatprep.subr.mxu0 0.0
    %2537 = vmatpush1.msra.mxu0 0.0
    %2538 = vmatprep.subr.mxu0 0.0
    %2539 = vmatpush1.msra.mxu0 0.0
    %2540 = vmatprep.subr.mxu0 0.0
    %2541 = vmatpush1.msra.mxu0 0.0
    %2542 = vmatprep.subr.mxu0 0.0
    %2543 = vmatpush1.msra.mxu0 0.0
    %2544 = vmatprep.subr.mxu0 0.0
    %2545 = vmatpush1.msra.mxu0 0.0
    %2546 = vmatprep.subr.mxu0 0.0
    %2547 = vmatpush1.msra.mxu0 0.0
    %2548 = vmatprep.subr.mxu0 0.0
    %2549 = vmatpush1.msra.mxu0 0.0
    %2550 = vmatprep.subr.mxu0 0.0
    %2551 = vmatpush1.msra.mxu0 0.0
    %2552 = vmatprep.subr.mxu0 0.0
    %2553 = vmatpush1.msra.mxu0 0.0
    %2554 = vmatprep.mubr.f32.mxu0 0.0
    %2555 = vmatmul.mubr.f32.gmra.mrb[0].mxu0 %v2418
    %v2556 = vpop.f32.mrb[0].mxu0
    %v2557 = vadd.f32 0.0, %v2556
    %v2558 = vpop.f32.mrb[0].mxu0
    %v2559 = vadd.f32 0.0, %v2558
    %2560 = vmatprep.mubr.f32.mxu0 0.0
    %2561 = vmatmul.mubr.f32.gmra.mrb[0].mxu0 %v2419
    %v2562 = vpop.f32.mrb[0].mxu0
    %v2563 = vadd.f32 0.0, %v2562
    %v2564 = vpop.f32.mrb[0].mxu0
    %v2565 = vadd.f32 0.0, %v2564
    %2566 = vmatprep.mubr.f32.mxu0 0.0
    %2567 = vmatmul.mubr.f32.gmra.mrb[0].mxu0 %v2420
    %v2568 = vpop.f32.mrb[0].mxu0
    %v2569 = vadd.f32 0.0, %v2568
    %v2570 = vpop.f32.mrb[0].mxu0
    %v2571 = vadd.f32 0.0, %v2570
    %2572 = vmatprep.mubr.f32.mxu0 0.0
    %2573 = vmatmul.mubr.f32.gmra.mrb[0].mxu0 %v2421
    %v2574 = vpop.f32.mrb[0].mxu0
    %v2575 = vadd.f32 0.0, %v2574
    %v2576 = vpop.f32.mrb[0].mxu0
    %v2577 = vadd.f32 0.0, %v2576
    %2578 = vmatprep.mubr.f32.mxu0 0.0
    %2579 = vmatmul.mubr.f32.gmra.mrb[0].mxu0 %v2422
    %v2580 = vpop.f32.mrb[0].mxu0
    %v2581 = vadd.f32 0.0, %v2580
    %v2582 = vpop.f32.mrb[0].mxu0
    %v2583 = vadd.f32 0.0, %v2582
    %2584 = vmatprep.mubr.f32.mxu0 0.0
    %2585 = vmatmul.mubr.f32.gmra.mrb[0].mxu0 %v2423
    %v2586 = vpop.f32.mrb[0].mxu0
    %v2587 = vadd.f32 0.0, %v2586
    %v2588 = vpop.f32.mrb[0].mxu0
    %v2589 = vadd.f32 0.0, %v2588
    %2590 = vmatprep.mubr.f32.mxu0 0.0
    %2591 = vmatmul.mubr.f32.gmra.mrb[0].mxu0 %v2424
    %v2592 = vpop.f32.mrb[0].mxu0
    %v2593 = vadd.f32 0.0, %v2592
    %v2594 = vpop.f32.mrb[0].mxu0
    %v2595 = vadd.f32 0.0, %v2594
    %2596 = vmatprep.mubr.f32.mxu0 0.0
    %2597 = vmatmul.mubr.f32.gmra.mrb[0].mxu0 %v2425
    %v2598 = vpop.f32.mrb[0].mxu0
    %v2599 = vadd.f32 0.0, %v2598
    %v2600 = vpop.f32.mrb[0].mxu0
    %v2601 = vadd.f32 0.0, %v2600
    %2602 = vdwg.mxu0
    %2603 = vmatprep.subr.mxu0 %v2429
    %2604 = vmatpush1.msra.mxu0 %v2428
    %2605 = vmatprep.subr.mxu0 %v2433
    %2606 = vmatpush1.msra.mxu0 %v2432
    %2607 = vmatprep.subr.mxu0 %v2437
    %2608 = vmatpush1.msra.mxu0 %v2436
    %2609 = vmatprep.subr.mxu0 %v2441
    %2610 = vmatpush1.msra.mxu0 %v2440
    %2611 = vmatprep.subr.mxu0 %v2445
    %2612 = vmatpush1.msra.mxu0 %v2444
    %2613 = vmatprep.subr.mxu0 %v2449
    %2614 = vmatpush1.msra.mxu0 %v2448
    %2615 = vmatprep.subr.mxu0 %v2453
    %2616 = vmatpush1.msra.mxu0 %v2452
    %2617 = vmatprep.subr.mxu0 %v2457
    %2618 = vmatpush1.msra.mxu0 %v2456
    %2619 = vmatprep.subr.mxu0 %v2461
    %2620 = vmatpush1.msra.mxu0 %v2460
    %2621 = vmatprep.subr.mxu0 %v2465
    %2622 = vmatpush1.msra.mxu0 %v2464
    %2623 = vmatprep.subr.mxu0 %v2469
    %2624 = vmatpush1.msra.mxu0 %v2468
    %2625 = vmatprep.subr.mxu0 %v2473
    %2626 = vmatpush1.msra.mxu0 %v2472
    %2627 = vmatprep.subr.mxu0 %v2477
    %2628 = vmatpush1.msra.mxu0 %v2476
    %2629 = vmatprep.subr.mxu0 %v2481
    %2630 = vmatpush1.msra.mxu0 %v2480
    %2631 = vmatprep.subr.mxu0 %v2485
    %2632 = vmatpush1.msra.mxu0 %v2484
    %2633 = vmatprep.subr.mxu0 %v2489
    %2634 = vmatpush1.msra.mxu0 %v2488
    %2635 = vmatprep.subr.mxu0 0.0
    %2636 = vmatpush1.msra.mxu0 0.0
    %2637 = vmatprep.subr.mxu0 0.0
    %2638 = vmatpush1.msra.mxu0 0.0
    %2639 = vmatprep.subr.mxu0 0.0
    %2640 = vmatpush1.msra.mxu0 0.0
    %2641 = vmatprep.subr.mxu0 0.0
    %2642 = vmatpush1.msra.mxu0 0.0
    %2643 = vmatprep.subr.mxu0 0.0
    %2644 = vmatpush1.msra.mxu0 0.0
    %2645 = vmatprep.subr.mxu0 0.0
    %2646 = vmatpush1.msra.mxu0 0.0
    %2647 = vmatprep.subr.mxu0 0.0
    %2648 = vmatpush1.msra.mxu0 0.0
    %2649 = vmatprep.subr.mxu0 0.0
    %2650 = vmatpush1.msra.mxu0 0.0
    %2651 = vmatprep.subr.mxu0 0.0
    %2652 = vmatpush1.msra.mxu0 0.0
    %2653 = vmatprep.subr.mxu0 0.0
    %2654 = vmatpush1.msra.mxu0 0.0
    %2655 = vmatprep.subr.mxu0 0.0
    %2656 = vmatpush1.msra.mxu0 0.0
    %2657 = vmatprep.subr.mxu0 0.0
    %2658 = vmatpush1.msra.mxu0 0.0
    %2659 = vmatprep.subr.mxu0 0.0
    %2660 = vmatpush1.msra.mxu0 0.0
    %2661 = vmatprep.subr.mxu0 0.0
    %2662 = vmatpush1.msra.mxu0 0.0
    %2663 = vmatprep.subr.mxu0 0.0
    %2664 = vmatpush1.msra.mxu0 0.0
    %2665 = vmatprep.subr.mxu0 0.0
    %2666 = vmatpush1.msra.mxu0 0.0
    %2667 = vmatprep.mubr.f32.mxu0 0.0
    %2668 = vmatmul.mubr.f32.gmra.mrb[0].mxu0 %v2418
    %v2669 = vpop.f32.mrb[0].mxu0
    %v2670 = vadd.f32 0.0, %v2669
    %v2671 = vpop.f32.mrb[0].mxu0
    %v2672 = vadd.f32 0.0, %v2671
    %2673 = vmatprep.mubr.f32.mxu0 0.0
    %2674 = vmatmul.mubr.f32.gmra.mrb[0].mxu0 %v2419
    %v2675 = vpop.f32.mrb[0].mxu0
    %v2676 = vadd.f32 0.0, %v2675
    %v2677 = vpop.f32.mrb[0].mxu0
    %v2678 = vadd.f32 0.0, %v2677
    %2679 = vmatprep.mubr.f32.mxu0 0.0
    %2680 = vmatmul.mubr.f32.gmra.mrb[0].mxu0 %v2420
    %v2681 = vpop.f32.mrb[0].mxu0
    %v2682 = vadd.f32 0.0, %v2681
    %v2683 = vpop.f32.mrb[0].mxu0
    %v2684 = vadd.f32 0.0, %v2683
    %2685 = vmatprep.mubr.f32.mxu0 0.0
    %2686 = vmatmul.mubr.f32.gmra.mrb[0].mxu0 %v2421
    %v2687 = vpop.f32.mrb[0].mxu0
    %v2688 = vadd.f32 0.0, %v2687
    %v2689 = vpop.f32.mrb[0].mxu0
    %v2690 = vadd.f32 0.0, %v2689
    %2691 = vmatprep.mubr.f32.mxu0 0.0
    %2692 = vmatmul.mubr.f32.gmra.mrb[0].mxu0 %v2422
    %v2693 = vpop.f32.mrb[0].mxu0
    %v2694 = vadd.f32 0.0, %v2693
    %v2695 = vpop.f32.mrb[0].mxu0
    %v2696 = vadd.f32 0.0, %v2695
    %2697 = vmatprep.mubr.f32.mxu0 0.0
    %2698 = vmatmul.mubr.f32.gmra.mrb[0].mxu0 %v2423
    %v2699 = vpop.f32.mrb[0].mxu0
    %v2700 = vadd.f32 0.0, %v2699
    %v2701 = vpop.f32.mrb[0].mxu0
    %v2702 = vadd.f32 0.0, %v2701
    %2703 = vmatprep.mubr.f32.mxu0 0.0
    %2704 = vmatmul.mubr.f32.gmra.mrb[0].mxu0 %v2424
    %v2705 = vpop.f32.mrb[0].mxu0
    %v2706 = vadd.f32 0.0, %v2705
    %v2707 = vpop.f32.mrb[0].mxu0
    %v2708 = vadd.f32 0.0, %v2707
    %2709 = vmatprep.mubr.f32.mxu0 0.0
    %2710 = vmatmul.mubr.f32.gmra.mrb[0].mxu0 %v2425
    %v2711 = vpop.f32.mrb[0].mxu0
    %v2712 = vadd.f32 0.0, %v2711
    %v2713 = vpop.f32.mrb[0].mxu0
    %v2714 = vadd.f32 0.0, %v2713
    %2715 = vdwg.mxu0
    %v2716 = vld [vmem:[%s6] sm:$0xf]
    %v2718 = vlaneseq
    %v2719 = vshrl.u32 %v2718, 7
    %v2720 = vsub.s32 0, %v2719
    %v2721 = vrot.slane %v2716, %v2720
    %v2722 = vlaneseq
    %v2723 = vshrl.u32 %v2722, 7
    %v2724 = vsub.s32 1, %v2723
    %v2725 = vrot.slane %v2716, %v2724
    %v2726 = vlaneseq
    %v2727 = vshrl.u32 %v2726, 7
    %v2728 = vsub.s32 2, %v2727
    %v2729 = vrot.slane %v2716, %v2728
    %v2730 = vlaneseq
    %v2731 = vshrl.u32 %v2730, 7
    %v2732 = vsub.s32 3, %v2731
    %v2733 = vrot.slane %v2716, %v2732
    %v2738 = vadd.f32 %v2557, %v2721
    %v2739 = vadd.f32 %v2559, %v2725
    %v2740 = vadd.f32 %v2670, %v2729
    %v2741 = vadd.f32 %v2672, %v2733
    %v2742 = vadd.f32 %v2563, %v2721
    %v2743 = vadd.f32 %v2565, %v2725
    %v2744 = vadd.f32 %v2676, %v2729
    %v2745 = vadd.f32 %v2678, %v2733
    %v2746 = vadd.f32 %v2569, %v2721
    %v2747 = vadd.f32 %v2571, %v2725
    %v2748 = vadd.f32 %v2682, %v2729
    %v2749 = vadd.f32 %v2684, %v2733
    %v2750 = vadd.f32 %v2575, %v2721
    %v2751 = vadd.f32 %v2577, %v2725
    %v2752 = vadd.f32 %v2688, %v2729
    %v2753 = vadd.f32 %v2690, %v2733
    %v2754 = vadd.f32 %v2581, %v2721
    %v2755 = vadd.f32 %v2583, %v2725
    %v2756 = vadd.f32 %v2694, %v2729
    %v2757 = vadd.f32 %v2696, %v2733
    %v2758 = vadd.f32 %v2587, %v2721
    %v2759 = vadd.f32 %v2589, %v2725
    %v2760 = vadd.f32 %v2700, %v2729
    %v2761 = vadd.f32 %v2702, %v2733
    %v2762 = vadd.f32 %v2593, %v2721
    %v2763 = vadd.f32 %v2595, %v2725
    %v2764 = vadd.f32 %v2706, %v2729
    %v2765 = vadd.f32 %v2708, %v2733
    %v2766 = vadd.f32 %v2599, %v2721
    %v2767 = vadd.f32 %v2601, %v2725
    %v2768 = vadd.f32 %v2712, %v2729
    %v2769 = vadd.f32 %v2714, %v2733
    %2770 = vst [vmem:[#allocation4] sm:$0xff] %v2738
    %2771 = vst [vmem:[#allocation4 + $0x8] sm:$0xff] %v2739
    %2772 = vst [vmem:[#allocation4 + $0x10] sm:$0xff] %v2740
    %2773 = vst [vmem:[#allocation4 + $0x18] sm:$0xff] %v2741
    %2774 = vst [vmem:[#allocation4 + $0x20] sm:$0xff] %v2742
    %2775 = vst [vmem:[#allocation4 + $0x28] sm:$0xff] %v2743
    %2776 = vst [vmem:[#allocation4 + $0x30] sm:$0xff] %v2744
    %2777 = vst [vmem:[#allocation4 + $0x38] sm:$0xff] %v2745
    %2778 = vst [vmem:[#allocation4 + $0x40] sm:$0xff] %v2746
    %2779 = vst [vmem:[#allocation4 + $0x48] sm:$0xff] %v2747
    %2780 = vst [vmem:[#allocation4 + $0x50] sm:$0xff] %v2748
    %2781 = vst [vmem:[#allocation4 + $0x58] sm:$0xff] %v2749
    %2782 = vst [vmem:[#allocation4 + $0x60] sm:$0xff] %v2750
    %2783 = vst [vmem:[#allocation4 + $0x68] sm:$0xff] %v2751
    %2784 = vst [vmem:[#allocation4 + $0x70] sm:$0xff] %v2752
    %2785 = vst [vmem:[#allocation4 + $0x78] sm:$0xff] %v2753
    %2786 = vst [vmem:[#allocation4 + $0x80] sm:$0xff] %v2754
    %2787 = vst [vmem:[#allocation4 + $0x88] sm:$0xff] %v2755
    %2788 = vst [vmem:[#allocation4 + $0x90] sm:$0xff] %v2756
    %2789 = vst [vmem:[#allocation4 + $0x98] sm:$0xff] %v2757
    %2790 = vst [vmem:[#allocation4 + $0xa0] sm:$0xff] %v2758
    %2791 = vst [vmem:[#allocation4 + $0xa8] sm:$0xff] %v2759
    %2792 = vst [vmem:[#allocation4 + $0xb0] sm:$0xff] %v2760
    %2793 = vst [vmem:[#allocation4 + $0xb8] sm:$0xff] %v2761
    %2794 = vst [vmem:[#allocation4 + $0xc0] sm:$0xff] %v2762
    %2795 = vst [vmem:[#allocation4 + $0xc8] sm:$0xff] %v2763
    %2796 = vst [vmem:[#allocation4 + $0xd0] sm:$0xff] %v2764
    %2797 = vst [vmem:[#allocation4 + $0xd8] sm:$0xff] %v2765
    %2798 = vst [vmem:[#allocation4 + $0xe0] sm:$0xff] %v2766
    %2799 = vst [vmem:[#allocation4 + $0xe8] sm:$0xff] %v2767
    %2800 = vst [vmem:[#allocation4 + $0xf0] sm:$0xff] %v2768
    %2801 = vst [vmem:[#allocation4 + $0xf8] sm:$0xff] %v2769
    // Predicated region
    $region66: #{tpu_custom_call.1} parent=1 // pred_check
      %p2802 = pneg %p60
    $region67: #{tpu_custom_call.1} parent=1 // pred_check_branch
      %2804 = sbr.rel (%p2802) target = $region69
    $region68: #{tpu_custom_call.1} parent=1 // pred_region
      %s2805 = scalar_lea.sflag [#allocation10], 3
      %s2806 = smul.u32 8, 16
      %s2807 = smul.u32 %s2806, 4
      %s2808 = sshll.u32 %s2807, 4
      %2809 = dma.done %s2805, %s2808
    $region69: #{tpu_custom_call.1} parent=1 // pred_fallthru
      _
    %s2810 = scalar_lea.vmem [#allocation2], 8
    %v2811 = vld [vmem:[%s2810] sm:$0xff]
    %s2812 = scalar_lea.vmem [#allocation3], 8
    %v2813 = vld [vmem:[%s2812] sm:$0xff]
    %v2814 = vld [vmem:[#allocation4] sm:$0xff]
    %v2815 = vld [vmem:[#allocation4 + $0x8] sm:$0xff]
    %v2816 = vld [vmem:[#allocation4 + $0x10] sm:$0xff]
    %v2817 = vld [vmem:[#allocation4 + $0x18] sm:$0xff]
    %v2818 = vld [vmem:[#allocation9] sm:$0xff]
    %v2819 = vld [vmem:[#allocation9 + $0x8] sm:$0xff]
    %v2820 = vld [vmem:[#allocation9 + $0x10] sm:$0xff]
    %v2821 = vld [vmem:[#allocation9 + $0x18] sm:$0xff]
    %v2822 = vld [vmem:[#allocation9 + $0x20] sm:$0xff]
    %v2823 = vld [vmem:[#allocation9 + $0x28] sm:$0xff]
    %v2824 = vld [vmem:[#allocation9 + $0x30] sm:$0xff]
    %v2825 = vld [vmem:[#allocation9 + $0x38] sm:$0xff]
    %v2826 = vld [vmem:[#allocation9 + $0x40] sm:$0xff]
    %v2827 = vld [vmem:[#allocation9 + $0x48] sm:$0xff]
    %v2828 = vld [vmem:[#allocation9 + $0x50] sm:$0xff]
    %v2829 = vld [vmem:[#allocation9 + $0x58] sm:$0xff]
    %v2830 = vld [vmem:[#allocation9 + $0x60] sm:$0xff]
    %v2831 = vld [vmem:[#allocation9 + $0x68] sm:$0xff]
    %v2832 = vld [vmem:[#allocation9 + $0x70] sm:$0xff]
    %v2833 = vld [vmem:[#allocation9 + $0x78] sm:$0xff]
    %v2834 = vld [vmem:[#allocation9 + $0x80] sm:$0xff]
    %v2835 = vld [vmem:[#allocation9 + $0x88] sm:$0xff]
    %v2836 = vld [vmem:[#allocation9 + $0x90] sm:$0xff]
    %v2837 = vld [vmem:[#allocation9 + $0x98] sm:$0xff]
    %v2838 = vld [vmem:[#allocation9 + $0xa0] sm:$0xff]
    %v2839 = vld [vmem:[#allocation9 + $0xa8] sm:$0xff]
    %v2840 = vld [vmem:[#allocation9 + $0xb0] sm:$0xff]
    %v2841 = vld [vmem:[#allocation9 + $0xb8] sm:$0xff]
    %v2842 = vld [vmem:[#allocation9 + $0xc0] sm:$0xff]
    %v2843 = vld [vmem:[#allocation9 + $0xc8] sm:$0xff]
    %v2844 = vld [vmem:[#allocation9 + $0xd0] sm:$0xff]
    %v2845 = vld [vmem:[#allocation9 + $0xd8] sm:$0xff]
    %v2846 = vld [vmem:[#allocation9 + $0xe0] sm:$0xff]
    %v2847 = vld [vmem:[#allocation9 + $0xe8] sm:$0xff]
    %v2848 = vld [vmem:[#allocation9 + $0xf0] sm:$0xff]
    %v2849 = vld [vmem:[#allocation9 + $0xf8] sm:$0xff]
    %v2850 = vld [vmem:[#allocation9 + $0x100] sm:$0xff]
    %v2851 = vld [vmem:[#allocation9 + $0x108] sm:$0xff]
    %v2852 = vld [vmem:[#allocation9 + $0x110] sm:$0xff]
    %v2853 = vld [vmem:[#allocation9 + $0x118] sm:$0xff]
    %v2854 = vld [vmem:[#allocation9 + $0x120] sm:$0xff]
    %v2855 = vld [vmem:[#allocation9 + $0x128] sm:$0xff]
    %v2856 = vld [vmem:[#allocation9 + $0x130] sm:$0xff]
    %v2857 = vld [vmem:[#allocation9 + $0x138] sm:$0xff]
    %v2858 = vld [vmem:[#allocation9 + $0x140] sm:$0xff]
    %v2859 = vld [vmem:[#allocation9 + $0x148] sm:$0xff]
    %v2860 = vld [vmem:[#allocation9 + $0x150] sm:$0xff]
    %v2861 = vld [vmem:[#allocation9 + $0x158] sm:$0xff]
    %v2862 = vld [vmem:[#allocation9 + $0x160] sm:$0xff]
    %v2863 = vld [vmem:[#allocation9 + $0x168] sm:$0xff]
    %v2864 = vld [vmem:[#allocation9 + $0x170] sm:$0xff]
    %v2865 = vld [vmem:[#allocation9 + $0x178] sm:$0xff]
    %v2866 = vld [vmem:[#allocation9 + $0x180] sm:$0xff]
    %v2867 = vld [vmem:[#allocation9 + $0x188] sm:$0xff]
    %v2868 = vld [vmem:[#allocation9 + $0x190] sm:$0xff]
    %v2869 = vld [vmem:[#allocation9 + $0x198] sm:$0xff]
    %v2870 = vld [vmem:[#allocation9 + $0x1a0] sm:$0xff]
    %v2871 = vld [vmem:[#allocation9 + $0x1a8] sm:$0xff]
    %v2872 = vld [vmem:[#allocation9 + $0x1b0] sm:$0xff]
    %v2873 = vld [vmem:[#allocation9 + $0x1b8] sm:$0xff]
    %v2874 = vld [vmem:[#allocation9 + $0x1c0] sm:$0xff]
    %v2875 = vld [vmem:[#allocation9 + $0x1c8] sm:$0xff]
    %v2876 = vld [vmem:[#allocation9 + $0x1d0] sm:$0xff]
    %v2877 = vld [vmem:[#allocation9 + $0x1d8] sm:$0xff]
    %v2878 = vld [vmem:[#allocation9 + $0x1e0] sm:$0xff]
    %v2879 = vld [vmem:[#allocation9 + $0x1e8] sm:$0xff]
    %v2880 = vld [vmem:[#allocation9 + $0x1f0] sm:$0xff]
    %v2881 = vld [vmem:[#allocation9 + $0x1f8] sm:$0xff]
    %2882 = vmatprep.subr.mxu0 %v2819
    %2883 = vmatpush1.msra.mxu0 %v2818
    %2884 = vmatprep.subr.mxu0 %v2823
    %2885 = vmatpush1.msra.mxu0 %v2822
    %2886 = vmatprep.subr.mxu0 %v2827
    %2887 = vmatpush1.msra.mxu0 %v2826
    %2888 = vmatprep.subr.mxu0 %v2831
    %2889 = vmatpush1.msra.mxu0 %v2830
    %2890 = vmatprep.subr.mxu0 %v2835
    %2891 = vmatpush1.msra.mxu0 %v2834
    %2892 = vmatprep.subr.mxu0 %v2839
    %2893 = vmatpush1.msra.mxu0 %v2838
    %2894 = vmatprep.subr.mxu0 %v2843
    %2895 = vmatpush1.msra.mxu0 %v2842
    %2896 = vmatprep.subr.mxu0 %v2847
    %2897 = vmatpush1.msra.mxu0 %v2846
    %2898 = vmatprep.subr.mxu0 %v2851
    %2899 = vmatpush1.msra.mxu0 %v2850
    %2900 = vmatprep.subr.mxu0 %v2855
    %2901 = vmatpush1.msra.mxu0 %v2854
    %2902 = vmatprep.subr.mxu0 %v2859
    %2903 = vmatpush1.msra.mxu0 %v2858
    %2904 = vmatprep.subr.mxu0 %v2863
    %2905 = vmatpush1.msra.mxu0 %v2862
    %2906 = vmatprep.subr.mxu0 %v2867
    %2907 = vmatpush1.msra.mxu0 %v2866
    %2908 = vmatprep.subr.mxu0 %v2871
    %2909 = vmatpush1.msra.mxu0 %v2870
    %2910 = vmatprep.subr.mxu0 %v2875
    %2911 = vmatpush1.msra.mxu0 %v2874
    %2912 = vmatprep.subr.mxu0 %v2879
    %2913 = vmatpush1.msra.mxu0 %v2878
    %2914 = vmatprep.subr.mxu0 0.0
    %2915 = vmatpush1.msra.mxu0 0.0
    %2916 = vmatprep.subr.mxu0 0.0
    %2917 = vmatpush1.msra.mxu0 0.0
    %2918 = vmatprep.subr.mxu0 0.0
    %2919 = vmatpush1.msra.mxu0 0.0
    %2920 = vmatprep.subr.mxu0 0.0
    %2921 = vmatpush1.msra.mxu0 0.0
    %2922 = vmatprep.subr.mxu0 0.0
    %2923 = vmatpush1.msra.mxu0 0.0
    %2924 = vmatprep.subr.mxu0 0.0
    %2925 = vmatpush1.msra.mxu0 0.0
    %2926 = vmatprep.subr.mxu0 0.0
    %2927 = vmatpush1.msra.mxu0 0.0
    %2928 = vmatprep.subr.mxu0 0.0
    %2929 = vmatpush1.msra.mxu0 0.0
    %2930 = vmatprep.subr.mxu0 0.0
    %2931 = vmatpush1.msra.mxu0 0.0
    %2932 = vmatprep.subr.mxu0 0.0
    %2933 = vmatpush1.msra.mxu0 0.0
    %2934 = vmatprep.subr.mxu0 0.0
    %2935 = vmatpush1.msra.mxu0 0.0
    %2936 = vmatprep.subr.mxu0 0.0
    %2937 = vmatpush1.msra.mxu0 0.0
    %2938 = vmatprep.subr.mxu0 0.0
    %2939 = vmatpush1.msra.mxu0 0.0
    %2940 = vmatprep.subr.mxu0 0.0
    %2941 = vmatpush1.msra.mxu0 0.0
    %2942 = vmatprep.subr.mxu0 0.0
    %2943 = vmatpush1.msra.mxu0 0.0
    %2944 = vmatprep.subr.mxu0 0.0
    %2945 = vmatpush1.msra.mxu0 0.0
    %2946 = vmatprep.mubr.f32.mxu0 0.0
    %2947 = vmatmul.mubr.f32.gmra.mrb[0].mxu0 %v2811
    %v2948 = vpop.f32.mrb[0].mxu0
    %v2949 = vadd.f32 0.0, %v2948
    %v2950 = vpop.f32.mrb[0].mxu0
    %v2951 = vadd.f32 0.0, %v2950
    %2952 = vdwg.mxu0
    %2953 = vmatprep.subr.mxu0 %v2821
    %2954 = vmatpush1.msra.mxu0 %v2820
    %2955 = vmatprep.subr.mxu0 %v2825
    %2956 = vmatpush1.msra.mxu0 %v2824
    %2957 = vmatprep.subr.mxu0 %v2829
    %2958 = vmatpush1.msra.mxu0 %v2828
    %2959 = vmatprep.subr.mxu0 %v2833
    %2960 = vmatpush1.msra.mxu0 %v2832
    %2961 = vmatprep.subr.mxu0 %v2837
    %2962 = vmatpush1.msra.mxu0 %v2836
    %2963 = vmatprep.subr.mxu0 %v2841
    %2964 = vmatpush1.msra.mxu0 %v2840
    %2965 = vmatprep.subr.mxu0 %v2845
    %2966 = vmatpush1.msra.mxu0 %v2844
    %2967 = vmatprep.subr.mxu0 %v2849
    %2968 = vmatpush1.msra.mxu0 %v2848
    %2969 = vmatprep.subr.mxu0 %v2853
    %2970 = vmatpush1.msra.mxu0 %v2852
    %2971 = vmatprep.subr.mxu0 %v2857
    %2972 = vmatpush1.msra.mxu0 %v2856
    %2973 = vmatprep.subr.mxu0 %v2861
    %2974 = vmatpush1.msra.mxu0 %v2860
    %2975 = vmatprep.subr.mxu0 %v2865
    %2976 = vmatpush1.msra.mxu0 %v2864
    %2977 = vmatprep.subr.mxu0 %v2869
    %2978 = vmatpush1.msra.mxu0 %v2868
    %2979 = vmatprep.subr.mxu0 %v2873
    %2980 = vmatpush1.msra.mxu0 %v2872
    %2981 = vmatprep.subr.mxu0 %v2877
    %2982 = vmatpush1.msra.mxu0 %v2876
    %2983 = vmatprep.subr.mxu0 %v2881
    %2984 = vmatpush1.msra.mxu0 %v2880
    %2985 = vmatprep.subr.mxu0 0.0
    %2986 = vmatpush1.msra.mxu0 0.0
    %2987 = vmatprep.subr.mxu0 0.0
    %2988 = vmatpush1.msra.mxu0 0.0
    %2989 = vmatprep.subr.mxu0 0.0
    %2990 = vmatpush1.msra.mxu0 0.0
    %2991 = vmatprep.subr.mxu0 0.0
    %2992 = vmatpush1.msra.mxu0 0.0
    %2993 = vmatprep.subr.mxu0 0.0
    %2994 = vmatpush1.msra.mxu0 0.0
    %2995 = vmatprep.subr.mxu0 0.0
    %2996 = vmatpush1.msra.mxu0 0.0
    %2997 = vmatprep.subr.mxu0 0.0
    %2998 = vmatpush1.msra.mxu0 0.0
    %2999 = vmatprep.subr.mxu0 0.0
    %3000 = vmatpush1.msra.mxu0 0.0
    %3001 = vmatprep.subr.mxu0 0.0
    %3002 = vmatpush1.msra.mxu0 0.0
    %3003 = vmatprep.subr.mxu0 0.0
    %3004 = vmatpush1.msra.mxu0 0.0
    %3005 = vmatprep.subr.mxu0 0.0
    %3006 = vmatpush1.msra.mxu0 0.0
    %3007 = vmatprep.subr.mxu0 0.0
    %3008 = vmatpush1.msra.mxu0 0.0
    %3009 = vmatprep.subr.mxu0 0.0
    %3010 = vmatpush1.msra.mxu0 0.0
    %3011 = vmatprep.subr.mxu0 0.0
    %3012 = vmatpush1.msra.mxu0 0.0
    %3013 = vmatprep.subr.mxu0 0.0
    %3014 = vmatpush1.msra.mxu0 0.0
    %3015 = vmatprep.subr.mxu0 0.0
    %3016 = vmatpush1.msra.mxu0 0.0
    %3017 = vmatprep.mubr.f32.mxu0 0.0
    %3018 = vmatmul.mubr.f32.gmra.mrb[0].mxu0 %v2811
    %v3019 = vpop.f32.mrb[0].mxu0
    %v3020 = vadd.f32 0.0, %v3019
    %v3021 = vpop.f32.mrb[0].mxu0
    %v3022 = vadd.f32 0.0, %v3021
    %3023 = vdwg.mxu0
    %v3024 = vadd.f32 %v2814, %v2949
    %v3025 = vadd.f32 %v2815, %v2951
    %v3026 = vadd.f32 %v2816, %v3020
    %v3027 = vadd.f32 %v2817, %v3022
    %v3028 = vxor.u32 %v3024, 2147483648
    %v3029 = vmul.f32 %v3028, 1.442695
    %v3030 = vpow.pop %v3029
    %v3031 = vadd.f32 %v3030, 1.0
    %v3032 = vrcp.pop %v3031
    %v3033 = vmul.f32 1.0, %v3032
    %v3034 = vxor.u32 %v3025, 2147483648
    %v3035 = vmul.f32 %v3034, 1.442695
    %v3036 = vpow.pop %v3035
    %v3037 = vadd.f32 %v3036, 1.0
    %v3038 = vrcp.pop %v3037
    %v3039 = vmul.f32 1.0, %v3038
    %v3040 = vtanh.pop %v3026
    %v3041 = vxor.u32 %v3027, 2147483648
    %v3042 = vmul.f32 %v3041, 1.442695
    %v3043 = vpow.pop %v3042
    %v3044 = vadd.f32 %v3043, 1.0
    %v3045 = vrcp.pop %v3044
    %v3046 = vmul.f32 1.0, %v3045
    %v3047 = vmul.f32 %v3039, %v2813
    %v3048 = vmul.f32 %v3033, %v3040
    %v3049 = vadd.f32 %v3047, %v3048
    %v3050 = vtanh.pop %v3049
    %v3051 = vmul.f32 %v3046, %v3050
    %v3052 = vld [vmem:[%s721] sm:$0xff]
    %v3053 = vld [vmem:[%s721 + $0x8] sm:$0xff]
    %v3054 = vld [vmem:[%s721 + $0x10] sm:$0xff]
    %v3055 = vld [vmem:[%s721 + $0x18] sm:$0xff]
    %3056 = vmatprep.subr.mxu0 %v2819
    %3057 = vmatpush1.msra.mxu0 %v2818
    %3058 = vmatprep.subr.mxu0 %v2823
    %3059 = vmatpush1.msra.mxu0 %v2822
    %3060 = vmatprep.subr.mxu0 %v2827
    %3061 = vmatpush1.msra.mxu0 %v2826
    %3062 = vmatprep.subr.mxu0 %v2831
    %3063 = vmatpush1.msra.mxu0 %v2830
    %3064 = vmatprep.subr.mxu0 %v2835
    %3065 = vmatpush1.msra.mxu0 %v2834
    %3066 = vmatprep.subr.mxu0 %v2839
    %3067 = vmatpush1.msra.mxu0 %v2838
    %3068 = vmatprep.subr.mxu0 %v2843
    %3069 = vmatpush1.msra.mxu0 %v2842
    %3070 = vmatprep.subr.mxu0 %v2847
    %3071 = vmatpush1.msra.mxu0 %v2846
    %3072 = vmatprep.subr.mxu0 %v2851
    %3073 = vmatpush1.msra.mxu0 %v2850
    %3074 = vmatprep.subr.mxu0 %v2855
    %3075 = vmatpush1.msra.mxu0 %v2854
    %3076 = vmatprep.subr.mxu0 %v2859
    %3077 = vmatpush1.msra.mxu0 %v2858
    %3078 = vmatprep.subr.mxu0 %v2863
    %3079 = vmatpush1.msra.mxu0 %v2862
    %3080 = vmatprep.subr.mxu0 %v2867
    %3081 = vmatpush1.msra.mxu0 %v2866
    %3082 = vmatprep.subr.mxu0 %v2871
    %3083 = vmatpush1.msra.mxu0 %v2870
    %3084 = vmatprep.subr.mxu0 %v2875
    %3085 = vmatpush1.msra.mxu0 %v2874
    %3086 = vmatprep.subr.mxu0 %v2879
    %3087 = vmatpush1.msra.mxu0 %v2878
    %3088 = vmatprep.subr.mxu0 0.0
    %3089 = vmatpush1.msra.mxu0 0.0
    %3090 = vmatprep.subr.mxu0 0.0
    %3091 = vmatpush1.msra.mxu0 0.0
    %3092 = vmatprep.subr.mxu0 0.0
    %3093 = vmatpush1.msra.mxu0 0.0
    %3094 = vmatprep.subr.mxu0 0.0
    %3095 = vmatpush1.msra.mxu0 0.0
    %3096 = vmatprep.subr.mxu0 0.0
    %3097 = vmatpush1.msra.mxu0 0.0
    %3098 = vmatprep.subr.mxu0 0.0
    %3099 = vmatpush1.msra.mxu0 0.0
    %3100 = vmatprep.subr.mxu0 0.0
    %3101 = vmatpush1.msra.mxu0 0.0
    %3102 = vmatprep.subr.mxu0 0.0
    %3103 = vmatpush1.msra.mxu0 0.0
    %3104 = vmatprep.subr.mxu0 0.0
    %3105 = vmatpush1.msra.mxu0 0.0
    %3106 = vmatprep.subr.mxu0 0.0
    %3107 = vmatpush1.msra.mxu0 0.0
    %3108 = vmatprep.subr.mxu0 0.0
    %3109 = vmatpush1.msra.mxu0 0.0
    %3110 = vmatprep.subr.mxu0 0.0
    %3111 = vmatpush1.msra.mxu0 0.0
    %3112 = vmatprep.subr.mxu0 0.0
    %3113 = vmatpush1.msra.mxu0 0.0
    %3114 = vmatprep.subr.mxu0 0.0
    %3115 = vmatpush1.msra.mxu0 0.0
    %3116 = vmatprep.subr.mxu0 0.0
    %3117 = vmatpush1.msra.mxu0 0.0
    %3118 = vmatprep.subr.mxu0 0.0
    %3119 = vmatpush1.msra.mxu0 0.0
    %3120 = vmatprep.mubr.f32.mxu0 0.0
    %3121 = vmatmul.mubr.f32.gmra.mrb[0].mxu0 %v3051
    %v3122 = vpop.f32.mrb[0].mxu0
    %v3123 = vadd.f32 0.0, %v3122
    %v3124 = vpop.f32.mrb[0].mxu0
    %v3125 = vadd.f32 0.0, %v3124
    %3126 = vdwg.mxu0
    %3127 = vmatprep.subr.mxu0 %v2821
    %3128 = vmatpush1.msra.mxu0 %v2820
    %3129 = vmatprep.subr.mxu0 %v2825
    %3130 = vmatpush1.msra.mxu0 %v2824
    %3131 = vmatprep.subr.mxu0 %v2829
    %3132 = vmatpush1.msra.mxu0 %v2828
    %3133 = vmatprep.subr.mxu0 %v2833
    %3134 = vmatpush1.msra.mxu0 %v2832
    %3135 = vmatprep.subr.mxu0 %v2837
    %3136 = vmatpush1.msra.mxu0 %v2836
    %3137 = vmatprep.subr.mxu0 %v2841
    %3138 = vmatpush1.msra.mxu0 %v2840
    %3139 = vmatprep.subr.mxu0 %v2845
    %3140 = vmatpush1.msra.mxu0 %v2844
    %3141 = vmatprep.subr.mxu0 %v2849
    %3142 = vmatpush1.msra.mxu0 %v2848
    %3143 = vmatprep.subr.mxu0 %v2853
    %3144 = vmatpush1.msra.mxu0 %v2852
    %3145 = vmatprep.subr.mxu0 %v2857
    %3146 = vmatpush1.msra.mxu0 %v2856
    %3147 = vmatprep.subr.mxu0 %v2861
    %3148 = vmatpush1.msra.mxu0 %v2860
    %3149 = vmatprep.subr.mxu0 %v2865
    %3150 = vmatpush1.msra.mxu0 %v2864
    %3151 = vmatprep.subr.mxu0 %v2869
    %3152 = vmatpush1.msra.mxu0 %v2868
    %3153 = vmatprep.subr.mxu0 %v2873
    %3154 = vmatpush1.msra.mxu0 %v2872
    %3155 = vmatprep.subr.mxu0 %v2877
    %3156 = vmatpush1.msra.mxu0 %v2876
    %3157 = vmatprep.subr.mxu0 %v2881
    %3158 = vmatpush1.msra.mxu0 %v2880
    %3159 = vmatprep.subr.mxu0 0.0
    %3160 = vmatpush1.msra.mxu0 0.0
    %3161 = vmatprep.subr.mxu0 0.0
    %3162 = vmatpush1.msra.mxu0 0.0
    %3163 = vmatprep.subr.mxu0 0.0
    %3164 = vmatpush1.msra.mxu0 0.0
    %3165 = vmatprep.subr.mxu0 0.0
    %3166 = vmatpush1.msra.mxu0 0.0
    %3167 = vmatprep.subr.mxu0 0.0
    %3168 = vmatpush1.msra.mxu0 0.0
    %3169 = vmatprep.subr.mxu0 0.0
    %3170 = vmatpush1.msra.mxu0 0.0
    %3171 = vmatprep.subr.mxu0 0.0
    %3172 = vmatpush1.msra.mxu0 0.0
    %3173 = vmatprep.subr.mxu0 0.0
    %3174 = vmatpush1.msra.mxu0 0.0
    %3175 = vmatprep.subr.mxu0 0.0
    %3176 = vmatpush1.msra.mxu0 0.0
    %3177 = vmatprep.subr.mxu0 0.0
    %3178 = vmatpush1.msra.mxu0 0.0
    %3179 = vmatprep.subr.mxu0 0.0
    %3180 = vmatpush1.msra.mxu0 0.0
    %3181 = vmatprep.subr.mxu0 0.0
    %3182 = vmatpush1.msra.mxu0 0.0
    %3183 = vmatprep.subr.mxu0 0.0
    %3184 = vmatpush1.msra.mxu0 0.0
    %3185 = vmatprep.subr.mxu0 0.0
    %3186 = vmatpush1.msra.mxu0 0.0
    %3187 = vmatprep.subr.mxu0 0.0
    %3188 = vmatpush1.msra.mxu0 0.0
    %3189 = vmatprep.subr.mxu0 0.0
    %3190 = vmatpush1.msra.mxu0 0.0
    %3191 = vmatprep.mubr.f32.mxu0 0.0
    %3192 = vmatmul.mubr.f32.gmra.mrb[0].mxu0 %v3051
    %v3193 = vpop.f32.mrb[0].mxu0
    %v3194 = vadd.f32 0.0, %v3193
    %v3195 = vpop.f32.mrb[0].mxu0
    %v3196 = vadd.f32 0.0, %v3195
    %3197 = vdwg.mxu0
    %v3198 = vadd.f32 %v3052, %v3123
    %v3199 = vadd.f32 %v3053, %v3125
    %v3200 = vadd.f32 %v3054, %v3194
    %v3201 = vadd.f32 %v3055, %v3196
    %v3202 = vxor.u32 %v3198, 2147483648
    %v3203 = vmul.f32 %v3202, 1.442695
    %v3204 = vpow.pop %v3203
    %v3205 = vadd.f32 %v3204, 1.0
    %v3206 = vrcp.pop %v3205
    %v3207 = vmul.f32 1.0, %v3206
    %v3208 = vxor.u32 %v3199, 2147483648
    %v3209 = vmul.f32 %v3208, 1.442695
    %v3210 = vpow.pop %v3209
    %v3211 = vadd.f32 %v3210, 1.0
    %v3212 = vrcp.pop %v3211
    %v3213 = vmul.f32 1.0, %v3212
    %v3214 = vtanh.pop %v3200
    %v3215 = vxor.u32 %v3201, 2147483648
    %v3216 = vmul.f32 %v3215, 1.442695
    %v3217 = vpow.pop %v3216
    %v3218 = vadd.f32 %v3217, 1.0
    %v3219 = vrcp.pop %v3218
    %v3220 = vmul.f32 1.0, %v3219
    %v3221 = vmul.f32 %v3213, %v3049
    %v3222 = vmul.f32 %v3207, %v3214
    %v3223 = vadd.f32 %v3221, %v3222
    %v3224 = vtanh.pop %v3223
    %v3225 = vmul.f32 %v3220, %v3224
    %v3226 = vld [vmem:[%s962] sm:$0xff]
    %v3227 = vld [vmem:[%s962 + $0x8] sm:$0xff]
    %v3228 = vld [vmem:[%s962 + $0x10] sm:$0xff]
    %v3229 = vld [vmem:[%s962 + $0x18] sm:$0xff]
    %3230 = vmatprep.subr.mxu0 %v2819
    %3231 = vmatpush1.msra.mxu0 %v2818
    %3232 = vmatprep.subr.mxu0 %v2823
    %3233 = vmatpush1.msra.mxu0 %v2822
    %3234 = vmatprep.subr.mxu0 %v2827
    %3235 = vmatpush1.msra.mxu0 %v2826
    %3236 = vmatprep.subr.mxu0 %v2831
    %3237 = vmatpush1.msra.mxu0 %v2830
    %3238 = vmatprep.subr.mxu0 %v2835
    %3239 = vmatpush1.msra.mxu0 %v2834
    %3240 = vmatprep.subr.mxu0 %v2839
    %3241 = vmatpush1.msra.mxu0 %v2838
    %3242 = vmatprep.subr.mxu0 %v2843
    %3243 = vmatpush1.msra.mxu0 %v2842
    %3244 = vmatprep.subr.mxu0 %v2847
    %3245 = vmatpush1.msra.mxu0 %v2846
    %3246 = vmatprep.subr.mxu0 %v2851
    %3247 = vmatpush1.msra.mxu0 %v2850
    %3248 = vmatprep.subr.mxu0 %v2855
    %3249 = vmatpush1.msra.mxu0 %v2854
    %3250 = vmatprep.subr.mxu0 %v2859
    %3251 = vmatpush1.msra.mxu0 %v2858
    %3252 = vmatprep.subr.mxu0 %v2863
    %3253 = vmatpush1.msra.mxu0 %v2862
    %3254 = vmatprep.subr.mxu0 %v2867
    %3255 = vmatpush1.msra.mxu0 %v2866
    %3256 = vmatprep.subr.mxu0 %v2871
    %3257 = vmatpush1.msra.mxu0 %v2870
    %3258 = vmatprep.subr.mxu0 %v2875
    %3259 = vmatpush1.msra.mxu0 %v2874
    %3260 = vmatprep.subr.mxu0 %v2879
    %3261 = vmatpush1.msra.mxu0 %v2878
    %3262 = vmatprep.subr.mxu0 0.0
    %3263 = vmatpush1.msra.mxu0 0.0
    %3264 = vmatprep.subr.mxu0 0.0
    %3265 = vmatpush1.msra.mxu0 0.0
    %3266 = vmatprep.subr.mxu0 0.0
    %3267 = vmatpush1.msra.mxu0 0.0
    %3268 = vmatprep.subr.mxu0 0.0
    %3269 = vmatpush1.msra.mxu0 0.0
    %3270 = vmatprep.subr.mxu0 0.0
    %3271 = vmatpush1.msra.mxu0 0.0
    %3272 = vmatprep.subr.mxu0 0.0
    %3273 = vmatpush1.msra.mxu0 0.0
    %3274 = vmatprep.subr.mxu0 0.0
    %3275 = vmatpush1.msra.mxu0 0.0
    %3276 = vmatprep.subr.mxu0 0.0
    %3277 = vmatpush1.msra.mxu0 0.0
    %3278 = vmatprep.subr.mxu0 0.0
    %3279 = vmatpush1.msra.mxu0 0.0
    %3280 = vmatprep.subr.mxu0 0.0
    %3281 = vmatpush1.msra.mxu0 0.0
    %3282 = vmatprep.subr.mxu0 0.0
    %3283 = vmatpush1.msra.mxu0 0.0
    %3284 = vmatprep.subr.mxu0 0.0
    %3285 = vmatpush1.msra.mxu0 0.0
    %3286 = vmatprep.subr.mxu0 0.0
    %3287 = vmatpush1.msra.mxu0 0.0
    %3288 = vmatprep.subr.mxu0 0.0
    %3289 = vmatpush1.msra.mxu0 0.0
    %3290 = vmatprep.subr.mxu0 0.0
    %3291 = vmatpush1.msra.mxu0 0.0
    %3292 = vmatprep.subr.mxu0 0.0
    %3293 = vmatpush1.msra.mxu0 0.0
    %3294 = vmatprep.mubr.f32.mxu0 0.0
    %3295 = vmatmul.mubr.f32.gmra.mrb[0].mxu0 %v3225
    %v3296 = vpop.f32.mrb[0].mxu0
    %v3297 = vadd.f32 0.0, %v3296
    %v3298 = vpop.f32.mrb[0].mxu0
    %v3299 = vadd.f32 0.0, %v3298
    %3300 = vdwg.mxu0
    %3301 = vmatprep.subr.mxu0 %v2821
    %3302 = vmatpush1.msra.mxu0 %v2820
    %3303 = vmatprep.subr.mxu0 %v2825
    %3304 = vmatpush1.msra.mxu0 %v2824
    %3305 = vmatprep.subr.mxu0 %v2829
    %3306 = vmatpush1.msra.mxu0 %v2828
    %3307 = vmatprep.subr.mxu0 %v2833
    %3308 = vmatpush1.msra.mxu0 %v2832
    %3309 = vmatprep.subr.mxu0 %v2837
    %3310 = vmatpush1.msra.mxu0 %v2836
    %3311 = vmatprep.subr.mxu0 %v2841
    %3312 = vmatpush1.msra.mxu0 %v2840
    %3313 = vmatprep.subr.mxu0 %v2845
    %3314 = vmatpush1.msra.mxu0 %v2844
    %3315 = vmatprep.subr.mxu0 %v2849
    %3316 = vmatpush1.msra.mxu0 %v2848
    %3317 = vmatprep.subr.mxu0 %v2853
    %3318 = vmatpush1.msra.mxu0 %v2852
    %3319 = vmatprep.subr.mxu0 %v2857
    %3320 = vmatpush1.msra.mxu0 %v2856
    %3321 = vmatprep.subr.mxu0 %v2861
    %3322 = vmatpush1.msra.mxu0 %v2860
    %3323 = vmatprep.subr.mxu0 %v2865
    %3324 = vmatpush1.msra.mxu0 %v2864
    %3325 = vmatprep.subr.mxu0 %v2869
    %3326 = vmatpush1.msra.mxu0 %v2868
    %3327 = vmatprep.subr.mxu0 %v2873
    %3328 = vmatpush1.msra.mxu0 %v2872
    %3329 = vmatprep.subr.mxu0 %v2877
    %3330 = vmatpush1.msra.mxu0 %v2876
    %3331 = vmatprep.subr.mxu0 %v2881
    %3332 = vmatpush1.msra.mxu0 %v2880
    %3333 = vmatprep.subr.mxu0 0.0
    %3334 = vmatpush1.msra.mxu0 0.0
    %3335 = vmatprep.subr.mxu0 0.0
    %3336 = vmatpush1.msra.mxu0 0.0
    %3337 = vmatprep.subr.mxu0 0.0
    %3338 = vmatpush1.msra.mxu0 0.0
    %3339 = vmatprep.subr.mxu0 0.0
    %3340 = vmatpush1.msra.mxu0 0.0
    %3341 = vmatprep.subr.mxu0 0.0
    %3342 = vmatpush1.msra.mxu0 0.0
    %3343 = vmatprep.subr.mxu0 0.0
    %3344 = vmatpush1.msra.mxu0 0.0
    %3345 = vmatprep.subr.mxu0 0.0
    %3346 = vmatpush1.msra.mxu0 0.0
    %3347 = vmatprep.subr.mxu0 0.0
    %3348 = vmatpush1.msra.mxu0 0.0
    %3349 = vmatprep.subr.mxu0 0.0
    %3350 = vmatpush1.msra.mxu0 0.0
    %3351 = vmatprep.subr.mxu0 0.0
    %3352 = vmatpush1.msra.mxu0 0.0
    %3353 = vmatprep.subr.mxu0 0.0
    %3354 = vmatpush1.msra.mxu0 0.0
    %3355 = vmatprep.subr.mxu0 0.0
    %3356 = vmatpush1.msra.mxu0 0.0
    %3357 = vmatprep.subr.mxu0 0.0
    %3358 = vmatpush1.msra.mxu0 0.0
    %3359 = vmatprep.subr.mxu0 0.0
    %3360 = vmatpush1.msra.mxu0 0.0
    %3361 = vmatprep.subr.mxu0 0.0
    %3362 = vmatpush1.msra.mxu0 0.0
    %3363 = vmatprep.subr.mxu0 0.0
    %3364 = vmatpush1.msra.mxu0 0.0
    %3365 = vmatprep.mubr.f32.mxu0 0.0
    %3366 = vmatmul.mubr.f32.gmra.mrb[0].mxu0 %v3225
    %v3367 = vpop.f32.mrb[0].mxu0
    %v3368 = vadd.f32 0.0, %v3367
    %v3369 = vpop.f32.mrb[0].mxu0
    %v3370 = vadd.f32 0.0, %v3369
    %3371 = vdwg.mxu0
    %v3372 = vadd.f32 %v3226, %v3297
    %v3373 = vadd.f32 %v3227, %v3299
    %v3374 = vadd.f32 %v3228, %v3368
    %v3375 = vadd.f32 %v3229, %v3370
    %v3376 = vxor.u32 %v3372, 2147483648
    %v3377 = vmul.f32 %v3376, 1.442695
    %v3378 = vpow.pop %v3377
    %v3379 = vadd.f32 %v3378, 1.0
    %v3380 = vrcp.pop %v3379
    %v3381 = vmul.f32 1.0, %v3380
    %v3382 = vxor.u32 %v3373, 2147483648
    %v3383 = vmul.f32 %v3382, 1.442695
    %v3384 = vpow.pop %v3383
    %v3385 = vadd.f32 %v3384, 1.0
    %v3386 = vrcp.pop %v3385
    %v3387 = vmul.f32 1.0, %v3386
    %v3388 = vtanh.pop %v3374
    %v3389 = vxor.u32 %v3375, 2147483648
    %v3390 = vmul.f32 %v3389, 1.442695
    %v3391 = vpow.pop %v3390
    %v3392 = vadd.f32 %v3391, 1.0
    %v3393 = vrcp.pop %v3392
    %v3394 = vmul.f32 1.0, %v3393
    %v3395 = vmul.f32 %v3387, %v3223
    %v3396 = vmul.f32 %v3381, %v3388
    %v3397 = vadd.f32 %v3395, %v3396
    %v3398 = vtanh.pop %v3397
    %v3399 = vmul.f32 %v3394, %v3398
    %v3400 = vld [vmem:[%s1203] sm:$0xff]
    %v3401 = vld [vmem:[%s1203 + $0x8] sm:$0xff]
    %v3402 = vld [vmem:[%s1203 + $0x10] sm:$0xff]
    %v3403 = vld [vmem:[%s1203 + $0x18] sm:$0xff]
    %3404 = vmatprep.subr.mxu0 %v2819
    %3405 = vmatpush1.msra.mxu0 %v2818
    %3406 = vmatprep.subr.mxu0 %v2823
    %3407 = vmatpush1.msra.mxu0 %v2822
    %3408 = vmatprep.subr.mxu0 %v2827
    %3409 = vmatpush1.msra.mxu0 %v2826
    %3410 = vmatprep.subr.mxu0 %v2831
    %3411 = vmatpush1.msra.mxu0 %v2830
    %3412 = vmatprep.subr.mxu0 %v2835
    %3413 = vmatpush1.msra.mxu0 %v2834
    %3414 = vmatprep.subr.mxu0 %v2839
    %3415 = vmatpush1.msra.mxu0 %v2838
    %3416 = vmatprep.subr.mxu0 %v2843
    %3417 = vmatpush1.msra.mxu0 %v2842
    %3418 = vmatprep.subr.mxu0 %v2847
    %3419 = vmatpush1.msra.mxu0 %v2846
    %3420 = vmatprep.subr.mxu0 %v2851
    %3421 = vmatpush1.msra.mxu0 %v2850
    %3422 = vmatprep.subr.mxu0 %v2855
    %3423 = vmatpush1.msra.mxu0 %v2854
    %3424 = vmatprep.subr.mxu0 %v2859
    %3425 = vmatpush1.msra.mxu0 %v2858
    %3426 = vmatprep.subr.mxu0 %v2863
    %3427 = vmatpush1.msra.mxu0 %v2862
    %3428 = vmatprep.subr.mxu0 %v2867
    %3429 = vmatpush1.msra.mxu0 %v2866
    %3430 = vmatprep.subr.mxu0 %v2871
    %3431 = vmatpush1.msra.mxu0 %v2870
    %3432 = vmatprep.subr.mxu0 %v2875
    %3433 = vmatpush1.msra.mxu0 %v2874
    %3434 = vmatprep.subr.mxu0 %v2879
    %3435 = vmatpush1.msra.mxu0 %v2878
    %3436 = vmatprep.subr.mxu0 0.0
    %3437 = vmatpush1.msra.mxu0 0.0
    %3438 = vmatprep.subr.mxu0 0.0
    %3439 = vmatpush1.msra.mxu0 0.0
    %3440 = vmatprep.subr.mxu0 0.0
    %3441 = vmatpush1.msra.mxu0 0.0
    %3442 = vmatprep.subr.mxu0 0.0
    %3443 = vmatpush1.msra.mxu0 0.0
    %3444 = vmatprep.subr.mxu0 0.0
    %3445 = vmatpush1.msra.mxu0 0.0
    %3446 = vmatprep.subr.mxu0 0.0
    %3447 = vmatpush1.msra.mxu0 0.0
    %3448 = vmatprep.subr.mxu0 0.0
    %3449 = vmatpush1.msra.mxu0 0.0
    %3450 = vmatprep.subr.mxu0 0.0
    %3451 = vmatpush1.msra.mxu0 0.0
    %3452 = vmatprep.subr.mxu0 0.0
    %3453 = vmatpush1.msra.mxu0 0.0
    %3454 = vmatprep.subr.mxu0 0.0
    %3455 = vmatpush1.msra.mxu0 0.0
    %3456 = vmatprep.subr.mxu0 0.0
    %3457 = vmatpush1.msra.mxu0 0.0
    %3458 = vmatprep.subr.mxu0 0.0
    %3459 = vmatpush1.msra.mxu0 0.0
    %3460 = vmatprep.subr.mxu0 0.0
    %3461 = vmatpush1.msra.mxu0 0.0
    %3462 = vmatprep.subr.mxu0 0.0
    %3463 = vmatpush1.msra.mxu0 0.0
    %3464 = vmatprep.subr.mxu0 0.0
    %3465 = vmatpush1.msra.mxu0 0.0
    %3466 = vmatprep.subr.mxu0 0.0
    %3467 = vmatpush1.msra.mxu0 0.0
    %3468 = vmatprep.mubr.f32.mxu0 0.0
    %3469 = vmatmul.mubr.f32.gmra.mrb[0].mxu0 %v3399
    %v3470 = vpop.f32.mrb[0].mxu0
    %v3471 = vadd.f32 0.0, %v3470
    %v3472 = vpop.f32.mrb[0].mxu0
    %v3473 = vadd.f32 0.0, %v3472
    %3474 = vdwg.mxu0
    %3475 = vmatprep.subr.mxu0 %v2821
    %3476 = vmatpush1.msra.mxu0 %v2820
    %3477 = vmatprep.subr.mxu0 %v2825
    %3478 = vmatpush1.msra.mxu0 %v2824
    %3479 = vmatprep.subr.mxu0 %v2829
    %3480 = vmatpush1.msra.mxu0 %v2828
    %3481 = vmatprep.subr.mxu0 %v2833
    %3482 = vmatpush1.msra.mxu0 %v2832
    %3483 = vmatprep.subr.mxu0 %v2837
    %3484 = vmatpush1.msra.mxu0 %v2836
    %3485 = vmatprep.subr.mxu0 %v2841
    %3486 = vmatpush1.msra.mxu0 %v2840
    %3487 = vmatprep.subr.mxu0 %v2845
    %3488 = vmatpush1.msra.mxu0 %v2844
    %3489 = vmatprep.subr.mxu0 %v2849
    %3490 = vmatpush1.msra.mxu0 %v2848
    %3491 = vmatprep.subr.mxu0 %v2853
    %3492 = vmatpush1.msra.mxu0 %v2852
    %3493 = vmatprep.subr.mxu0 %v2857
    %3494 = vmatpush1.msra.mxu0 %v2856
    %3495 = vmatprep.subr.mxu0 %v2861
    %3496 = vmatpush1.msra.mxu0 %v2860
    %3497 = vmatprep.subr.mxu0 %v2865
    %3498 = vmatpush1.msra.mxu0 %v2864
    %3499 = vmatprep.subr.mxu0 %v2869
    %3500 = vmatpush1.msra.mxu0 %v2868
    %3501 = vmatprep.subr.mxu0 %v2873
    %3502 = vmatpush1.msra.mxu0 %v2872
    %3503 = vmatprep.subr.mxu0 %v2877
    %3504 = vmatpush1.msra.mxu0 %v2876
    %3505 = vmatprep.subr.mxu0 %v2881
    %3506 = vmatpush1.msra.mxu0 %v2880
    %3507 = vmatprep.subr.mxu0 0.0
    %3508 = vmatpush1.msra.mxu0 0.0
    %3509 = vmatprep.subr.mxu0 0.0
    %3510 = vmatpush1.msra.mxu0 0.0
    %3511 = vmatprep.subr.mxu0 0.0
    %3512 = vmatpush1.msra.mxu0 0.0
    %3513 = vmatprep.subr.mxu0 0.0
    %3514 = vmatpush1.msra.mxu0 0.0
    %3515 = vmatprep.subr.mxu0 0.0
    %3516 = vmatpush1.msra.mxu0 0.0
    %3517 = vmatprep.subr.mxu0 0.0
    %3518 = vmatpush1.msra.mxu0 0.0
    %3519 = vmatprep.subr.mxu0 0.0
    %3520 = vmatpush1.msra.mxu0 0.0
    %3521 = vmatprep.subr.mxu0 0.0
    %3522 = vmatpush1.msra.mxu0 0.0
    %3523 = vmatprep.subr.mxu0 0.0
    %3524 = vmatpush1.msra.mxu0 0.0
    %3525 = vmatprep.subr.mxu0 0.0
    %3526 = vmatpush1.msra.mxu0 0.0
    %3527 = vmatprep.subr.mxu0 0.0
    %3528 = vmatpush1.msra.mxu0 0.0
    %3529 = vmatprep.subr.mxu0 0.0
    %3530 = vmatpush1.msra.mxu0 0.0
    %3531 = vmatprep.subr.mxu0 0.0
    %3532 = vmatpush1.msra.mxu0 0.0
    %3533 = vmatprep.subr.mxu0 0.0
    %3534 = vmatpush1.msra.mxu0 0.0
    %3535 = vmatprep.subr.mxu0 0.0
    %3536 = vmatpush1.msra.mxu0 0.0
    %3537 = vmatprep.subr.mxu0 0.0
    %3538 = vmatpush1.msra.mxu0 0.0
    %3539 = vmatprep.mubr.f32.mxu0 0.0
    %3540 = vmatmul.mubr.f32.gmra.mrb[0].mxu0 %v3399
    %v3541 = vpop.f32.mrb[0].mxu0
    %v3542 = vadd.f32 0.0, %v3541
    %v3543 = vpop.f32.mrb[0].mxu0
    %v3544 = vadd.f32 0.0, %v3543
    %3545 = vdwg.mxu0
    %v3546 = vadd.f32 %v3400, %v3471
    %v3547 = vadd.f32 %v3401, %v3473
    %v3548 = vadd.f32 %v3402, %v3542
    %v3549 = vadd.f32 %v3403, %v3544
    %v3550 = vxor.u32 %v3546, 2147483648
    %v3551 = vmul.f32 %v3550, 1.442695
    %v3552 = vpow.pop %v3551
    %v3553 = vadd.f32 %v3552, 1.0
    %v3554 = vrcp.pop %v3553
    %v3555 = vmul.f32 1.0, %v3554
    %v3556 = vxor.u32 %v3547, 2147483648
    %v3557 = vmul.f32 %v3556, 1.442695
    %v3558 = vpow.pop %v3557
    %v3559 = vadd.f32 %v3558, 1.0
    %v3560 = vrcp.pop %v3559
    %v3561 = vmul.f32 1.0, %v3560
    %v3562 = vtanh.pop %v3548
    %v3563 = vxor.u32 %v3549, 2147483648
    %v3564 = vmul.f32 %v3563, 1.442695
    %v3565 = vpow.pop %v3564
    %v3566 = vadd.f32 %v3565, 1.0
    %v3567 = vrcp.pop %v3566
    %v3568 = vmul.f32 1.0, %v3567
    %v3569 = vmul.f32 %v3561, %v3397
    %v3570 = vmul.f32 %v3555, %v3562
    %v3571 = vadd.f32 %v3569, %v3570
    %v3572 = vtanh.pop %v3571
    %v3573 = vmul.f32 %v3568, %v3572
    %v3574 = vld [vmem:[%s1444] sm:$0xff]
    %v3575 = vld [vmem:[%s1444 + $0x8] sm:$0xff]
    %v3576 = vld [vmem:[%s1444 + $0x10] sm:$0xff]
    %v3577 = vld [vmem:[%s1444 + $0x18] sm:$0xff]
    %3578 = vmatprep.subr.mxu0 %v2819
    %3579 = vmatpush1.msra.mxu0 %v2818
    %3580 = vmatprep.subr.mxu0 %v2823
    %3581 = vmatpush1.msra.mxu0 %v2822
    %3582 = vmatprep.subr.mxu0 %v2827
    %3583 = vmatpush1.msra.mxu0 %v2826
    %3584 = vmatprep.subr.mxu0 %v2831
    %3585 = vmatpush1.msra.mxu0 %v2830
    %3586 = vmatprep.subr.mxu0 %v2835
    %3587 = vmatpush1.msra.mxu0 %v2834
    %3588 = vmatprep.subr.mxu0 %v2839
    %3589 = vmatpush1.msra.mxu0 %v2838
    %3590 = vmatprep.subr.mxu0 %v2843
    %3591 = vmatpush1.msra.mxu0 %v2842
    %3592 = vmatprep.subr.mxu0 %v2847
    %3593 = vmatpush1.msra.mxu0 %v2846
    %3594 = vmatprep.subr.mxu0 %v2851
    %3595 = vmatpush1.msra.mxu0 %v2850
    %3596 = vmatprep.subr.mxu0 %v2855
    %3597 = vmatpush1.msra.mxu0 %v2854
    %3598 = vmatprep.subr.mxu0 %v2859
    %3599 = vmatpush1.msra.mxu0 %v2858
    %3600 = vmatprep.subr.mxu0 %v2863
    %3601 = vmatpush1.msra.mxu0 %v2862
    %3602 = vmatprep.subr.mxu0 %v2867
    %3603 = vmatpush1.msra.mxu0 %v2866
    %3604 = vmatprep.subr.mxu0 %v2871
    %3605 = vmatpush1.msra.mxu0 %v2870
    %3606 = vmatprep.subr.mxu0 %v2875
    %3607 = vmatpush1.msra.mxu0 %v2874
    %3608 = vmatprep.subr.mxu0 %v2879
    %3609 = vmatpush1.msra.mxu0 %v2878
    %3610 = vmatprep.subr.mxu0 0.0
    %3611 = vmatpush1.msra.mxu0 0.0
    %3612 = vmatprep.subr.mxu0 0.0
    %3613 = vmatpush1.msra.mxu0 0.0
    %3614 = vmatprep.subr.mxu0 0.0
    %3615 = vmatpush1.msra.mxu0 0.0
    %3616 = vmatprep.subr.mxu0 0.0
    %3617 = vmatpush1.msra.mxu0 0.0
    %3618 = vmatprep.subr.mxu0 0.0
    %3619 = vmatpush1.msra.mxu0 0.0
    %3620 = vmatprep.subr.mxu0 0.0
    %3621 = vmatpush1.msra.mxu0 0.0
    %3622 = vmatprep.subr.mxu0 0.0
    %3623 = vmatpush1.msra.mxu0 0.0
    %3624 = vmatprep.subr.mxu0 0.0
    %3625 = vmatpush1.msra.mxu0 0.0
    %3626 = vmatprep.subr.mxu0 0.0
    %3627 = vmatpush1.msra.mxu0 0.0
    %3628 = vmatprep.subr.mxu0 0.0
    %3629 = vmatpush1.msra.mxu0 0.0
    %3630 = vmatprep.subr.mxu0 0.0
    %3631 = vmatpush1.msra.mxu0 0.0
    %3632 = vmatprep.subr.mxu0 0.0
    %3633 = vmatpush1.msra.mxu0 0.0
    %3634 = vmatprep.subr.mxu0 0.0
    %3635 = vmatpush1.msra.mxu0 0.0
    %3636 = vmatprep.subr.mxu0 0.0
    %3637 = vmatpush1.msra.mxu0 0.0
    %3638 = vmatprep.subr.mxu0 0.0
    %3639 = vmatpush1.msra.mxu0 0.0
    %3640 = vmatprep.subr.mxu0 0.0
    %3641 = vmatpush1.msra.mxu0 0.0
    %3642 = vmatprep.mubr.f32.mxu0 0.0
    %3643 = vmatmul.mubr.f32.gmra.mrb[0].mxu0 %v3573
    %v3644 = vpop.f32.mrb[0].mxu0
    %v3645 = vadd.f32 0.0, %v3644
    %v3646 = vpop.f32.mrb[0].mxu0
    %v3647 = vadd.f32 0.0, %v3646
    %3648 = vdwg.mxu0
    %3649 = vmatprep.subr.mxu0 %v2821
    %3650 = vmatpush1.msra.mxu0 %v2820
    %3651 = vmatprep.subr.mxu0 %v2825
    %3652 = vmatpush1.msra.mxu0 %v2824
    %3653 = vmatprep.subr.mxu0 %v2829
    %3654 = vmatpush1.msra.mxu0 %v2828
    %3655 = vmatprep.subr.mxu0 %v2833
    %3656 = vmatpush1.msra.mxu0 %v2832
    %3657 = vmatprep.subr.mxu0 %v2837
    %3658 = vmatpush1.msra.mxu0 %v2836
    %3659 = vmatprep.subr.mxu0 %v2841
    %3660 = vmatpush1.msra.mxu0 %v2840
    %3661 = vmatprep.subr.mxu0 %v2845
    %3662 = vmatpush1.msra.mxu0 %v2844
    %3663 = vmatprep.subr.mxu0 %v2849
    %3664 = vmatpush1.msra.mxu0 %v2848
    %3665 = vmatprep.subr.mxu0 %v2853
    %3666 = vmatpush1.msra.mxu0 %v2852
    %3667 = vmatprep.subr.mxu0 %v2857
    %3668 = vmatpush1.msra.mxu0 %v2856
    %3669 = vmatprep.subr.mxu0 %v2861
    %3670 = vmatpush1.msra.mxu0 %v2860
    %3671 = vmatprep.subr.mxu0 %v2865
    %3672 = vmatpush1.msra.mxu0 %v2864
    %3673 = vmatprep.subr.mxu0 %v2869
    %3674 = vmatpush1.msra.mxu0 %v2868
    %3675 = vmatprep.subr.mxu0 %v2873
    %3676 = vmatpush1.msra.mxu0 %v2872
    %3677 = vmatprep.subr.mxu0 %v2877
    %3678 = vmatpush1.msra.mxu0 %v2876
    %3679 = vmatprep.subr.mxu0 %v2881
    %3680 = vmatpush1.msra.mxu0 %v2880
    %3681 = vmatprep.subr.mxu0 0.0
    %3682 = vmatpush1.msra.mxu0 0.0
    %3683 = vmatprep.subr.mxu0 0.0
    %3684 = vmatpush1.msra.mxu0 0.0
    %3685 = vmatprep.subr.mxu0 0.0
    %3686 = vmatpush1.msra.mxu0 0.0
    %3687 = vmatprep.subr.mxu0 0.0
    %3688 = vmatpush1.msra.mxu0 0.0
    %3689 = vmatprep.subr.mxu0 0.0
    %3690 = vmatpush1.msra.mxu0 0.0
    %3691 = vmatprep.subr.mxu0 0.0
    %3692 = vmatpush1.msra.mxu0 0.0
    %3693 = vmatprep.subr.mxu0 0.0
    %3694 = vmatpush1.msra.mxu0 0.0
    %3695 = vmatprep.subr.mxu0 0.0
    %3696 = vmatpush1.msra.mxu0 0.0
    %3697 = vmatprep.subr.mxu0 0.0
    %3698 = vmatpush1.msra.mxu0 0.0
    %3699 = vmatprep.subr.mxu0 0.0
    %3700 = vmatpush1.msra.mxu0 0.0
    %3701 = vmatprep.subr.mxu0 0.0
    %3702 = vmatpush1.msra.mxu0 0.0
    %3703 = vmatprep.subr.mxu0 0.0
    %3704 = vmatpush1.msra.mxu0 0.0
    %3705 = vmatprep.subr.mxu0 0.0
    %3706 = vmatpush1.msra.mxu0 0.0
    %3707 = vmatprep.subr.mxu0 0.0
    %3708 = vmatpush1.msra.mxu0 0.0
    %3709 = vmatprep.subr.mxu0 0.0
    %3710 = vmatpush1.msra.mxu0 0.0
    %3711 = vmatprep.subr.mxu0 0.0
    %3712 = vmatpush1.msra.mxu0 0.0
    %3713 = vmatprep.mubr.f32.mxu0 0.0
    %3714 = vmatmul.mubr.f32.gmra.mrb[0].mxu0 %v3573
    %v3715 = vpop.f32.mrb[0].mxu0
    %v3716 = vadd.f32 0.0, %v3715
    %v3717 = vpop.f32.mrb[0].mxu0
    %v3718 = vadd.f32 0.0, %v3717
    %3719 = vdwg.mxu0
    %v3720 = vadd.f32 %v3574, %v3645
    %v3721 = vadd.f32 %v3575, %v3647
    %v3722 = vadd.f32 %v3576, %v3716
    %v3723 = vadd.f32 %v3577, %v3718
    %v3724 = vxor.u32 %v3720, 2147483648
    %v3725 = vmul.f32 %v3724, 1.442695
    %v3726 = vpow.pop %v3725
    %v3727 = vadd.f32 %v3726, 1.0
    %v3728 = vrcp.pop %v3727
    %v3729 = vmul.f32 1.0, %v3728
    %v3730 = vxor.u32 %v3721, 2147483648
    %v3731 = vmul.f32 %v3730, 1.442695
    %v3732 = vpow.pop %v3731
    %v3733 = vadd.f32 %v3732, 1.0
    %v3734 = vrcp.pop %v3733
    %v3735 = vmul.f32 1.0, %v3734
    %v3736 = vtanh.pop %v3722
    %v3737 = vxor.u32 %v3723, 2147483648
    %v3738 = vmul.f32 %v3737, 1.442695
    %v3739 = vpow.pop %v3738
    %v3740 = vadd.f32 %v3739, 1.0
    %v3741 = vrcp.pop %v3740
    %v3742 = vmul.f32 1.0, %v3741
    %v3743 = vmul.f32 %v3735, %v3571
    %v3744 = vmul.f32 %v3729, %v3736
    %v3745 = vadd.f32 %v3743, %v3744
    %v3746 = vtanh.pop %v3745
    %v3747 = vmul.f32 %v3742, %v3746
    %v3748 = vld [vmem:[%s1685] sm:$0xff]
    %v3749 = vld [vmem:[%s1685 + $0x8] sm:$0xff]
    %v3750 = vld [vmem:[%s1685 + $0x10] sm:$0xff]
    %v3751 = vld [vmem:[%s1685 + $0x18] sm:$0xff]
    %3752 = vmatprep.subr.mxu0 %v2819
    %3753 = vmatpush1.msra.mxu0 %v2818
    %3754 = vmatprep.subr.mxu0 %v2823
    %3755 = vmatpush1.msra.mxu0 %v2822
    %3756 = vmatprep.subr.mxu0 %v2827
    %3757 = vmatpush1.msra.mxu0 %v2826
    %3758 = vmatprep.subr.mxu0 %v2831
    %3759 = vmatpush1.msra.mxu0 %v2830
    %3760 = vmatprep.subr.mxu0 %v2835
    %3761 = vmatpush1.msra.mxu0 %v2834
    %3762 = vmatprep.subr.mxu0 %v2839
    %3763 = vmatpush1.msra.mxu0 %v2838
    %3764 = vmatprep.subr.mxu0 %v2843
    %3765 = vmatpush1.msra.mxu0 %v2842
    %3766 = vmatprep.subr.mxu0 %v2847
    %3767 = vmatpush1.msra.mxu0 %v2846
    %3768 = vmatprep.subr.mxu0 %v2851
    %3769 = vmatpush1.msra.mxu0 %v2850
    %3770 = vmatprep.subr.mxu0 %v2855
    %3771 = vmatpush1.msra.mxu0 %v2854
    %3772 = vmatprep.subr.mxu0 %v2859
    %3773 = vmatpush1.msra.mxu0 %v2858
    %3774 = vmatprep.subr.mxu0 %v2863
    %3775 = vmatpush1.msra.mxu0 %v2862
    %3776 = vmatprep.subr.mxu0 %v2867
    %3777 = vmatpush1.msra.mxu0 %v2866
    %3778 = vmatprep.subr.mxu0 %v2871
    %3779 = vmatpush1.msra.mxu0 %v2870
    %3780 = vmatprep.subr.mxu0 %v2875
    %3781 = vmatpush1.msra.mxu0 %v2874
    %3782 = vmatprep.subr.mxu0 %v2879
    %3783 = vmatpush1.msra.mxu0 %v2878
    %3784 = vmatprep.subr.mxu0 0.0
    %3785 = vmatpush1.msra.mxu0 0.0
    %3786 = vmatprep.subr.mxu0 0.0
    %3787 = vmatpush1.msra.mxu0 0.0
    %3788 = vmatprep.subr.mxu0 0.0
    %3789 = vmatpush1.msra.mxu0 0.0
    %3790 = vmatprep.subr.mxu0 0.0
    %3791 = vmatpush1.msra.mxu0 0.0
    %3792 = vmatprep.subr.mxu0 0.0
    %3793 = vmatpush1.msra.mxu0 0.0
    %3794 = vmatprep.subr.mxu0 0.0
    %3795 = vmatpush1.msra.mxu0 0.0
    %3796 = vmatprep.subr.mxu0 0.0
    %3797 = vmatpush1.msra.mxu0 0.0
    %3798 = vmatprep.subr.mxu0 0.0
    %3799 = vmatpush1.msra.mxu0 0.0
    %3800 = vmatprep.subr.mxu0 0.0
    %3801 = vmatpush1.msra.mxu0 0.0
    %3802 = vmatprep.subr.mxu0 0.0
    %3803 = vmatpush1.msra.mxu0 0.0
    %3804 = vmatprep.subr.mxu0 0.0
    %3805 = vmatpush1.msra.mxu0 0.0
    %3806 = vmatprep.subr.mxu0 0.0
    %3807 = vmatpush1.msra.mxu0 0.0
    %3808 = vmatprep.subr.mxu0 0.0
    %3809 = vmatpush1.msra.mxu0 0.0
    %3810 = vmatprep.subr.mxu0 0.0
    %3811 = vmatpush1.msra.mxu0 0.0
    %3812 = vmatprep.subr.mxu0 0.0
    %3813 = vmatpush1.msra.mxu0 0.0
    %3814 = vmatprep.subr.mxu0 0.0
    %3815 = vmatpush1.msra.mxu0 0.0
    %3816 = vmatprep.mubr.f32.mxu0 0.0
    %3817 = vmatmul.mubr.f32.gmra.mrb[0].mxu0 %v3747
    %v3818 = vpop.f32.mrb[0].mxu0
    %v3819 = vadd.f32 0.0, %v3818
    %v3820 = vpop.f32.mrb[0].mxu0
    %v3821 = vadd.f32 0.0, %v3820
    %3822 = vdwg.mxu0
    %3823 = vmatprep.subr.mxu0 %v2821
    %3824 = vmatpush1.msra.mxu0 %v2820
    %3825 = vmatprep.subr.mxu0 %v2825
    %3826 = vmatpush1.msra.mxu0 %v2824
    %3827 = vmatprep.subr.mxu0 %v2829
    %3828 = vmatpush1.msra.mxu0 %v2828
    %3829 = vmatprep.subr.mxu0 %v2833
    %3830 = vmatpush1.msra.mxu0 %v2832
    %3831 = vmatprep.subr.mxu0 %v2837
    %3832 = vmatpush1.msra.mxu0 %v2836
    %3833 = vmatprep.subr.mxu0 %v2841
    %3834 = vmatpush1.msra.mxu0 %v2840
    %3835 = vmatprep.subr.mxu0 %v2845
    %3836 = vmatpush1.msra.mxu0 %v2844
    %3837 = vmatprep.subr.mxu0 %v2849
    %3838 = vmatpush1.msra.mxu0 %v2848
    %3839 = vmatprep.subr.mxu0 %v2853
    %3840 = vmatpush1.msra.mxu0 %v2852
    %3841 = vmatprep.subr.mxu0 %v2857
    %3842 = vmatpush1.msra.mxu0 %v2856
    %3843 = vmatprep.subr.mxu0 %v2861
    %3844 = vmatpush1.msra.mxu0 %v2860
    %3845 = vmatprep.subr.mxu0 %v2865
    %3846 = vmatpush1.msra.mxu0 %v2864
    %3847 = vmatprep.subr.mxu0 %v2869
    %3848 = vmatpush1.msra.mxu0 %v2868
    %3849 = vmatprep.subr.mxu0 %v2873
    %3850 = vmatpush1.msra.mxu0 %v2872
    %3851 = vmatprep.subr.mxu0 %v2877
    %3852 = vmatpush1.msra.mxu0 %v2876
    %3853 = vmatprep.subr.mxu0 %v2881
    %3854 = vmatpush1.msra.mxu0 %v2880
    %3855 = vmatprep.subr.mxu0 0.0
    %3856 = vmatpush1.msra.mxu0 0.0
    %3857 = vmatprep.subr.mxu0 0.0
    %3858 = vmatpush1.msra.mxu0 0.0
    %3859 = vmatprep.subr.mxu0 0.0
    %3860 = vmatpush1.msra.mxu0 0.0
    %3861 = vmatprep.subr.mxu0 0.0
    %3862 = vmatpush1.msra.mxu0 0.0
    %3863 = vmatprep.subr.mxu0 0.0
    %3864 = vmatpush1.msra.mxu0 0.0
    %3865 = vmatprep.subr.mxu0 0.0
    %3866 = vmatpush1.msra.mxu0 0.0
    %3867 = vmatprep.subr.mxu0 0.0
    %3868 = vmatpush1.msra.mxu0 0.0
    %3869 = vmatprep.subr.mxu0 0.0
    %3870 = vmatpush1.msra.mxu0 0.0
    %3871 = vmatprep.subr.mxu0 0.0
    %3872 = vmatpush1.msra.mxu0 0.0
    %3873 = vmatprep.subr.mxu0 0.0
    %3874 = vmatpush1.msra.mxu0 0.0
    %3875 = vmatprep.subr.mxu0 0.0
    %3876 = vmatpush1.msra.mxu0 0.0
    %3877 = vmatprep.subr.mxu0 0.0
    %3878 = vmatpush1.msra.mxu0 0.0
    %3879 = vmatprep.subr.mxu0 0.0
    %3880 = vmatpush1.msra.mxu0 0.0
    %3881 = vmatprep.subr.mxu0 0.0
    %3882 = vmatpush1.msra.mxu0 0.0
    %3883 = vmatprep.subr.mxu0 0.0
    %3884 = vmatpush1.msra.mxu0 0.0
    %3885 = vmatprep.subr.mxu0 0.0
    %3886 = vmatpush1.msra.mxu0 0.0
    %3887 = vmatprep.mubr.f32.mxu0 0.0
    %3888 = vmatmul.mubr.f32.gmra.mrb[0].mxu0 %v3747
    %v3889 = vpop.f32.mrb[0].mxu0
    %v3890 = vadd.f32 0.0, %v3889
    %v3891 = vpop.f32.mrb[0].mxu0
    %v3892 = vadd.f32 0.0, %v3891
    %3893 = vdwg.mxu0
    %v3894 = vadd.f32 %v3748, %v3819
    %v3895 = vadd.f32 %v3749, %v3821
    %v3896 = vadd.f32 %v3750, %v3890
    %v3897 = vadd.f32 %v3751, %v3892
    %v3898 = vxor.u32 %v3894, 2147483648
    %v3899 = vmul.f32 %v3898, 1.442695
    %v3900 = vpow.pop %v3899
    %v3901 = vadd.f32 %v3900, 1.0
    %v3902 = vrcp.pop %v3901
    %v3903 = vmul.f32 1.0, %v3902
    %v3904 = vxor.u32 %v3895, 2147483648
    %v3905 = vmul.f32 %v3904, 1.442695
    %v3906 = vpow.pop %v3905
    %v3907 = vadd.f32 %v3906, 1.0
    %v3908 = vrcp.pop %v3907
    %v3909 = vmul.f32 1.0, %v3908
    %v3910 = vtanh.pop %v3896
    %v3911 = vxor.u32 %v3897, 2147483648
    %v3912 = vmul.f32 %v3911, 1.442695
    %v3913 = vpow.pop %v3912
    %v3914 = vadd.f32 %v3913, 1.0
    %v3915 = vrcp.pop %v3914
    %v3916 = vmul.f32 1.0, %v3915
    %v3917 = vmul.f32 %v3909, %v3745
    %v3918 = vmul.f32 %v3903, %v3910
    %v3919 = vadd.f32 %v3917, %v3918
    %v3920 = vtanh.pop %v3919
    %v3921 = vmul.f32 %v3916, %v3920
    %v3922 = vld [vmem:[%s1926] sm:$0xff]
    %v3923 = vld [vmem:[%s1926 + $0x8] sm:$0xff]
    %v3924 = vld [vmem:[%s1926 + $0x10] sm:$0xff]
    %v3925 = vld [vmem:[%s1926 + $0x18] sm:$0xff]
    %3926 = vmatprep.subr.mxu0 %v2819
    %3927 = vmatpush1.msra.mxu0 %v2818
    %3928 = vmatprep.subr.mxu0 %v2823
    %3929 = vmatpush1.msra.mxu0 %v2822
    %3930 = vmatprep.subr.mxu0 %v2827
    %3931 = vmatpush1.msra.mxu0 %v2826
    %3932 = vmatprep.subr.mxu0 %v2831
    %3933 = vmatpush1.msra.mxu0 %v2830
    %3934 = vmatprep.subr.mxu0 %v2835
    %3935 = vmatpush1.msra.mxu0 %v2834
    %3936 = vmatprep.subr.mxu0 %v2839
    %3937 = vmatpush1.msra.mxu0 %v2838
    %3938 = vmatprep.subr.mxu0 %v2843
    %3939 = vmatpush1.msra.mxu0 %v2842
    %3940 = vmatprep.subr.mxu0 %v2847
    %3941 = vmatpush1.msra.mxu0 %v2846
    %3942 = vmatprep.subr.mxu0 %v2851
    %3943 = vmatpush1.msra.mxu0 %v2850
    %3944 = vmatprep.subr.mxu0 %v2855
    %3945 = vmatpush1.msra.mxu0 %v2854
    %3946 = vmatprep.subr.mxu0 %v2859
    %3947 = vmatpush1.msra.mxu0 %v2858
    %3948 = vmatprep.subr.mxu0 %v2863
    %3949 = vmatpush1.msra.mxu0 %v2862
    %3950 = vmatprep.subr.mxu0 %v2867
    %3951 = vmatpush1.msra.mxu0 %v2866
    %3952 = vmatprep.subr.mxu0 %v2871
    %3953 = vmatpush1.msra.mxu0 %v2870
    %3954 = vmatprep.subr.mxu0 %v2875
    %3955 = vmatpush1.msra.mxu0 %v2874
    %3956 = vmatprep.subr.mxu0 %v2879
    %3957 = vmatpush1.msra.mxu0 %v2878
    %3958 = vmatprep.subr.mxu0 0.0
    %3959 = vmatpush1.msra.mxu0 0.0
    %3960 = vmatprep.subr.mxu0 0.0
    %3961 = vmatpush1.msra.mxu0 0.0
    %3962 = vmatprep.subr.mxu0 0.0
    %3963 = vmatpush1.msra.mxu0 0.0
    %3964 = vmatprep.subr.mxu0 0.0
    %3965 = vmatpush1.msra.mxu0 0.0
    %3966 = vmatprep.subr.mxu0 0.0
    %3967 = vmatpush1.msra.mxu0 0.0
    %3968 = vmatprep.subr.mxu0 0.0
    %3969 = vmatpush1.msra.mxu0 0.0
    %3970 = vmatprep.subr.mxu0 0.0
    %3971 = vmatpush1.msra.mxu0 0.0
    %3972 = vmatprep.subr.mxu0 0.0
    %3973 = vmatpush1.msra.mxu0 0.0
    %3974 = vmatprep.subr.mxu0 0.0
    %3975 = vmatpush1.msra.mxu0 0.0
    %3976 = vmatprep.subr.mxu0 0.0
    %3977 = vmatpush1.msra.mxu0 0.0
    %3978 = vmatprep.subr.mxu0 0.0
    %3979 = vmatpush1.msra.mxu0 0.0
    %3980 = vmatprep.subr.mxu0 0.0
    %3981 = vmatpush1.msra.mxu0 0.0
    %3982 = vmatprep.subr.mxu0 0.0
    %3983 = vmatpush1.msra.mxu0 0.0
    %3984 = vmatprep.subr.mxu0 0.0
    %3985 = vmatpush1.msra.mxu0 0.0
    %3986 = vmatprep.subr.mxu0 0.0
    %3987 = vmatpush1.msra.mxu0 0.0
    %3988 = vmatprep.subr.mxu0 0.0
    %3989 = vmatpush1.msra.mxu0 0.0
    %3990 = vmatprep.mubr.f32.mxu0 0.0
    %3991 = vmatmul.mubr.f32.gmra.mrb[0].mxu0 %v3921
    %v3992 = vpop.f32.mrb[0].mxu0
    %v3993 = vadd.f32 0.0, %v3992
    %v3994 = vpop.f32.mrb[0].mxu0
    %v3995 = vadd.f32 0.0, %v3994
    %3996 = vdwg.mxu0
    %3997 = vmatprep.subr.mxu0 %v2821
    %3998 = vmatpush1.msra.mxu0 %v2820
    %3999 = vmatprep.subr.mxu0 %v2825
    %4000 = vmatpush1.msra.mxu0 %v2824
    %4001 = vmatprep.subr.mxu0 %v2829
    %4002 = vmatpush1.msra.mxu0 %v2828
    %4003 = vmatprep.subr.mxu0 %v2833
    %4004 = vmatpush1.msra.mxu0 %v2832
    %4005 = vmatprep.subr.mxu0 %v2837
    %4006 = vmatpush1.msra.mxu0 %v2836
    %4007 = vmatprep.subr.mxu0 %v2841
    %4008 = vmatpush1.msra.mxu0 %v2840
    %4009 = vmatprep.subr.mxu0 %v2845
    %4010 = vmatpush1.msra.mxu0 %v2844
    %4011 = vmatprep.subr.mxu0 %v2849
    %4012 = vmatpush1.msra.mxu0 %v2848
    %4013 = vmatprep.subr.mxu0 %v2853
    %4014 = vmatpush1.msra.mxu0 %v2852
    %4015 = vmatprep.subr.mxu0 %v2857
    %4016 = vmatpush1.msra.mxu0 %v2856
    %4017 = vmatprep.subr.mxu0 %v2861
    %4018 = vmatpush1.msra.mxu0 %v2860
    %4019 = vmatprep.subr.mxu0 %v2865
    %4020 = vmatpush1.msra.mxu0 %v2864
    %4021 = vmatprep.subr.mxu0 %v2869
    %4022 = vmatpush1.msra.mxu0 %v2868
    %4023 = vmatprep.subr.mxu0 %v2873
    %4024 = vmatpush1.msra.mxu0 %v2872
    %4025 = vmatprep.subr.mxu0 %v2877
    %4026 = vmatpush1.msra.mxu0 %v2876
    %4027 = vmatprep.subr.mxu0 %v2881
    %4028 = vmatpush1.msra.mxu0 %v2880
    %4029 = vmatprep.subr.mxu0 0.0
    %4030 = vmatpush1.msra.mxu0 0.0
    %4031 = vmatprep.subr.mxu0 0.0
    %4032 = vmatpush1.msra.mxu0 0.0
    %4033 = vmatprep.subr.mxu0 0.0
    %4034 = vmatpush1.msra.mxu0 0.0
    %4035 = vmatprep.subr.mxu0 0.0
    %4036 = vmatpush1.msra.mxu0 0.0
    %4037 = vmatprep.subr.mxu0 0.0
    %4038 = vmatpush1.msra.mxu0 0.0
    %4039 = vmatprep.subr.mxu0 0.0
    %4040 = vmatpush1.msra.mxu0 0.0
    %4041 = vmatprep.subr.mxu0 0.0
    %4042 = vmatpush1.msra.mxu0 0.0
    %4043 = vmatprep.subr.mxu0 0.0
    %4044 = vmatpush1.msra.mxu0 0.0
    %4045 = vmatprep.subr.mxu0 0.0
    %4046 = vmatpush1.msra.mxu0 0.0
    %4047 = vmatprep.subr.mxu0 0.0
    %4048 = vmatpush1.msra.mxu0 0.0
    %4049 = vmatprep.subr.mxu0 0.0
    %4050 = vmatpush1.msra.mxu0 0.0
    %4051 = vmatprep.subr.mxu0 0.0
    %4052 = vmatpush1.msra.mxu0 0.0
    %4053 = vmatprep.subr.mxu0 0.0
    %4054 = vmatpush1.msra.mxu0 0.0
    %4055 = vmatprep.subr.mxu0 0.0
    %4056 = vmatpush1.msra.mxu0 0.0
    %4057 = vmatprep.subr.mxu0 0.0
    %4058 = vmatpush1.msra.mxu0 0.0
    %4059 = vmatprep.subr.mxu0 0.0
    %4060 = vmatpush1.msra.mxu0 0.0
    %4061 = vmatprep.mubr.f32.mxu0 0.0
    %4062 = vmatmul.mubr.f32.gmra.mrb[0].mxu0 %v3921
    %v4063 = vpop.f32.mrb[0].mxu0
    %v4064 = vadd.f32 0.0, %v4063
    %v4065 = vpop.f32.mrb[0].mxu0
    %v4066 = vadd.f32 0.0, %v4065
    %4067 = vdwg.mxu0
    %v4068 = vadd.f32 %v3922, %v3993
    %v4069 = vadd.f32 %v3923, %v3995
    %v4070 = vadd.f32 %v3924, %v4064
    %v4071 = vadd.f32 %v3925, %v4066
    %v4072 = vxor.u32 %v4068, 2147483648
    %v4073 = vmul.f32 %v4072, 1.442695
    %v4074 = vpow.pop %v4073
    %v4075 = vadd.f32 %v4074, 1.0
    %v4076 = vrcp.pop %v4075
    %v4077 = vmul.f32 1.0, %v4076
    %v4078 = vxor.u32 %v4069, 2147483648
    %v4079 = vmul.f32 %v4078, 1.442695
    %v4080 = vpow.pop %v4079
    %v4081 = vadd.f32 %v4080, 1.0
    %v4082 = vrcp.pop %v4081
    %v4083 = vmul.f32 1.0, %v4082
    %v4084 = vtanh.pop %v4070
    %v4085 = vxor.u32 %v4071, 2147483648
    %v4086 = vmul.f32 %v4085, 1.442695
    %v4087 = vpow.pop %v4086
    %v4088 = vadd.f32 %v4087, 1.0
    %v4089 = vrcp.pop %v4088
    %v4090 = vmul.f32 1.0, %v4089
    %v4091 = vmul.f32 %v4083, %v3919
    %v4092 = vmul.f32 %v4077, %v4084
    %v4093 = vadd.f32 %v4091, %v4092
    %v4094 = vtanh.pop %v4093
    %v4095 = vmul.f32 %v4090, %v4094
    %v4096 = vld [vmem:[%s2167] sm:$0xff]
    %v4097 = vld [vmem:[%s2167 + $0x8] sm:$0xff]
    %v4098 = vld [vmem:[%s2167 + $0x10] sm:$0xff]
    %v4099 = vld [vmem:[%s2167 + $0x18] sm:$0xff]
    %4100 = vmatprep.subr.mxu0 %v2819
    %4101 = vmatpush1.msra.mxu0 %v2818
    %4102 = vmatprep.subr.mxu0 %v2823
    %4103 = vmatpush1.msra.mxu0 %v2822
    %4104 = vmatprep.subr.mxu0 %v2827
    %4105 = vmatpush1.msra.mxu0 %v2826
    %4106 = vmatprep.subr.mxu0 %v2831
    %4107 = vmatpush1.msra.mxu0 %v2830
    %4108 = vmatprep.subr.mxu0 %v2835
    %4109 = vmatpush1.msra.mxu0 %v2834
    %4110 = vmatprep.subr.mxu0 %v2839
    %4111 = vmatpush1.msra.mxu0 %v2838
    %4112 = vmatprep.subr.mxu0 %v2843
    %4113 = vmatpush1.msra.mxu0 %v2842
    %4114 = vmatprep.subr.mxu0 %v2847
    %4115 = vmatpush1.msra.mxu0 %v2846
    %4116 = vmatprep.subr.mxu0 %v2851
    %4117 = vmatpush1.msra.mxu0 %v2850
    %4118 = vmatprep.subr.mxu0 %v2855
    %4119 = vmatpush1.msra.mxu0 %v2854
    %4120 = vmatprep.subr.mxu0 %v2859
    %4121 = vmatpush1.msra.mxu0 %v2858
    %4122 = vmatprep.subr.mxu0 %v2863
    %4123 = vmatpush1.msra.mxu0 %v2862
    %4124 = vmatprep.subr.mxu0 %v2867
    %4125 = vmatpush1.msra.mxu0 %v2866
    %4126 = vmatprep.subr.mxu0 %v2871
    %4127 = vmatpush1.msra.mxu0 %v2870
    %4128 = vmatprep.subr.mxu0 %v2875
    %4129 = vmatpush1.msra.mxu0 %v2874
    %4130 = vmatprep.subr.mxu0 %v2879
    %4131 = vmatpush1.msra.mxu0 %v2878
    %4132 = vmatprep.subr.mxu0 0.0
    %4133 = vmatpush1.msra.mxu0 0.0
    %4134 = vmatprep.subr.mxu0 0.0
    %4135 = vmatpush1.msra.mxu0 0.0
    %4136 = vmatprep.subr.mxu0 0.0
    %4137 = vmatpush1.msra.mxu0 0.0
    %4138 = vmatprep.subr.mxu0 0.0
    %4139 = vmatpush1.msra.mxu0 0.0
    %4140 = vmatprep.subr.mxu0 0.0
    %4141 = vmatpush1.msra.mxu0 0.0
    %4142 = vmatprep.subr.mxu0 0.0
    %4143 = vmatpush1.msra.mxu0 0.0
    %4144 = vmatprep.subr.mxu0 0.0
    %4145 = vmatpush1.msra.mxu0 0.0
    %4146 = vmatprep.subr.mxu0 0.0
    %4147 = vmatpush1.msra.mxu0 0.0
    %4148 = vmatprep.subr.mxu0 0.0
    %4149 = vmatpush1.msra.mxu0 0.0
    %4150 = vmatprep.subr.mxu0 0.0
    %4151 = vmatpush1.msra.mxu0 0.0
    %4152 = vmatprep.subr.mxu0 0.0
    %4153 = vmatpush1.msra.mxu0 0.0
    %4154 = vmatprep.subr.mxu0 0.0
    %4155 = vmatpush1.msra.mxu0 0.0
    %4156 = vmatprep.subr.mxu0 0.0
    %4157 = vmatpush1.msra.mxu0 0.0
    %4158 = vmatprep.subr.mxu0 0.0
    %4159 = vmatpush1.msra.mxu0 0.0
    %4160 = vmatprep.subr.mxu0 0.0
    %4161 = vmatpush1.msra.mxu0 0.0
    %4162 = vmatprep.subr.mxu0 0.0
    %4163 = vmatpush1.msra.mxu0 0.0
    %4164 = vmatprep.mubr.f32.mxu0 0.0
    %4165 = vmatmul.mubr.f32.gmra.mrb[0].mxu0 %v4095
    %v4166 = vpop.f32.mrb[0].mxu0
    %v4167 = vadd.f32 0.0, %v4166
    %v4168 = vpop.f32.mrb[0].mxu0
    %v4169 = vadd.f32 0.0, %v4168
    %4170 = vdwg.mxu0
    %4171 = vmatprep.subr.mxu0 %v2821
    %4172 = vmatpush1.msra.mxu0 %v2820
    %4173 = vmatprep.subr.mxu0 %v2825
    %4174 = vmatpush1.msra.mxu0 %v2824
    %4175 = vmatprep.subr.mxu0 %v2829
    %4176 = vmatpush1.msra.mxu0 %v2828
    %4177 = vmatprep.subr.mxu0 %v2833
    %4178 = vmatpush1.msra.mxu0 %v2832
    %4179 = vmatprep.subr.mxu0 %v2837
    %4180 = vmatpush1.msra.mxu0 %v2836
    %4181 = vmatprep.subr.mxu0 %v2841
    %4182 = vmatpush1.msra.mxu0 %v2840
    %4183 = vmatprep.subr.mxu0 %v2845
    %4184 = vmatpush1.msra.mxu0 %v2844
    %4185 = vmatprep.subr.mxu0 %v2849
    %4186 = vmatpush1.msra.mxu0 %v2848
    %4187 = vmatprep.subr.mxu0 %v2853
    %4188 = vmatpush1.msra.mxu0 %v2852
    %4189 = vmatprep.subr.mxu0 %v2857
    %4190 = vmatpush1.msra.mxu0 %v2856
    %4191 = vmatprep.subr.mxu0 %v2861
    %4192 = vmatpush1.msra.mxu0 %v2860
    %4193 = vmatprep.subr.mxu0 %v2865
    %4194 = vmatpush1.msra.mxu0 %v2864
    %4195 = vmatprep.subr.mxu0 %v2869
    %4196 = vmatpush1.msra.mxu0 %v2868
    %4197 = vmatprep.subr.mxu0 %v2873
    %4198 = vmatpush1.msra.mxu0 %v2872
    %4199 = vmatprep.subr.mxu0 %v2877
    %4200 = vmatpush1.msra.mxu0 %v2876
    %4201 = vmatprep.subr.mxu0 %v2881
    %4202 = vmatpush1.msra.mxu0 %v2880
    %4203 = vmatprep.subr.mxu0 0.0
    %4204 = vmatpush1.msra.mxu0 0.0
    %4205 = vmatprep.subr.mxu0 0.0
    %4206 = vmatpush1.msra.mxu0 0.0
    %4207 = vmatprep.subr.mxu0 0.0
    %4208 = vmatpush1.msra.mxu0 0.0
    %4209 = vmatprep.subr.mxu0 0.0
    %4210 = vmatpush1.msra.mxu0 0.0
    %4211 = vmatprep.subr.mxu0 0.0
    %4212 = vmatpush1.msra.mxu0 0.0
    %4213 = vmatprep.subr.mxu0 0.0
    %4214 = vmatpush1.msra.mxu0 0.0
    %4215 = vmatprep.subr.mxu0 0.0
    %4216 = vmatpush1.msra.mxu0 0.0
    %4217 = vmatprep.subr.mxu0 0.0
    %4218 = vmatpush1.msra.mxu0 0.0
    %4219 = vmatprep.subr.mxu0 0.0
    %4220 = vmatpush1.msra.mxu0 0.0
    %4221 = vmatprep.subr.mxu0 0.0
    %4222 = vmatpush1.msra.mxu0 0.0
    %4223 = vmatprep.subr.mxu0 0.0
    %4224 = vmatpush1.msra.mxu0 0.0
    %4225 = vmatprep.subr.mxu0 0.0
    %4226 = vmatpush1.msra.mxu0 0.0
    %4227 = vmatprep.subr.mxu0 0.0
    %4228 = vmatpush1.msra.mxu0 0.0
    %4229 = vmatprep.subr.mxu0 0.0
    %4230 = vmatpush1.msra.mxu0 0.0
    %4231 = vmatprep.subr.mxu0 0.0
    %4232 = vmatpush1.msra.mxu0 0.0
    %4233 = vmatprep.subr.mxu0 0.0
    %4234 = vmatpush1.msra.mxu0 0.0
    %4235 = vmatprep.mubr.f32.mxu0 0.0
    %4236 = vmatmul.mubr.f32.gmra.mrb[0].mxu0 %v4095
    %v4237 = vpop.f32.mrb[0].mxu0
    %v4238 = vadd.f32 0.0, %v4237
    %v4239 = vpop.f32.mrb[0].mxu0
    %v4240 = vadd.f32 0.0, %v4239
    %4241 = vdwg.mxu0
    %v4242 = vadd.f32 %v4096, %v4167
    %v4243 = vadd.f32 %v4097, %v4169
    %v4244 = vadd.f32 %v4098, %v4238
    %v4245 = vadd.f32 %v4099, %v4240
    %v4246 = vxor.u32 %v4242, 2147483648
    %v4247 = vmul.f32 %v4246, 1.442695
    %v4248 = vpow.pop %v4247
    %v4249 = vadd.f32 %v4248, 1.0
    %v4250 = vrcp.pop %v4249
    %v4251 = vmul.f32 1.0, %v4250
    %v4252 = vxor.u32 %v4243, 2147483648
    %v4253 = vmul.f32 %v4252, 1.442695
    %v4254 = vpow.pop %v4253
    %v4255 = vadd.f32 %v4254, 1.0
    %v4256 = vrcp.pop %v4255
    %v4257 = vmul.f32 1.0, %v4256
    %v4258 = vtanh.pop %v4244
    %v4259 = vxor.u32 %v4245, 2147483648
    %v4260 = vmul.f32 %v4259, 1.442695
    %v4261 = vpow.pop %v4260
    %v4262 = vadd.f32 %v4261, 1.0
    %v4263 = vrcp.pop %v4262
    %v4264 = vmul.f32 1.0, %v4263
    %v4265 = vmul.f32 %v4257, %v4093
    %v4266 = vmul.f32 %v4251, %v4258
    %v4267 = vadd.f32 %v4265, %v4266
    %v4268 = vtanh.pop %v4267
    %v4269 = vmul.f32 %v4264, %v4268
    %4270 = vst [vmem:[%s2810] sm:$0xff] %v4269
    %4271 = vst [vmem:[%s2812] sm:$0xff] %v4267
    // Predicated region
    $region70: #{tpu_custom_call.1} parent=1 // pred_check
      %p4272 = pneg %p60
    $region71: #{tpu_custom_call.1} parent=1 // pred_check_branch
      %4274 = sbr.rel (%p4272) target = $region73
    $region72: #{tpu_custom_call.1} parent=1 // pred_region
      %v4275 = vld [vmem:[%s2810] sm:$0xff]
      %v4276 = vld [vmem:[#allocation14] sm:$0xff]
      %v4277 = vld [vmem:[#allocation14 + $0x8] sm:$0xff]
      %v4278 = vld [vmem:[#allocation14 + $0x10] sm:$0xff]
      %v4279 = vld [vmem:[#allocation14 + $0x18] sm:$0xff]
      %v4280 = vld [vmem:[#allocation14 + $0x20] sm:$0xff]
      %v4281 = vld [vmem:[#allocation14 + $0x28] sm:$0xff]
      %v4282 = vld [vmem:[#allocation14 + $0x30] sm:$0xff]
      %v4283 = vld [vmem:[#allocation14 + $0x38] sm:$0xff]
      %v4284 = vld [vmem:[#allocation14 + $0x40] sm:$0xff]
      %v4285 = vld [vmem:[#allocation14 + $0x48] sm:$0xff]
      %v4286 = vld [vmem:[#allocation14 + $0x50] sm:$0xff]
      %v4287 = vld [vmem:[#allocation14 + $0x58] sm:$0xff]
      %v4288 = vld [vmem:[#allocation14 + $0x60] sm:$0xff]
      %v4289 = vld [vmem:[#allocation14 + $0x68] sm:$0xff]
      %v4290 = vld [vmem:[#allocation14 + $0x70] sm:$0xff]
      %v4291 = vld [vmem:[#allocation14 + $0x78] sm:$0xff]
      %v4292 = vld [vmem:[%s8] sm:$0x1]
      %v4294 = vlaneseq
      %v4295 = vshrl.u32 %v4294, 7
      %v4296 = vsub.s32 0, %v4295
      %v4297 = vrot.slane %v4292, %v4296
      %4299 = vmatprep.subr.mxu0 0.0
      %4300 = vmatpush1.msra.mxu0 %v4276
      %4301 = vmatprep.subr.mxu0 0.0
      %4302 = vmatpush1.msra.mxu0 %v4277
      %4303 = vmatprep.subr.mxu0 0.0
      %4304 = vmatpush1.msra.mxu0 %v4278
      %4305 = vmatprep.subr.mxu0 0.0
      %4306 = vmatpush1.msra.mxu0 %v4279
      %4307 = vmatprep.subr.mxu0 0.0
      %4308 = vmatpush1.msra.mxu0 %v4280
      %4309 = vmatprep.subr.mxu0 0.0
      %4310 = vmatpush1.msra.mxu0 %v4281
      %4311 = vmatprep.subr.mxu0 0.0
      %4312 = vmatpush1.msra.mxu0 %v4282
      %4313 = vmatprep.subr.mxu0 0.0
      %4314 = vmatpush1.msra.mxu0 %v4283
      %4315 = vmatprep.subr.mxu0 0.0
      %4316 = vmatpush1.msra.mxu0 %v4284
      %4317 = vmatprep.subr.mxu0 0.0
      %4318 = vmatpush1.msra.mxu0 %v4285
      %4319 = vmatprep.subr.mxu0 0.0
      %4320 = vmatpush1.msra.mxu0 %v4286
      %4321 = vmatprep.subr.mxu0 0.0
      %4322 = vmatpush1.msra.mxu0 %v4287
      %4323 = vmatprep.subr.mxu0 0.0
      %4324 = vmatpush1.msra.mxu0 %v4288
      %4325 = vmatprep.subr.mxu0 0.0
      %4326 = vmatpush1.msra.mxu0 %v4289
      %4327 = vmatprep.subr.mxu0 0.0
      %4328 = vmatpush1.msra.mxu0 %v4290
      %4329 = vmatprep.subr.mxu0 0.0
      %4330 = vmatpush1.msra.mxu0 %v4291
      %4331 = vmatprep.subr.mxu0 0.0
      %4332 = vmatpush1.msra.mxu0 0.0
      %4333 = vmatprep.subr.mxu0 0.0
      %4334 = vmatpush1.msra.mxu0 0.0
      %4335 = vmatprep.subr.mxu0 0.0
      %4336 = vmatpush1.msra.mxu0 0.0
      %4337 = vmatprep.subr.mxu0 0.0
      %4338 = vmatpush1.msra.mxu0 0.0
      %4339 = vmatprep.subr.mxu0 0.0
      %4340 = vmatpush1.msra.mxu0 0.0
      %4341 = vmatprep.subr.mxu0 0.0
      %4342 = vmatpush1.msra.mxu0 0.0
      %4343 = vmatprep.subr.mxu0 0.0
      %4344 = vmatpush1.msra.mxu0 0.0
      %4345 = vmatprep.subr.mxu0 0.0
      %4346 = vmatpush1.msra.mxu0 0.0
      %4347 = vmatprep.subr.mxu0 0.0
      %4348 = vmatpush1.msra.mxu0 0.0
      %4349 = vmatprep.subr.mxu0 0.0
      %4350 = vmatpush1.msra.mxu0 0.0
      %4351 = vmatprep.subr.mxu0 0.0
      %4352 = vmatpush1.msra.mxu0 0.0
      %4353 = vmatprep.subr.mxu0 0.0
      %4354 = vmatpush1.msra.mxu0 0.0
      %4355 = vmatprep.subr.mxu0 0.0
      %4356 = vmatpush1.msra.mxu0 0.0
      %4357 = vmatprep.subr.mxu0 0.0
      %4358 = vmatpush1.msra.mxu0 0.0
      %4359 = vmatprep.subr.mxu0 0.0
      %4360 = vmatpush1.msra.mxu0 0.0
      %4361 = vmatprep.subr.mxu0 0.0
      %4362 = vmatpush1.msra.mxu0 0.0
      %4363 = vmatprep.mubr.f32.mxu0 0.0
      %4364 = vmatmul.mubr.f32.gmra.mrb[0].mxu0 %v4275
      %v4365 = vpop.f32.mrb[0].mxu0
      %v4366 = vadd.f32 %v4297, %v4365
      %v4367 = vpop.f32.mrb[0].mxu0
      %4368 = vdwg.mxu0
      %vm4369 = vcmp.gt.f32.partialorder %v4366, 0.0
      %v4370 = vmul.f32 %v4366, 0.01
      %v4371 = vsel %vm4369, %v4366, %v4370
      %v4372 = vld [vmem:[%s9] sm:$0x1]
      %v4374 = vlaneseq
      %v4375 = vshrl.u32 %v4374, 7
      %v4376 = vsub.s32 0, %v4375
      %v4377 = vrot.slane %v4372, %v4376
      %v4379 = vmul.f32 %v4371, %v4377
      %4380 = vadd.xlane.f32.xlu0 %v4379
      %v4381 = vpop.xlane.xlu0 %4380
      %v4382 = vld [vmem:[#allocation11] sm:$0x1]
      %v4384 = vlaneseq
      %v4385 = vshrl.u32 %v4384, 7
      %v4386 = vsub.s32 0, %v4385
      %v4387 = vrot.slane %v4382, %v4386
      %v4389 = vadd.f32 %v4381, %v4387
      %vm4390 = vcmask 7168
      %4391 = vst.msk [vmem:[%s11] sm:$0xff] %vm4390, %v4389
    $region73: #{tpu_custom_call.1} parent=1 // pred_fallthru
      _
    // Predicated region
    $region74: #{tpu_custom_call.1} parent=1 // pred_check
      _
    $region75: #{tpu_custom_call.1} parent=1 // pred_check_branch
      %4393 = sbr.rel (0) target = $region77
    $region76: #{tpu_custom_call.1} parent=1 // pred_region
      _
    $region77: #{tpu_custom_call.1} parent=1 // pred_fallthru
      _
    // Predicated region
    $region78: #{tpu_custom_call.1} parent=1 // pred_check
      _
    $region79: #{tpu_custom_call.1} parent=1 // pred_check_branch
      %4395 = sbr.rel (0) target = $region81
    $region80: #{tpu_custom_call.1} parent=1 // pred_region
      _
    $region81: #{tpu_custom_call.1} parent=1 // pred_fallthru
      _
    %4396 = vsyncpa [#allocation13], 1
    %4397 = vsyncpa [#allocation15], 1
  %4398 = vsyncmov [#allocation10]
  %s4399 = vpop.sfrf %4398
  %p4400 = scmp.eq.s32.totalorder %s4399, 0
  %p4401 = pneg %p4400
  %4403 = shalt.err (%p4401)
  %s4404 = scalar_lea.sflag [#allocation10], 1
  %4405 = vsyncmov %s4404
  %s4406 = vpop.sfrf %4405
  %p4407 = scmp.eq.s32.totalorder %s4406, 0
  %p4408 = pneg %p4407
  %4410 = shalt.err (%p4408)
  %s4411 = scalar_lea.sflag [#allocation10], 2
  %4412 = vsyncmov %s4411
  %s4413 = vpop.sfrf %4412
  %p4414 = scmp.eq.s32.totalorder %s4413, 0
  %p4415 = pneg %p4414
  %4417 = shalt.err (%p4415)
  %s4418 = scalar_lea.sflag [#allocation10], 3
  %4419 = vsyncmov %s4418
  %s4420 = vpop.sfrf %4419
  %p4421 = scmp.eq.s32.totalorder %s4420, 0
  %p4422 = pneg %p4421
  %4424 = shalt.err (%p4422)

</llo_original>
